<compile_context>
chip_gen: v7x
topology: tpu7x:2x2x1
jax: 0.10.0
libtpu: 0.0.40
codegen_flags: <defaults>
</compile_context>

<pallas_src>
import functools

import jax
import jax.numpy as jnp
from jax import lax
from jax.experimental import pallas as pl
from jax.experimental.pallas import tpu as pltpu

EPS = 1e-5  # nn.BatchNorm2d default eps


# ---------------------------------------------------------------------------
# Kernels
# ---------------------------------------------------------------------------
def _make_conv_kernel(apply_act: bool, compute_dtype):
    """Conv3x3 (+bias) over one NHWC image tile, also emitting per-channel sum and
    sum-of-squares for the BatchNorm batch statistics.  If `apply_act`, the
    PREVIOUS layer's folded BN affine + ReLU is applied to the input tile on the
    fly, so intermediate activations never make an extra HBM round trip."""

    def kernel(x_ref, scale_ref, shift_ref, w_ref, b_ref,
               y_ref, sum_ref, ssq_ref, xh_ref):
        i = pl.program_id(0)
        _, h, w, cin = x_ref.shape
        cout = y_ref.shape[-1]

        xin = x_ref[...].astype(jnp.float32)
        if apply_act:  # previous layer's BatchNorm affine + ReLU, f32 math
            xin = jnp.maximum(xin * scale_ref[...] + shift_ref[...], 0.0)

        # H-only zero padding in the VMEM scratch: leading-dim stores only, so no
        # sublane-offset relayouts.  W borders are handled below with roll + mask.
        zrow = jnp.zeros((1, 1, w, cin), jnp.float32)
        xh_ref[:, 0:1, :, :] = zrow
        xh_ref[:, h + 1:h + 2, :, :] = zrow
        xh_ref[:, 1:h + 1, :, :] = xin
        xpadh = xh_ref[...]                                    # (1, H+2, W, Cin)

        col = lax.broadcasted_iota(jnp.int32, (1, 1, w, cin), 2)
        not_left = col != 0
        not_right = col != (w - 1)

        # im2col: kh taps = leading-dim slices (cheap), kw taps = sublane rolls
        # (XLU) + single-column border mask (VPU select).  Concatenate along lanes
        # so the conv becomes one MXU matmul with K = 9*Cin.
        parts = []
        for kh in range(3):
            x_kh = xpadh[:, kh:kh + h, :, :]                   # (1, H, W, Cin)
            for kw in range(3):
                if kw == 1:
                    p = x_kh
                else:
                    p = pltpu.roll(x_kh, shift=(1 - kw) % w, axis=2)
                    keep = not_left if kw == 0 else not_right
                    p = jnp.where(keep, p, jnp.zeros_like(p))
                parts.append(p)
        patches = jnp.concatenate(parts, axis=-1)              # (1, H, W, 9*Cin)
        patches = patches.reshape(h * w, 9 * cin)              # W % 8 == 0 -> cheap

        acc = jnp.dot(patches.astype(compute_dtype), w_ref[...],
                      preferred_element_type=jnp.float32)      # (H*W, Cout), f32
        acc = acc + b_ref[...]                                 # conv bias
        y_ref[...] = acc.reshape(1, h, w, cout)

        # BatchNorm (training-mode) batch statistics, accumulated across the grid
        # (f32 sum / sum-of-squares; the "arbitrary" grid axis keeps them resident).
        @pl.when(i == 0)
        def _():
            sum_ref[...] = jnp.zeros_like(sum_ref)
            ssq_ref[...] = jnp.zeros_like(ssq_ref)

        sum_ref[...] += jnp.sum(acc, axis=0, keepdims=True)
        ssq_ref[...] += jnp.sum(acc * acc, axis=0, keepdims=True)

    return kernel


def _bn_relu_pool_kernel(x_ref, scale_ref, shift_ref, o_ref, p_ref):
    """Final-layer epilogue: folded BN affine + ReLU plus a fused 2x2 max-pool."""
    _, h, w, c = x_ref.shape
    y = jnp.maximum(x_ref[...] * scale_ref[...] + shift_ref[...], 0.0)
    o_ref[...] = y.astype(o_ref.dtype)

    # 2x2 max-pool on data already resident in VMEM:
    #   W (sublane) pairs via stride-2 reads of the tile just written,
    #   H pairs via a leading-dim reshape + max (no sublane/lane relayout).
    ye = o_ref[:, :, pl.ds(0, w // 2, 2), :]
    yo = o_ref[:, :, pl.ds(1, w // 2, 2), :]
    zw = jnp.maximum(ye, yo)                                   # (1, H, W//2, C)
    p_ref[...] = jnp.max(zw.reshape(1, h // 2, 2, w // 2, c), axis=2).astype(p_ref.dtype)


# ---------------------------------------------------------------------------
# pallas_call wrappers
# ---------------------------------------------------------------------------
def _mosaic_params(semantics, working_set_bytes):
    # Explicit scoped-VMEM limit with headroom for double buffering, clamped so the
    # request also fits v7x's smaller (64 MiB) VMEM.  Tiles here are one image, so
    # production shapes must keep per-image H*W*C well inside this budget.
    limit = int(min(max(2 * working_set_bytes + (4 << 20), 8 << 20), 64 << 20))
    return pltpu.CompilerParams(dimension_semantics=semantics,
                                vmem_limit_bytes=limit)


def conv_bn_stats_pass(x, scale_in, shift_in, w_mat, b, *, apply_act, compute_dtype):
    """Pass 1 of a layer: (optional previous-layer BN+ReLU) -> conv3x3 + bias.
    Returns the raw conv output plus per-channel sum / sum-of-squares."""
    n, h, w, cin = x.shape
    cout = w_mat.shape[-1]
    dsize = jnp.dtype(compute_dtype).itemsize

    x_blk = h * w * cin * 4
    y_blk = h * w * cout * 4
    patches_b = h * w * 9 * cin * (4 + dsize)
    scratch_b = (h + 2) * w * cin * 4
    weights_b = 9 * cin * cout * dsize
    working = 2 * (x_blk + y_blk) + patches_b + scratch_b + weights_b

    cost = pl.CostEstimate(
        flops=2 * n * h * w * 9 * cin * cout,
        transcendentals=0,
        bytes_accessed=n * (x_blk + y_blk) + weights_b + 16 * cout,
    )

    return pl.pallas_call(
        _make_conv_kernel(apply_act, compute_dtype),
        out_shape=(
            jax.ShapeDtypeStruct((n, h, w, cout), jnp.float32),   # conv + bias
            jax.ShapeDtypeStruct((1, cout), jnp.float32),         # sum
            jax.ShapeDtypeStruct((1, cout), jnp.float32),         # sum of squares
        ),
        grid=(n,),
        in_specs=[
            pl.BlockSpec((1, h, w, cin), lambda i: (i, 0, 0, 0)),
            pl.BlockSpec((1, cin), lambda i: (0, 0)),
            pl.BlockSpec((1, cin), lambda i: (0, 0)),
            pl.BlockSpec((9 * cin, cout), lambda i: (0, 0)),      # weights resident
            pl.BlockSpec((1, cout), lambda i: (0, 0)),
        ],
        out_specs=(
            pl.BlockSpec((1, h, w, cout), lambda i: (i, 0, 0, 0)),
            pl.BlockSpec((1, cout), lambda i: (0, 0)),            # accumulators
            pl.BlockSpec((1, cout), lambda i: (0, 0)),
        ),
        scratch_shapes=[pltpu.VMEM((1, h + 2, w, cin), jnp.float32)],
        # Stats accumulate across the batch grid -> "arbitrary".  (Per-core partial
        # sums would allow "parallel" on v7x's two TensorCores.)
        compiler_params=_mosaic_params(("arbitrary",), working),
        cost_estimate=cost,
    )(x, scale_in, shift_in, w_mat.astype(compute_dtype), b)


def bn_relu_pool_pass(y, scale, shift):
    """Final-layer epilogue: BN affine + ReLU and fused 2x2 max-pool."""
    n, h, w, c = y.shape
    blk = h * w * c * 4
    cost = pl.CostEstimate(flops=5 * n * h * w * c, transcendentals=0,
                           bytes_accessed=n * (2 * blk + blk // 4))
    return pl.pallas_call(
        _bn_relu_pool_kernel,
        out_shape=(
            jax.ShapeDtypeStruct((n, h, w, c), jnp.float32),
            jax.ShapeDtypeStruct((n, h // 2, w // 2, c), jnp.float32),
        ),
        grid=(n,),
        in_specs=[
            pl.BlockSpec((1, h, w, c), lambda i: (i, 0, 0, 0)),
            pl.BlockSpec((1, c), lambda i: (0, 0)),
            pl.BlockSpec((1, c), lambda i: (0, 0)),
        ],
        out_specs=(
            pl.BlockSpec((1, h, w, c), lambda i: (i, 0, 0, 0)),
            pl.BlockSpec((1, h // 2, w // 2, c), lambda i: (i, 0, 0, 0)),
        ),
        compiler_params=_mosaic_params(("parallel",), 3 * blk),
        cost_estimate=cost,
    )(y, scale, shift)


def downsample_forward(x_nchw, params, *, compute_dtype=jnp.float32):
    """params: list of (w_mat(9*Cin, Cout), b(1, Cout), gamma(1, Cout), beta(1, Cout))."""
    x = jnp.transpose(x_nchw, (0, 2, 3, 1)).astype(jnp.float32)   # NCHW -> NHWC once
    n, h, w, _ = x.shape

    scale = jnp.ones((1, x.shape[-1]), jnp.float32)
    shift = jnp.zeros((1, x.shape[-1]), jnp.float32)
    apply_act = False
    for w_mat, b, gamma, beta in params:
        y, s, ss = conv_bn_stats_pass(x, scale, shift, w_mat, b,
                                      apply_act=apply_act,
                                      compute_dtype=compute_dtype)
        cnt = jnp.float32(n * h * w)
        mean = s / cnt
        var = ss / cnt - mean * mean            # biased (training-mode) variance, f32
        inv = lax.rsqrt(var + EPS)
        scale = gamma * inv                      # folded BN scale, (1, Cout)
        shift = beta - mean * scale              # folded BN shift, (1, Cout)
        x = y                                    # raw conv output stays in HBM (f32)
        apply_act = True

    x_full, x_red = bn_relu_pool_pass(x, scale, shift)
    return (jnp.transpose(x_full, (0, 3, 1, 2)),                  # NHWC -> NCHW
            jnp.transpose(x_red, (0, 3, 1, 2)))


# ---------------------------------------------------------------------------
# Deterministic parameter init (synthetic, matches the nn.Module shapes)
# ---------------------------------------------------------------------------
def init_params(key, in_channels, out_channels, layers):
    raw, kern = [], []
    for i in range(layers):
        cin = in_channels if i == 0 else out_channels
        key, kw_key, kb_key = jax.random.split(key, 3)
        w = 0.1 * jax.random.normal(kw_key, (out_channels, cin, 3, 3), jnp.float32)  # OIHW
        b = 0.05 * jax.random.normal(kb_key, (out_channels,), jnp.float32)
        gamma = jnp.ones((out_channels,), jnp.float32)   # BN default init
        beta = jnp.zeros((out_channels,), jnp.float32)
        raw.append((w, b, gamma, beta))
        # (9*Cin, Cout) with row index (3*kh + kw)*Cin + ci  == the kernel's im2col
        # lane ordering.
        w_mat = jnp.transpose(w, (2, 3, 1, 0)).reshape(9 * cin, out_channels)
        kern.append((w_mat, b.reshape(1, -1), gamma.reshape(1, -1), beta.reshape(1, -1)))
    return raw, kern


# ---------------------------------------------------------------------------
# Pure-JAX reference (NCHW, mirrors the PyTorch forward in training mode)
# ---------------------------------------------------------------------------
def reference_forward(x, raw_params):
    for w, b, gamma, beta in raw_params:
        y = lax.conv_general_dilated(x, w, (1, 1), "SAME",
                                     dimension_numbers=("NCHW", "OIHW", "NCHW"))
        y = y + b[None, :, None, None]
        mean = y.mean(axis=(0, 2, 3), keepdims=True)
        var = ((y - mean) ** 2).mean(axis=(0, 2, 3), keepdims=True)
        y = (y - mean) / jnp.sqrt(var + EPS)
        y = y * gamma[None, :, None, None] + beta[None, :, None, None]
        x = jnp.maximum(y, 0.0)
    n, c, h, w = x.shape
    xr = x.reshape(n, c, h // 2, 2, w // 2, 2).max(axis=(3, 5))
    return x, xr


if __name__ == "__main__":
    N, CIN, COUT, H, W, LAYERS = 2, 4, 8, 16, 16, 2
    key = jax.random.PRNGKey(0)
    kx, kp = jax.random.split(key)
    x = jax.random.normal(kx, (N, CIN, H, W), jnp.float32)

    raw_params, kernel_params = init_params(kp, CIN, COUT, LAYERS)
    ref_x, ref_red = reference_forward(x, raw_params)

    # f32 MXU path (tight tolerance).
    fwd_f32 = jax.jit(functools.partial(downsample_forward, compute_dtype=jnp.float32))
    out_x, out_red = fwd_f32(x, kernel_params)
    jax.block_until_ready((out_x, out_red))
    assert out_x.shape == (N, COUT, H, W), out_x.shape
    assert out_red.shape == (N, COUT, H // 2, W // 2), out_red.shape
    assert jnp.allclose(out_x, ref_x, atol=2e-3, rtol=2e-3)
    assert jnp.allclose(out_red, ref_red, atol=2e-3, rtol=2e-3)

    # bf16 MXU-operand path (v6e/v7x-friendly); BN math stays f32, looser tolerance.
    fwd_bf16 = jax.jit(functools.partial(downsample_forward, compute_dtype=jnp.bfloat16))
    bx, br = fwd_bf16(x, kernel_params)
    jax.block_until_ready((bx, br))
    assert jnp.allclose(bx, ref_x, atol=5e-2, rtol=5e-2)
    assert jnp.allclose(br, ref_red, atol=5e-2, rtol=5e-2)

    print("KERNEL_OK")
</pallas_src>

<mosaic_0001>
module attributes {stable_mosaic.version = 11 : i64} {
  func.func @_bn_relu_pool_kernel(%arg0: i32, %arg1: memref<1x16x16x8xf32, #tpu.memory_space<vmem>>, %arg2: memref<1x8xf32, #tpu.memory_space<vmem>>, %arg3: memref<1x8xf32, #tpu.memory_space<vmem>>, %arg4: memref<1x16x16x8xf32, #tpu.memory_space<vmem>>, %arg5: memref<1x8x8x8xf32, #tpu.memory_space<vmem>>) attributes {dimension_semantics = [#tpu.dimension_semantics<parallel>], iteration_bounds = array<i64: 2>, scalar_prefetch = 0 : i64, scratch_operands = 0 : i64, tpu.core_type = #tpu.core_type<tc>, window_params = [{transform_indices = @transform_0, window_bounds = array<i64: 1, 16, 16, 8>}, {pipeline_mode = #tpu.pipeline_mode<synchronous>, transform_indices = @transform_1, window_bounds = array<i64: 1, 8>}, {pipeline_mode = #tpu.pipeline_mode<synchronous>, transform_indices = @transform_2, window_bounds = array<i64: 1, 8>}, {transform_indices = @transform_3, window_bounds = array<i64: 1, 16, 16, 8>}, {transform_indices = @transform_4, window_bounds = array<i64: 1, 8, 8, 8>}]} {
    %c0 = arith.constant 0 : index
    %c0_0 = arith.constant 0 : index
    %c0_1 = arith.constant 0 : index
    %c0_2 = arith.constant 0 : index
    %0 = vector.load %arg1[%c0, %c0_0, %c0_1, %c0_2] : memref<1x16x16x8xf32, #tpu.memory_space<vmem>>, vector<1x16x16x8xf32>
    %c0_3 = arith.constant 0 : index
    %c0_4 = arith.constant 0 : index
    %1 = vector.load %arg2[%c0_3, %c0_4] : memref<1x8xf32, #tpu.memory_space<vmem>>, vector<1x8xf32>
    %2 = vector.shape_cast %1 : vector<1x8xf32> to vector<1x1x1x8xf32>
    %3 = vector.broadcast %2 : vector<1x1x1x8xf32> to vector<1x16x16x8xf32>
    %4 = arith.mulf %0, %3 : vector<1x16x16x8xf32>
    %c0_5 = arith.constant 0 : index
    %c0_6 = arith.constant 0 : index
    %5 = vector.load %arg3[%c0_5, %c0_6] : memref<1x8xf32, #tpu.memory_space<vmem>>, vector<1x8xf32>
    %6 = vector.shape_cast %5 : vector<1x8xf32> to vector<1x1x1x8xf32>
    %7 = vector.broadcast %6 : vector<1x1x1x8xf32> to vector<1x16x16x8xf32>
    %8 = arith.addf %4, %7 : vector<1x16x16x8xf32>
    %cst = arith.constant 0.000000e+00 : f32
    %9 = vector.broadcast %cst : f32 to vector<1x16x16x8xf32>
    %10 = arith.maximumf %8, %9 : vector<1x16x16x8xf32>
    %c0_7 = arith.constant 0 : index
    %c0_8 = arith.constant 0 : index
    %c0_9 = arith.constant 0 : index
    %c0_10 = arith.constant 0 : index
    %11 = vector.load %arg4[%c0_7, %c0_8, %c0_9, %c0_10] : memref<1x16x16x8xf32, #tpu.memory_space<vmem>>, vector<1x16x16x8xf32>
    tpu.vector_store %arg4[%c0_7, %c0_8, %c0_9, %c0_10], %10 {strides = array<i32>} : memref<1x16x16x8xf32, #tpu.memory_space<vmem>>, vector<1x16x16x8xf32>,
    %c0_11 = arith.constant 0 : index
    %c0_12 = arith.constant 0 : index
    %c0_13 = arith.constant 0 : index
    %c0_14 = arith.constant 0 : index
    %12 = tpu.strided_load %arg4[%c0_11, %c0_12, %c0_13, %c0_14] {strides = array<i32: 1, 1, 2, 1>} : memref<1x16x16x8xf32, #tpu.memory_space<vmem>>, vector<1x16x8x8xf32>
    %c0_15 = arith.constant 0 : index
    %c0_16 = arith.constant 0 : index
    %c1 = arith.constant 1 : index
    %c0_17 = arith.constant 0 : index
    %13 = tpu.strided_load %arg4[%c0_15, %c0_16, %c1, %c0_17] {strides = array<i32: 1, 1, 2, 1>} : memref<1x16x16x8xf32, #tpu.memory_space<vmem>>, vector<1x16x8x8xf32>
    %14 = arith.maximumf %12, %13 : vector<1x16x8x8xf32>
    %15 = vector.shape_cast %14 : vector<1x16x8x8xf32> to vector<1x8x2x8x8xf32>
    %cst_18 = arith.constant dense<0xFF800000> : vector<1x8x8x8xf32>
    %16 = vector.multi_reduction <maximumf>, %15, %cst_18 [2] : vector<1x8x2x8x8xf32> to vector<1x8x8x8xf32>
    %c0_19 = arith.constant 0 : index
    %c0_20 = arith.constant 0 : index
    %c0_21 = arith.constant 0 : index
    %c0_22 = arith.constant 0 : index
    %17 = vector.load %arg5[%c0_19, %c0_20, %c0_21, %c0_22] : memref<1x8x8x8xf32, #tpu.memory_space<vmem>>, vector<1x8x8x8xf32>
    tpu.vector_store %arg5[%c0_19, %c0_20, %c0_21, %c0_22], %16 {strides = array<i32>} : memref<1x8x8x8xf32, #tpu.memory_space<vmem>>, vector<1x8x8x8xf32>,
    return
  }
  func.func @transform_0(%arg0: i32) -> (i32, i32, i32, i32) {
    %c0_i32 = arith.constant 0 : i32
    %c0_i32_0 = arith.constant 0 : i32
    %c0_i32_1 = arith.constant 0 : i32
    %c0_i32_2 = arith.constant 0 : i32
    return %arg0, %c0_i32, %c0_i32_0, %c0_i32_1 : i32, i32, i32, i32
  }
  func.func @transform_1(%arg0: i32) -> (i32, i32) {
    %c0_i32 = arith.constant 0 : i32
    %c0_i32_0 = arith.constant 0 : i32
    %c0_i32_1 = arith.constant 0 : i32
    return %c0_i32, %c0_i32_0 : i32, i32
  }
  func.func @transform_2(%arg0: i32) -> (i32, i32) {
    %c0_i32 = arith.constant 0 : i32
    %c0_i32_0 = arith.constant 0 : i32
    %c0_i32_1 = arith.constant 0 : i32
    return %c0_i32, %c0_i32_0 : i32, i32
  }
  func.func @transform_3(%arg0: i32) -> (i32, i32, i32, i32) {
    %c0_i32 = arith.constant 0 : i32
    %c0_i32_0 = arith.constant 0 : i32
    %c0_i32_1 = arith.constant 0 : i32
    %c0_i32_2 = arith.constant 0 : i32
    return %arg0, %c0_i32, %c0_i32_0, %c0_i32_1 : i32, i32, i32, i32
  }
  func.func @transform_4(%arg0: i32) -> (i32, i32, i32, i32) {
    %c0_i32 = arith.constant 0 : i32
    %c0_i32_0 = arith.constant 0 : i32
    %c0_i32_1 = arith.constant 0 : i32
    %c0_i32_2 = arith.constant 0 : i32
    return %arg0, %c0_i32, %c0_i32_0, %c0_i32_1 : i32, i32, i32, i32
  }
}

module attributes {stable_mosaic.version = 11 : i64} {
  func.func @kernel(%arg0: i32, %arg1: memref<1x16x16x8xf32, #tpu.memory_space<vmem>>, %arg2: memref<1x8xf32, #tpu.memory_space<vmem>>, %arg3: memref<1x8xf32, #tpu.memory_space<vmem>>, %arg4: memref<72x8xf32, #tpu.memory_space<vmem>>, %arg5: memref<1x8xf32, #tpu.memory_space<vmem>>, %arg6: memref<1x16x16x8xf32, #tpu.memory_space<vmem>>, %arg7: memref<1x8xf32, #tpu.memory_space<vmem>>, %arg8: memref<1x8xf32, #tpu.memory_space<vmem>>, %arg9: memref<1x18x16x8xf32, #tpu.memory_space<vmem>>) attributes {dimension_semantics = [#tpu.dimension_semantics<arbitrary>], iteration_bounds = array<i64: 2>, scalar_prefetch = 0 : i64, scratch_operands = 1 : i64, tpu.core_type = #tpu.core_type<tc>, window_params = [{transform_indices = @transform_0, window_bounds = array<i64: 1, 16, 16, 8>}, {pipeline_mode = #tpu.pipeline_mode<synchronous>, transform_indices = @transform_1, window_bounds = array<i64: 1, 8>}, {pipeline_mode = #tpu.pipeline_mode<synchronous>, transform_indices = @transform_2, window_bounds = array<i64: 1, 8>}, {pipeline_mode = #tpu.pipeline_mode<synchronous>, transform_indices = @transform_3, window_bounds = array<i64: 72, 8>}, {pipeline_mode = #tpu.pipeline_mode<synchronous>, transform_indices = @transform_4, window_bounds = array<i64: 1, 8>}, {transform_indices = @transform_5, window_bounds = array<i64: 1, 16, 16, 8>}, {pipeline_mode = #tpu.pipeline_mode<synchronous>, transform_indices = @transform_6, window_bounds = array<i64: 1, 8>}, {pipeline_mode = #tpu.pipeline_mode<synchronous>, transform_indices = @transform_7, window_bounds = array<i64: 1, 8>}]} {
    %c0 = arith.constant 0 : index
    %c0_0 = arith.constant 0 : index
    %c0_1 = arith.constant 0 : index
    %c0_2 = arith.constant 0 : index
    %0 = vector.load %arg1[%c0, %c0_0, %c0_1, %c0_2] : memref<1x16x16x8xf32, #tpu.memory_space<vmem>>, vector<1x16x16x8xf32>
    %c0_3 = arith.constant 0 : index
    %c0_4 = arith.constant 0 : index
    %1 = vector.load %arg2[%c0_3, %c0_4] : memref<1x8xf32, #tpu.memory_space<vmem>>, vector<1x8xf32>
    %2 = vector.shape_cast %1 : vector<1x8xf32> to vector<1x1x1x8xf32>
    %3 = vector.broadcast %2 : vector<1x1x1x8xf32> to vector<1x16x16x8xf32>
    %4 = arith.mulf %0, %3 : vector<1x16x16x8xf32>
    %c0_5 = arith.constant 0 : index
    %c0_6 = arith.constant 0 : index
    %5 = vector.load %arg3[%c0_5, %c0_6] : memref<1x8xf32, #tpu.memory_space<vmem>>, vector<1x8xf32>
    %6 = vector.shape_cast %5 : vector<1x8xf32> to vector<1x1x1x8xf32>
    %7 = vector.broadcast %6 : vector<1x1x1x8xf32> to vector<1x16x16x8xf32>
    %8 = arith.addf %4, %7 : vector<1x16x16x8xf32>
    %cst = arith.constant 0.000000e+00 : f32
    %9 = vector.broadcast %cst : f32 to vector<1x16x16x8xf32>
    %10 = arith.maximumf %8, %9 : vector<1x16x16x8xf32>
    %cst_7 = arith.constant 0.000000e+00 : f32
    %11 = vector.broadcast %cst_7 : f32 to vector<1x1x16x8xf32>
    %c0_8 = arith.constant 0 : index
    %c0_9 = arith.constant 0 : index
    %c0_10 = arith.constant 0 : index
    %c0_11 = arith.constant 0 : index
    %12 = vector.load %arg9[%c0_8, %c0_9, %c0_10, %c0_11] : memref<1x18x16x8xf32, #tpu.memory_space<vmem>>, vector<1x1x16x8xf32>
    tpu.vector_store %arg9[%c0_8, %c0_9, %c0_10, %c0_11], %11 {strides = array<i32>} : memref<1x18x16x8xf32, #tpu.memory_space<vmem>>, vector<1x1x16x8xf32>,
    %c0_12 = arith.constant 0 : index
    %c17 = arith.constant 17 : index
    %c0_13 = arith.constant 0 : index
    %c0_14 = arith.constant 0 : index
    %13 = vector.load %arg9[%c0_12, %c17, %c0_13, %c0_14] : memref<1x18x16x8xf32, #tpu.memory_space<vmem>>, vector<1x1x16x8xf32>
    tpu.vector_store %arg9[%c0_12, %c17, %c0_13, %c0_14], %11 {strides = array<i32>} : memref<1x18x16x8xf32, #tpu.memory_space<vmem>>, vector<1x1x16x8xf32>,
    %c0_15 = arith.constant 0 : index
    %c1 = arith.constant 1 : index
    %c0_16 = arith.constant 0 : index
    %c0_17 = arith.constant 0 : index
    %14 = vector.load %arg9[%c0_15, %c1, %c0_16, %c0_17] : memref<1x18x16x8xf32, #tpu.memory_space<vmem>>, vector<1x16x16x8xf32>
    tpu.vector_store %arg9[%c0_15, %c1, %c0_16, %c0_17], %10 {strides = array<i32>} : memref<1x18x16x8xf32, #tpu.memory_space<vmem>>, vector<1x16x16x8xf32>,
    %c0_18 = arith.constant 0 : index
    %c0_19 = arith.constant 0 : index
    %c0_20 = arith.constant 0 : index
    %c0_21 = arith.constant 0 : index
    %15 = vector.load %arg9[%c0_18, %c0_19, %c0_20, %c0_21] : memref<1x18x16x8xf32, #tpu.memory_space<vmem>>, vector<1x18x16x8xf32>
    %16 = tpu.iota {dimensions = array<i32: 2>} : vector<1x1x16x8xi32>
    %c0_i32 = arith.constant 0 : i32
    %17 = vector.broadcast %c0_i32 : i32 to vector<1x1x16x8xi32>
    %18 = arith.cmpi ne, %16, %17 : vector<1x1x16x8xi32>
    %c15_i32 = arith.constant 15 : i32
    %19 = vector.broadcast %c15_i32 : i32 to vector<1x1x16x8xi32>
    %20 = arith.cmpi ne, %16, %19 : vector<1x1x16x8xi32>
    %21 = vector.extract_strided_slice %15 {offsets = [0, 0, 0, 0], sizes = [1, 16, 16, 8], strides = [1, 1, 1, 1]} : vector<1x18x16x8xf32> to vector<1x16x16x8xf32>
    %c1_i32 = arith.constant 1 : i32
    %22 = tpu.dynamic_rotate %21 by %c1_i32 dim 2 : vector<1x16x16x8xf32>, i32 -> vector<1x16x16x8xf32>
    %cst_22 = arith.constant 0.000000e+00 : f32
    %23 = vector.broadcast %cst_22 : f32 to vector<1x16x16x8xf32>
    %24 = vector.shape_cast %18 : vector<1x1x16x8xi1> to vector<1x1x16x8xi1>
    %25 = vector.broadcast %24 : vector<1x1x16x8xi1> to vector<1x16x16x8xi1>
    %26 = arith.select %25, %22, %23 : vector<1x16x16x8xi1>, vector<1x16x16x8xf32>
    %c15_i32_23 = arith.constant 15 : i32
    %27 = tpu.dynamic_rotate %21 by %c15_i32_23 dim 2 : vector<1x16x16x8xf32>, i32 -> vector<1x16x16x8xf32>
    %cst_24 = arith.constant 0.000000e+00 : f32
    %28 = vector.broadcast %cst_24 : f32 to vector<1x16x16x8xf32>
    %29 = vector.shape_cast %20 : vector<1x1x16x8xi1> to vector<1x1x16x8xi1>
    %30 = vector.broadcast %29 : vector<1x1x16x8xi1> to vector<1x16x16x8xi1>
    %31 = arith.select %30, %27, %28 : vector<1x16x16x8xi1>, vector<1x16x16x8xf32>
    %32 = vector.extract_strided_slice %15 {offsets = [0, 1, 0, 0], sizes = [1, 16, 16, 8], strides = [1, 1, 1, 1]} : vector<1x18x16x8xf32> to vector<1x16x16x8xf32>
    %c1_i32_25 = arith.constant 1 : i32
    %33 = tpu.dynamic_rotate %32 by %c1_i32_25 dim 2 : vector<1x16x16x8xf32>, i32 -> vector<1x16x16x8xf32>
    %cst_26 = arith.constant 0.000000e+00 : f32
    %34 = vector.broadcast %cst_26 : f32 to vector<1x16x16x8xf32>
    %35 = vector.shape_cast %18 : vector<1x1x16x8xi1> to vector<1x1x16x8xi1>
    %36 = vector.broadcast %35 : vector<1x1x16x8xi1> to vector<1x16x16x8xi1>
    %37 = arith.select %36, %33, %34 : vector<1x16x16x8xi1>, vector<1x16x16x8xf32>
    %c15_i32_27 = arith.constant 15 : i32
    %38 = tpu.dynamic_rotate %32 by %c15_i32_27 dim 2 : vector<1x16x16x8xf32>, i32 -> vector<1x16x16x8xf32>
    %cst_28 = arith.constant 0.000000e+00 : f32
    %39 = vector.broadcast %cst_28 : f32 to vector<1x16x16x8xf32>
    %40 = vector.shape_cast %20 : vector<1x1x16x8xi1> to vector<1x1x16x8xi1>
    %41 = vector.broadcast %40 : vector<1x1x16x8xi1> to vector<1x16x16x8xi1>
    %42 = arith.select %41, %38, %39 : vector<1x16x16x8xi1>, vector<1x16x16x8xf32>
    %43 = vector.extract_strided_slice %15 {offsets = [0, 2, 0, 0], sizes = [1, 16, 16, 8], strides = [1, 1, 1, 1]} : vector<1x18x16x8xf32> to vector<1x16x16x8xf32>
    %c1_i32_29 = arith.constant 1 : i32
    %44 = tpu.dynamic_rotate %43 by %c1_i32_29 dim 2 : vector<1x16x16x8xf32>, i32 -> vector<1x16x16x8xf32>
    %cst_30 = arith.constant 0.000000e+00 : f32
    %45 = vector.broadcast %cst_30 : f32 to vector<1x16x16x8xf32>
    %46 = vector.shape_cast %18 : vector<1x1x16x8xi1> to vector<1x1x16x8xi1>
    %47 = vector.broadcast %46 : vector<1x1x16x8xi1> to vector<1x16x16x8xi1>
    %48 = arith.select %47, %44, %45 : vector<1x16x16x8xi1>, vector<1x16x16x8xf32>
    %c15_i32_31 = arith.constant 15 : i32
    %49 = tpu.dynamic_rotate %43 by %c15_i32_31 dim 2 : vector<1x16x16x8xf32>, i32 -> vector<1x16x16x8xf32>
    %cst_32 = arith.constant 0.000000e+00 : f32
    %50 = vector.broadcast %cst_32 : f32 to vector<1x16x16x8xf32>
    %51 = vector.shape_cast %20 : vector<1x1x16x8xi1> to vector<1x1x16x8xi1>
    %52 = vector.broadcast %51 : vector<1x1x16x8xi1> to vector<1x16x16x8xi1>
    %53 = arith.select %52, %49, %50 : vector<1x16x16x8xi1>, vector<1x16x16x8xf32>
    %54 = tpu.concatenate %26, %21, %31, %37, %32, %42, %48, %43, %53 in 3 : vector<1x16x16x8xf32>, vector<1x16x16x8xf32>, vector<1x16x16x8xf32>, vector<1x16x16x8xf32>, vector<1x16x16x8xf32>, vector<1x16x16x8xf32>, vector<1x16x16x8xf32>, vector<1x16x16x8xf32>, vector<1x16x16x8xf32> -> vector<1x16x16x72xf32>
    %55 = vector.shape_cast %54 : vector<1x16x16x72xf32> to vector<256x72xf32>
    %c0_33 = arith.constant 0 : index
    %c0_34 = arith.constant 0 : index
    %56 = vector.load %arg4[%c0_33, %c0_34] : memref<72x8xf32, #tpu.memory_space<vmem>>, vector<72x8xf32>
    %cst_35 = arith.constant dense<0.000000e+00> : vector<256x8xf32>
    %57 = tpu.matmul %55, %56, %cst_35 {dimension_numbers = #tpu.dot_dimension_numbers<[1], [0], [0], [1], [0, 0, 1, 1], [], []>} : vector<256x72xf32>, vector<72x8xf32>, vector<256x8xf32> -> vector<256x8xf32>
    %c0_36 = arith.constant 0 : index
    %c0_37 = arith.constant 0 : index
    %58 = vector.load %arg5[%c0_36, %c0_37] : memref<1x8xf32, #tpu.memory_space<vmem>>, vector<1x8xf32>
    %59 = vector.broadcast %58 : vector<1x8xf32> to vector<256x8xf32>
    %60 = arith.addf %57, %59 : vector<256x8xf32>
    %61 = vector.shape_cast %60 : vector<256x8xf32> to vector<1x16x16x8xf32>
    %c0_38 = arith.constant 0 : index
    %c0_39 = arith.constant 0 : index
    %c0_40 = arith.constant 0 : index
    %c0_41 = arith.constant 0 : index
    %62 = vector.load %arg6[%c0_38, %c0_39, %c0_40, %c0_41] : memref<1x16x16x8xf32, #tpu.memory_space<vmem>>, vector<1x16x16x8xf32>
    tpu.vector_store %arg6[%c0_38, %c0_39, %c0_40, %c0_41], %61 {strides = array<i32>} : memref<1x16x16x8xf32, #tpu.memory_space<vmem>>, vector<1x16x16x8xf32>,
    %c0_i32_42 = arith.constant 0 : i32
    %63 = arith.cmpi eq, %arg0, %c0_i32_42 : i32
    %64 = arith.extui %63 : i1 to i32
    %c0_i32_43 = arith.constant 0 : i32
    %65 = arith.cmpi ne, %64, %c0_i32_43 : i32
    scf.if %65 {
      %cst_54 = arith.constant 0.000000e+00 : f32
      %77 = vector.broadcast %cst_54 : f32 to vector<1x8xf32>
      %c0_55 = arith.constant 0 : index
      %c0_56 = arith.constant 0 : index
      %78 = vector.load %arg7[%c0_55, %c0_56] : memref<1x8xf32, #tpu.memory_space<vmem>>, vector<1x8xf32>
      tpu.vector_store %arg7[%c0_55, %c0_56], %77 {strides = array<i32>} : memref<1x8xf32, #tpu.memory_space<vmem>>, vector<1x8xf32>,
      %cst_57 = arith.constant 0.000000e+00 : f32
      %79 = vector.broadcast %cst_57 : f32 to vector<1x8xf32>
      %c0_58 = arith.constant 0 : index
      %c0_59 = arith.constant 0 : index
      %80 = vector.load %arg8[%c0_58, %c0_59] : memref<1x8xf32, #tpu.memory_space<vmem>>, vector<1x8xf32>
      tpu.vector_store %arg8[%c0_58, %c0_59], %79 {strides = array<i32>} : memref<1x8xf32, #tpu.memory_space<vmem>>, vector<1x8xf32>,
    } else {
    }
    %c0_44 = arith.constant 0 : index
    %c0_45 = arith.constant 0 : index
    %66 = vector.load %arg7[%c0_44, %c0_45] : memref<1x8xf32, #tpu.memory_space<vmem>>, vector<1x8xf32>
    %cst_46 = arith.constant dense<0.000000e+00> : vector<8xf32>
    %67 = vector.multi_reduction <add>, %60, %cst_46 [0] : vector<256x8xf32> to vector<8xf32>
    %68 = vector.shape_cast %67 : vector<8xf32> to vector<1x8xf32>
    %69 = arith.addf %66, %68 : vector<1x8xf32>
    %c0_47 = arith.constant 0 : index
    %c0_48 = arith.constant 0 : index
    %70 = vector.load %arg7[%c0_47, %c0_48] : memref<1x8xf32, #tpu.memory_space<vmem>>, vector<1x8xf32>
    tpu.vector_store %arg7[%c0_47, %c0_48], %69 {strides = array<i32>} : memref<1x8xf32, #tpu.memory_space<vmem>>, vector<1x8xf32>,
    %c0_49 = arith.constant 0 : index
    %c0_50 = arith.constant 0 : index
    %71 = vector.load %arg8[%c0_49, %c0_50] : memref<1x8xf32, #tpu.memory_space<vmem>>, vector<1x8xf32>
    %72 = arith.mulf %60, %60 : vector<256x8xf32>
    %cst_51 = arith.constant dense<0.000000e+00> : vector<8xf32>
    %73 = vector.multi_reduction <add>, %72, %cst_51 [0] : vector<256x8xf32> to vector<8xf32>
    %74 = vector.shape_cast %73 : vector<8xf32> to vector<1x8xf32>
    %75 = arith.addf %71, %74 : vector<1x8xf32>
    %c0_52 = arith.constant 0 : index
    %c0_53 = arith.constant 0 : index
    %76 = vector.load %arg8[%c0_52, %c0_53] : memref<1x8xf32, #tpu.memory_space<vmem>>, vector<1x8xf32>
    tpu.vector_store %arg8[%c0_52, %c0_53], %75 {strides = array<i32>} : memref<1x8xf32, #tpu.memory_space<vmem>>, vector<1x8xf32>,
    return
  }
  func.func @transform_0(%arg0: i32) -> (i32, i32, i32, i32) {
    %c0_i32 = arith.constant 0 : i32
    %c0_i32_0 = arith.constant 0 : i32
    %c0_i32_1 = arith.constant 0 : i32
    %c0_i32_2 = arith.constant 0 : i32
    return %arg0, %c0_i32, %c0_i32_0, %c0_i32_1 : i32, i32, i32, i32
  }
  func.func @transform_1(%arg0: i32) -> (i32, i32) {
    %c0_i32 = arith.constant 0 : i32
    %c0_i32_0 = arith.constant 0 : i32
    %c0_i32_1 = arith.constant 0 : i32
    return %c0_i32, %c0_i32_0 : i32, i32
  }
  func.func @transform_2(%arg0: i32) -> (i32, i32) {
    %c0_i32 = arith.constant 0 : i32
    %c0_i32_0 = arith.constant 0 : i32
    %c0_i32_1 = arith.constant 0 : i32
    return %c0_i32, %c0_i32_0 : i32, i32
  }
  func.func @transform_3(%arg0: i32) -> (i32, i32) {
    %c0_i32 = arith.constant 0 : i32
    %c0_i32_0 = arith.constant 0 : i32
    %c0_i32_1 = arith.constant 0 : i32
    return %c0_i32, %c0_i32_0 : i32, i32
  }
  func.func @transform_4(%arg0: i32) -> (i32, i32) {
    %c0_i32 = arith.constant 0 : i32
    %c0_i32_0 = arith.constant 0 : i32
    %c0_i32_1 = arith.constant 0 : i32
    return %c0_i32, %c0_i32_0 : i32, i32
  }
  func.func @transform_5(%arg0: i32) -> (i32, i32, i32, i32) {
    %c0_i32 = arith.constant 0 : i32
    %c0_i32_0 = arith.constant 0 : i32
    %c0_i32_1 = arith.constant 0 : i32
    %c0_i32_2 = arith.constant 0 : i32
    return %arg0, %c0_i32, %c0_i32_0, %c0_i32_1 : i32, i32, i32, i32
  }
  func.func @transform_6(%arg0: i32) -> (i32, i32) {
    %c0_i32 = arith.constant 0 : i32
    %c0_i32_0 = arith.constant 0 : i32
    %c0_i32_1 = arith.constant 0 : i32
    return %c0_i32, %c0_i32_0 : i32, i32
  }
  func.func @transform_7(%arg0: i32) -> (i32, i32) {
    %c0_i32 = arith.constant 0 : i32
    %c0_i32_0 = arith.constant 0 : i32
    %c0_i32_1 = arith.constant 0 : i32
    return %c0_i32, %c0_i32_0 : i32, i32
  }
}

module attributes {stable_mosaic.version = 11 : i64} {
  func.func @kernel(%arg0: i32, %arg1: memref<1x16x16x4xf32, #tpu.memory_space<vmem>>, %arg2: memref<1x4xf32, #tpu.memory_space<vmem>>, %arg3: memref<1x4xf32, #tpu.memory_space<vmem>>, %arg4: memref<36x8xf32, #tpu.memory_space<vmem>>, %arg5: memref<1x8xf32, #tpu.memory_space<vmem>>, %arg6: memref<1x16x16x8xf32, #tpu.memory_space<vmem>>, %arg7: memref<1x8xf32, #tpu.memory_space<vmem>>, %arg8: memref<1x8xf32, #tpu.memory_space<vmem>>, %arg9: memref<1x18x16x4xf32, #tpu.memory_space<vmem>>) attributes {dimension_semantics = [#tpu.dimension_semantics<arbitrary>], iteration_bounds = array<i64: 2>, scalar_prefetch = 0 : i64, scratch_operands = 1 : i64, tpu.core_type = #tpu.core_type<tc>, window_params = [{transform_indices = @transform_0, window_bounds = array<i64: 1, 16, 16, 4>}, {pipeline_mode = #tpu.pipeline_mode<synchronous>, transform_indices = @transform_1, window_bounds = array<i64: 1, 4>}, {pipeline_mode = #tpu.pipeline_mode<synchronous>, transform_indices = @transform_2, window_bounds = array<i64: 1, 4>}, {pipeline_mode = #tpu.pipeline_mode<synchronous>, transform_indices = @transform_3, window_bounds = array<i64: 36, 8>}, {pipeline_mode = #tpu.pipeline_mode<synchronous>, transform_indices = @transform_4, window_bounds = array<i64: 1, 8>}, {transform_indices = @transform_5, window_bounds = array<i64: 1, 16, 16, 8>}, {pipeline_mode = #tpu.pipeline_mode<synchronous>, transform_indices = @transform_6, window_bounds = array<i64: 1, 8>}, {pipeline_mode = #tpu.pipeline_mode<synchronous>, transform_indices = @transform_7, window_bounds = array<i64: 1, 8>}]} {
    %c0 = arith.constant 0 : index
    %c0_0 = arith.constant 0 : index
    %c0_1 = arith.constant 0 : index
    %c0_2 = arith.constant 0 : index
    %0 = vector.load %arg1[%c0, %c0_0, %c0_1, %c0_2] : memref<1x16x16x4xf32, #tpu.memory_space<vmem>>, vector<1x16x16x4xf32>
    %cst = arith.constant 0.000000e+00 : f32
    %1 = vector.broadcast %cst : f32 to vector<1x1x16x4xf32>
    %c0_3 = arith.constant 0 : index
    %c0_4 = arith.constant 0 : index
    %c0_5 = arith.constant 0 : index
    %c0_6 = arith.constant 0 : index
    %2 = vector.load %arg9[%c0_3, %c0_4, %c0_5, %c0_6] : memref<1x18x16x4xf32, #tpu.memory_space<vmem>>, vector<1x1x16x4xf32>
    tpu.vector_store %arg9[%c0_3, %c0_4, %c0_5, %c0_6], %1 {strides = array<i32>} : memref<1x18x16x4xf32, #tpu.memory_space<vmem>>, vector<1x1x16x4xf32>,
    %c0_7 = arith.constant 0 : index
    %c17 = arith.constant 17 : index
    %c0_8 = arith.constant 0 : index
    %c0_9 = arith.constant 0 : index
    %3 = vector.load %arg9[%c0_7, %c17, %c0_8, %c0_9] : memref<1x18x16x4xf32, #tpu.memory_space<vmem>>, vector<1x1x16x4xf32>
    tpu.vector_store %arg9[%c0_7, %c17, %c0_8, %c0_9], %1 {strides = array<i32>} : memref<1x18x16x4xf32, #tpu.memory_space<vmem>>, vector<1x1x16x4xf32>,
    %c0_10 = arith.constant 0 : index
    %c1 = arith.constant 1 : index
    %c0_11 = arith.constant 0 : index
    %c0_12 = arith.constant 0 : index
    %4 = vector.load %arg9[%c0_10, %c1, %c0_11, %c0_12] : memref<1x18x16x4xf32, #tpu.memory_space<vmem>>, vector<1x16x16x4xf32>
    tpu.vector_store %arg9[%c0_10, %c1, %c0_11, %c0_12], %0 {strides = array<i32>} : memref<1x18x16x4xf32, #tpu.memory_space<vmem>>, vector<1x16x16x4xf32>,
    %c0_13 = arith.constant 0 : index
    %c0_14 = arith.constant 0 : index
    %c0_15 = arith.constant 0 : index
    %c0_16 = arith.constant 0 : index
    %5 = vector.load %arg9[%c0_13, %c0_14, %c0_15, %c0_16] : memref<1x18x16x4xf32, #tpu.memory_space<vmem>>, vector<1x18x16x4xf32>
    %6 = tpu.iota {dimensions = array<i32: 2>} : vector<1x1x16x4xi32>
    %c0_i32 = arith.constant 0 : i32
    %7 = vector.broadcast %c0_i32 : i32 to vector<1x1x16x4xi32>
    %8 = arith.cmpi ne, %6, %7 : vector<1x1x16x4xi32>
    %c15_i32 = arith.constant 15 : i32
    %9 = vector.broadcast %c15_i32 : i32 to vector<1x1x16x4xi32>
    %10 = arith.cmpi ne, %6, %9 : vector<1x1x16x4xi32>
    %11 = vector.extract_strided_slice %5 {offsets = [0, 0, 0, 0], sizes = [1, 16, 16, 4], strides = [1, 1, 1, 1]} : vector<1x18x16x4xf32> to vector<1x16x16x4xf32>
    %c1_i32 = arith.constant 1 : i32
    %12 = tpu.dynamic_rotate %11 by %c1_i32 dim 2 : vector<1x16x16x4xf32>, i32 -> vector<1x16x16x4xf32>
    %cst_17 = arith.constant 0.000000e+00 : f32
    %13 = vector.broadcast %cst_17 : f32 to vector<1x16x16x4xf32>
    %14 = vector.shape_cast %8 : vector<1x1x16x4xi1> to vector<1x1x16x4xi1>
    %15 = vector.broadcast %14 : vector<1x1x16x4xi1> to vector<1x16x16x4xi1>
    %16 = arith.select %15, %12, %13 : vector<1x16x16x4xi1>, vector<1x16x16x4xf32>
    %c15_i32_18 = arith.constant 15 : i32
    %17 = tpu.dynamic_rotate %11 by %c15_i32_18 dim 2 : vector<1x16x16x4xf32>, i32 -> vector<1x16x16x4xf32>
    %cst_19 = arith.constant 0.000000e+00 : f32
    %18 = vector.broadcast %cst_19 : f32 to vector<1x16x16x4xf32>
    %19 = vector.shape_cast %10 : vector<1x1x16x4xi1> to vector<1x1x16x4xi1>
    %20 = vector.broadcast %19 : vector<1x1x16x4xi1> to vector<1x16x16x4xi1>
    %21 = arith.select %20, %17, %18 : vector<1x16x16x4xi1>, vector<1x16x16x4xf32>
    %22 = vector.extract_strided_slice %5 {offsets = [0, 1, 0, 0], sizes = [1, 16, 16, 4], strides = [1, 1, 1, 1]} : vector<1x18x16x4xf32> to vector<1x16x16x4xf32>
    %c1_i32_20 = arith.constant 1 : i32
    %23 = tpu.dynamic_rotate %22 by %c1_i32_20 dim 2 : vector<1x16x16x4xf32>, i32 -> vector<1x16x16x4xf32>
    %cst_21 = arith.constant 0.000000e+00 : f32
    %24 = vector.broadcast %cst_21 : f32 to vector<1x16x16x4xf32>
    %25 = vector.shape_cast %8 : vector<1x1x16x4xi1> to vector<1x1x16x4xi1>
    %26 = vector.broadcast %25 : vector<1x1x16x4xi1> to vector<1x16x16x4xi1>
    %27 = arith.select %26, %23, %24 : vector<1x16x16x4xi1>, vector<1x16x16x4xf32>
    %c15_i32_22 = arith.constant 15 : i32
    %28 = tpu.dynamic_rotate %22 by %c15_i32_22 dim 2 : vector<1x16x16x4xf32>, i32 -> vector<1x16x16x4xf32>
    %cst_23 = arith.constant 0.000000e+00 : f32
    %29 = vector.broadcast %cst_23 : f32 to vector<1x16x16x4xf32>
    %30 = vector.shape_cast %10 : vector<1x1x16x4xi1> to vector<1x1x16x4xi1>
    %31 = vector.broadcast %30 : vector<1x1x16x4xi1> to vector<1x16x16x4xi1>
    %32 = arith.select %31, %28, %29 : vector<1x16x16x4xi1>, vector<1x16x16x4xf32>
    %33 = vector.extract_strided_slice %5 {offsets = [0, 2, 0, 0], sizes = [1, 16, 16, 4], strides = [1, 1, 1, 1]} : vector<1x18x16x4xf32> to vector<1x16x16x4xf32>
    %c1_i32_24 = arith.constant 1 : i32
    %34 = tpu.dynamic_rotate %33 by %c1_i32_24 dim 2 : vector<1x16x16x4xf32>, i32 -> vector<1x16x16x4xf32>
    %cst_25 = arith.constant 0.000000e+00 : f32
    %35 = vector.broadcast %cst_25 : f32 to vector<1x16x16x4xf32>
    %36 = vector.shape_cast %8 : vector<1x1x16x4xi1> to vector<1x1x16x4xi1>
    %37 = vector.broadcast %36 : vector<1x1x16x4xi1> to vector<1x16x16x4xi1>
    %38 = arith.select %37, %34, %35 : vector<1x16x16x4xi1>, vector<1x16x16x4xf32>
    %c15_i32_26 = arith.constant 15 : i32
    %39 = tpu.dynamic_rotate %33 by %c15_i32_26 dim 2 : vector<1x16x16x4xf32>, i32 -> vector<1x16x16x4xf32>
    %cst_27 = arith.constant 0.000000e+00 : f32
    %40 = vector.broadcast %cst_27 : f32 to vector<1x16x16x4xf32>
    %41 = vector.shape_cast %10 : vector<1x1x16x4xi1> to vector<1x1x16x4xi1>
    %42 = vector.broadcast %41 : vector<1x1x16x4xi1> to vector<1x16x16x4xi1>
    %43 = arith.select %42, %39, %40 : vector<1x16x16x4xi1>, vector<1x16x16x4xf32>
    %44 = tpu.concatenate %16, %11, %21, %27, %22, %32, %38, %33, %43 in 3 : vector<1x16x16x4xf32>, vector<1x16x16x4xf32>, vector<1x16x16x4xf32>, vector<1x16x16x4xf32>, vector<1x16x16x4xf32>, vector<1x16x16x4xf32>, vector<1x16x16x4xf32>, vector<1x16x16x4xf32>, vector<1x16x16x4xf32> -> vector<1x16x16x36xf32>
    %45 = vector.shape_cast %44 : vector<1x16x16x36xf32> to vector<256x36xf32>
    %c0_28 = arith.constant 0 : index
    %c0_29 = arith.constant 0 : index
    %46 = vector.load %arg4[%c0_28, %c0_29] : memref<36x8xf32, #tpu.memory_space<vmem>>, vector<36x8xf32>
    %cst_30 = arith.constant dense<0.000000e+00> : vector<256x8xf32>
    %47 = tpu.matmul %45, %46, %cst_30 {dimension_numbers = #tpu.dot_dimension_numbers<[1], [0], [0], [1], [0, 0, 1, 1], [], []>} : vector<256x36xf32>, vector<36x8xf32>, vector<256x8xf32> -> vector<256x8xf32>
    %c0_31 = arith.constant 0 : index
    %c0_32 = arith.constant 0 : index
    %48 = vector.load %arg5[%c0_31, %c0_32] : memref<1x8xf32, #tpu.memory_space<vmem>>, vector<1x8xf32>
    %49 = vector.broadcast %48 : vector<1x8xf32> to vector<256x8xf32>
    %50 = arith.addf %47, %49 : vector<256x8xf32>
    %51 = vector.shape_cast %50 : vector<256x8xf32> to vector<1x16x16x8xf32>
    %c0_33 = arith.constant 0 : index
    %c0_34 = arith.constant 0 : index
    %c0_35 = arith.constant 0 : index
    %c0_36 = arith.constant 0 : index
    %52 = vector.load %arg6[%c0_33, %c0_34, %c0_35, %c0_36] : memref<1x16x16x8xf32, #tpu.memory_space<vmem>>, vector<1x16x16x8xf32>
    tpu.vector_store %arg6[%c0_33, %c0_34, %c0_35, %c0_36], %51 {strides = array<i32>} : memref<1x16x16x8xf32, #tpu.memory_space<vmem>>, vector<1x16x16x8xf32>,
    %c0_i32_37 = arith.constant 0 : i32
    %53 = arith.cmpi eq, %arg0, %c0_i32_37 : i32
    %54 = arith.extui %53 : i1 to i32
    %c0_i32_38 = arith.constant 0 : i32
    %55 = arith.cmpi ne, %54, %c0_i32_38 : i32
    scf.if %55 {
      %cst_49 = arith.constant 0.000000e+00 : f32
      %67 = vector.broadcast %cst_49 : f32 to vector<1x8xf32>
      %c0_50 = arith.constant 0 : index
      %c0_51 = arith.constant 0 : index
      %68 = vector.load %arg7[%c0_50, %c0_51] : memref<1x8xf32, #tpu.memory_space<vmem>>, vector<1x8xf32>
      tpu.vector_store %arg7[%c0_50, %c0_51], %67 {strides = array<i32>} : memref<1x8xf32, #tpu.memory_space<vmem>>, vector<1x8xf32>,
      %cst_52 = arith.constant 0.000000e+00 : f32
      %69 = vector.broadcast %cst_52 : f32 to vector<1x8xf32>
      %c0_53 = arith.constant 0 : index
      %c0_54 = arith.constant 0 : index
      %70 = vector.load %arg8[%c0_53, %c0_54] : memref<1x8xf32, #tpu.memory_space<vmem>>, vector<1x8xf32>
      tpu.vector_store %arg8[%c0_53, %c0_54], %69 {strides = array<i32>} : memref<1x8xf32, #tpu.memory_space<vmem>>, vector<1x8xf32>,
    } else {
    }
    %c0_39 = arith.constant 0 : index
    %c0_40 = arith.constant 0 : index
    %56 = vector.load %arg7[%c0_39, %c0_40] : memref<1x8xf32, #tpu.memory_space<vmem>>, vector<1x8xf32>
    %cst_41 = arith.constant dense<0.000000e+00> : vector<8xf32>
    %57 = vector.multi_reduction <add>, %50, %cst_41 [0] : vector<256x8xf32> to vector<8xf32>
    %58 = vector.shape_cast %57 : vector<8xf32> to vector<1x8xf32>
    %59 = arith.addf %56, %58 : vector<1x8xf32>
    %c0_42 = arith.constant 0 : index
    %c0_43 = arith.constant 0 : index
    %60 = vector.load %arg7[%c0_42, %c0_43] : memref<1x8xf32, #tpu.memory_space<vmem>>, vector<1x8xf32>
    tpu.vector_store %arg7[%c0_42, %c0_43], %59 {strides = array<i32>} : memref<1x8xf32, #tpu.memory_space<vmem>>, vector<1x8xf32>,
    %c0_44 = arith.constant 0 : index
    %c0_45 = arith.constant 0 : index
    %61 = vector.load %arg8[%c0_44, %c0_45] : memref<1x8xf32, #tpu.memory_space<vmem>>, vector<1x8xf32>
    %62 = arith.mulf %50, %50 : vector<256x8xf32>
    %cst_46 = arith.constant dense<0.000000e+00> : vector<8xf32>
    %63 = vector.multi_reduction <add>, %62, %cst_46 [0] : vector<256x8xf32> to vector<8xf32>
    %64 = vector.shape_cast %63 : vector<8xf32> to vector<1x8xf32>
    %65 = arith.addf %61, %64 : vector<1x8xf32>
    %c0_47 = arith.constant 0 : index
    %c0_48 = arith.constant 0 : index
    %66 = vector.load %arg8[%c0_47, %c0_48] : memref<1x8xf32, #tpu.memory_space<vmem>>, vector<1x8xf32>
    tpu.vector_store %arg8[%c0_47, %c0_48], %65 {strides = array<i32>} : memref<1x8xf32, #tpu.memory_space<vmem>>, vector<1x8xf32>,
    return
  }
  func.func @transform_0(%arg0: i32) -> (i32, i32, i32, i32) {
    %c0_i32 = arith.constant 0 : i32
    %c0_i32_0 = arith.constant 0 : i32
    %c0_i32_1 = arith.constant 0 : i32
    %c0_i32_2 = arith.constant 0 : i32
    return %arg0, %c0_i32, %c0_i32_0, %c0_i32_1 : i32, i32, i32, i32
  }
  func.func @transform_1(%arg0: i32) -> (i32, i32) {
    %c0_i32 = arith.constant 0 : i32
    %c0_i32_0 = arith.constant 0 : i32
    %c0_i32_1 = arith.constant 0 : i32
    return %c0_i32, %c0_i32_0 : i32, i32
  }
  func.func @transform_2(%arg0: i32) -> (i32, i32) {
    %c0_i32 = arith.constant 0 : i32
    %c0_i32_0 = arith.constant 0 : i32
    %c0_i32_1 = arith.constant 0 : i32
    return %c0_i32, %c0_i32_0 : i32, i32
  }
  func.func @transform_3(%arg0: i32) -> (i32, i32) {
    %c0_i32 = arith.constant 0 : i32
    %c0_i32_0 = arith.constant 0 : i32
    %c0_i32_1 = arith.constant 0 : i32
    return %c0_i32, %c0_i32_0 : i32, i32
  }
  func.func @transform_4(%arg0: i32) -> (i32, i32) {
    %c0_i32 = arith.constant 0 : i32
    %c0_i32_0 = arith.constant 0 : i32
    %c0_i32_1 = arith.constant 0 : i32
    return %c0_i32, %c0_i32_0 : i32, i32
  }
  func.func @transform_5(%arg0: i32) -> (i32, i32, i32, i32) {
    %c0_i32 = arith.constant 0 : i32
    %c0_i32_0 = arith.constant 0 : i32
    %c0_i32_1 = arith.constant 0 : i32
    %c0_i32_2 = arith.constant 0 : i32
    return %arg0, %c0_i32, %c0_i32_0, %c0_i32_1 : i32, i32, i32, i32
  }
  func.func @transform_6(%arg0: i32) -> (i32, i32) {
    %c0_i32 = arith.constant 0 : i32
    %c0_i32_0 = arith.constant 0 : i32
    %c0_i32_1 = arith.constant 0 : i32
    return %c0_i32, %c0_i32_0 : i32, i32
  }
  func.func @transform_7(%arg0: i32) -> (i32, i32) {
    %c0_i32 = arith.constant 0 : i32
    %c0_i32_0 = arith.constant 0 : i32
    %c0_i32_1 = arith.constant 0 : i32
    return %c0_i32, %c0_i32_0 : i32, i32
  }
}

</mosaic_0001>

<llo_original>
// kernel: downsample_forward.5
$region0: #{downsample_forward.5}
  #allocation0 [shape = 'u32[]', space=smem, size = 0x4, offset = 0x4, fixed_abs, tag = 'smem constant byte address 0x4 - core index']
  #allocation1 [shape = 'u32[144,128]{1,0:T(1,128)}', space=vmem, size = 0x12000, scoped, tag = 'internal scratch']
  %s0 = inlined_call_operand.vmem [shape: f32[2,16,16,8], index: 0, kind: input, shape index: {}]
  %s1 = inlined_call_operand.vmem [shape: f32[1,8], index: 1, kind: input, shape index: {}]
  %s2 = inlined_call_operand.vmem [shape: f32[1,8], index: 2, kind: input, shape index: {}]
  %s3 = inlined_call_operand.vmem [shape: f32[2,16,16,8], index: 3, kind: output, shape index: {0}]
  %s4 = inlined_call_operand.vmem [shape: f32[2,8,8,8], index: 4, kind: output, shape index: {1}]
  %5 = xla_tuple %s3, %s4
  %s6 = sld [smem:[#allocation0]]
  $region53: #{downsample_forward.5} parent=0
    _
  %s8 = ssub.s32 1, %s6
  %s9 = scalar_select 0, %s8, %s6
  loop: start=0, step=1, limit=4
  $region2: #{downsample_forward.5} parent=0 // loop_pre_header
    _
  $region3: #{downsample_forward.5} parent=0 // loop_header
    %s11 = sphi 0, %s15
    %p12 = scmp.ge.s32.totalorder %s11, 4
    %s21 = sphi 0, %s23
    %s24 = sphi 0, %s21
    %s25 = sphi 0, %s24
    %s41 = sphi 0, %s25
    %s45 = sphi 0, %s45
    %s47 = sphi 0, %s45
    %s48 = sphi 0, %s47
    %s62 = sphi 0, %s48
    %s66 = sphi 0, %s66
    %s68 = sphi 0, %s66
    %s69 = sphi 0, %s68
    %s83 = sphi 0, %s69
    %s89 = sphi 0, %s91
    %s92 = sphi 0, %s89
    %s93 = sphi 0, %s92
    %s109 = sphi 0, %s93
    %s115 = sphi 0, %s117
    %s118 = sphi 0, %s115
    %s119 = sphi 0, %s118
    %s135 = sphi 0, %s119
  $region4: #{downsample_forward.5} parent=0 // loop_header_branch
    %14 = sbr.rel (%p12) target = $region8
  $region5: #{downsample_forward.5} parent=0 // loop_body
    %s16 = ssub.s32 %s11, 1
    %s17 = ssub.s32 %s11, 2
    %s18 = sadd.s32 %s11, 1
    %s19 = ssub.s32 %s11, %s18
    %p20 = scmp.eq.s32.totalorder %s19, 0
    %s22 = sadd.s32 %s21, 1
    %s23 = scalar_select %p20, %s21, %s22
    %p26 = pneg %p20
    %p27 = scmp.eq.s32.totalorder %s11, 1
    %p28 = por %p26, %p27
    %p29 = scmp.ne.s32.totalorder %s21, %s24
    %p30 = scmp.eq.s32.totalorder %s11, 0
    %p31 = por %p29, %p30
    %p32 = scmp.ne.s32.totalorder %s21, %s24
    %p33 = scmp.eq.s32.totalorder %s16, 1
    %p34 = por %p32, %p33
    %p35 = scmp.ne.s32.totalorder %s24, %s25
    %p36 = scmp.eq.s32.totalorder %s16, 0
    %p37 = por %p35, %p36
    %p38 = scmp.ne.s32.totalorder %s24, %s25
    %p39 = scmp.eq.s32.totalorder %s17, 1
    %p40 = por %p38, %p39
    %p42 = scmp.ne.s32.totalorder %s25, %s41
    %p43 = scmp.eq.s32.totalorder %s17, 0
    %p44 = por %p42, %p43
    %s46 = sadd.s32 %s45, 1
    %p49 = scmp.eq.s32.totalorder %s11, 1
    %p50 = scmp.ne.s32.totalorder %s45, %s47
    %p51 = scmp.eq.s32.totalorder %s11, 0
    %p52 = por %p50, %p51
    %p53 = scmp.ne.s32.totalorder %s45, %s47
    %p54 = scmp.eq.s32.totalorder %s16, 1
    %p55 = por %p53, %p54
    %p56 = scmp.ne.s32.totalorder %s47, %s48
    %p57 = scmp.eq.s32.totalorder %s16, 0
    %p58 = por %p56, %p57
    %p59 = scmp.ne.s32.totalorder %s47, %s48
    %p60 = scmp.eq.s32.totalorder %s17, 1
    %p61 = por %p59, %p60
    %p63 = scmp.ne.s32.totalorder %s48, %s62
    %p64 = scmp.eq.s32.totalorder %s17, 0
    %p65 = por %p63, %p64
    %s67 = sadd.s32 %s66, 1
    %p70 = scmp.eq.s32.totalorder %s11, 1
    %p71 = scmp.ne.s32.totalorder %s66, %s68
    %p72 = scmp.eq.s32.totalorder %s11, 0
    %p73 = por %p71, %p72
    %p74 = scmp.ne.s32.totalorder %s66, %s68
    %p75 = scmp.eq.s32.totalorder %s16, 1
    %p76 = por %p74, %p75
    %p77 = scmp.ne.s32.totalorder %s68, %s69
    %p78 = scmp.eq.s32.totalorder %s16, 0
    %p79 = por %p77, %p78
    %p80 = scmp.ne.s32.totalorder %s68, %s69
    %p81 = scmp.eq.s32.totalorder %s17, 1
    %p82 = por %p80, %p81
    %p84 = scmp.ne.s32.totalorder %s69, %s83
    %p85 = scmp.eq.s32.totalorder %s17, 0
    %p86 = por %p84, %p85
    %s87 = ssub.s32 %s11, %s18
    %p88 = scmp.eq.s32.totalorder %s87, 0
    %s90 = sadd.s32 %s89, 1
    %s91 = scalar_select %p88, %s89, %s90
    %p94 = pneg %p88
    %p95 = scmp.eq.s32.totalorder %s11, 1
    %p96 = por %p94, %p95
    %p97 = scmp.ne.s32.totalorder %s89, %s92
    %p98 = scmp.eq.s32.totalorder %s11, 0
    %p99 = por %p97, %p98
    %p100 = scmp.ne.s32.totalorder %s89, %s92
    %p101 = scmp.eq.s32.totalorder %s16, 1
    %p102 = por %p100, %p101
    %p103 = scmp.ne.s32.totalorder %s92, %s93
    %p104 = scmp.eq.s32.totalorder %s16, 0
    %p105 = por %p103, %p104
    %p106 = scmp.ne.s32.totalorder %s92, %s93
    %p107 = scmp.eq.s32.totalorder %s17, 1
    %p108 = por %p106, %p107
    %p110 = scmp.ne.s32.totalorder %s93, %s109
    %p111 = scmp.eq.s32.totalorder %s17, 0
    %p112 = por %p110, %p111
    %s113 = ssub.s32 %s11, %s18
    %p114 = scmp.eq.s32.totalorder %s113, 0
    %s116 = sadd.s32 %s115, 1
    %s117 = scalar_select %p114, %s115, %s116
    %p120 = pneg %p114
    %p121 = scmp.eq.s32.totalorder %s11, 1
    %p122 = por %p120, %p121
    %p123 = scmp.ne.s32.totalorder %s115, %s118
    %p124 = scmp.eq.s32.totalorder %s11, 0
    %p125 = por %p123, %p124
    %p126 = scmp.ne.s32.totalorder %s115, %s118
    %p127 = scmp.eq.s32.totalorder %s16, 1
    %p128 = por %p126, %p127
    %p129 = scmp.ne.s32.totalorder %s118, %s119
    %p130 = scmp.eq.s32.totalorder %s16, 0
    %p131 = por %p129, %p130
    %p132 = scmp.ne.s32.totalorder %s118, %s119
    %p133 = scmp.eq.s32.totalorder %s17, 1
    %p134 = por %p132, %p133
    %p136 = scmp.ne.s32.totalorder %s119, %s135
    %p137 = scmp.eq.s32.totalorder %s17, 0
    %p138 = por %p136, %p137
    %p139 = scmp.le.s32.totalorder 1, %s11
    %p140 = scmp.lt.s32.totalorder %s11, 3
    %p141 = pnand %p139, %p140
    %p142 = pneg %p141
    // Predicated region
    $region9: #{downsample_forward.5} parent=5 // pred_check
      _
    $region10: #{downsample_forward.5} parent=5 // pred_check_branch
      %144 = sbr.rel (%p141) target = $region12
    $region11: #{downsample_forward.5} parent=5 // pred_region
      %s145 = ssub.s32 %s11, 1
      // Predicated region
      $region13: #{downsample_forward.5} parent=11 // pred_check
        %p146 = pneg %p58
      $region14: #{downsample_forward.5} parent=11 // pred_check_branch
        %148 = sbr.rel (%p146) target = $region16
      $region15: #{downsample_forward.5} parent=11 // pred_region
        _
      $region16: #{downsample_forward.5} parent=11 // pred_fallthru
        _
      // Predicated region
      $region17: #{downsample_forward.5} parent=11 // pred_check
        %p149 = pneg %p79
      $region18: #{downsample_forward.5} parent=11 // pred_check_branch
        %151 = sbr.rel (%p149) target = $region20
      $region19: #{downsample_forward.5} parent=11 // pred_region
        _
      $region20: #{downsample_forward.5} parent=11 // pred_fallthru
        _
    $region12: #{downsample_forward.5} parent=5 // pred_fallthru
      _
    %p152 = scmp.lt.s32.totalorder %s11, 2
    // Predicated region
    $region21: #{downsample_forward.5} parent=5 // pred_check
      %p153 = pneg %p152
    $region22: #{downsample_forward.5} parent=5 // pred_check_branch
      %155 = sbr.rel (%p153) target = $region24
    $region23: #{downsample_forward.5} parent=5 // pred_region
      // Predicated region
      $region25: #{downsample_forward.5} parent=23 // pred_check
        %p156 = pneg %p31
      $region26: #{downsample_forward.5} parent=23 // pred_check_branch
        %158 = sbr.rel (%p156) target = $region28
      $region27: #{downsample_forward.5} parent=23 // pred_region
        %p159 = scmp.lt.s32.totalorder %s11, 1
        %s160 = scalar_select %p159, %s11, 1
        %s161 = smul.addr %s160, 32
        %s162 = smul.addr %s161, 8
        %s163 = scalar_lea.vmem %s0, %s162
      $region28: #{downsample_forward.5} parent=23 // pred_fallthru
        _
    $region24: #{downsample_forward.5} parent=5 // pred_fallthru
      _
    %p164 = scmp.le.s32.totalorder 1, %s11
    %p165 = scmp.lt.s32.totalorder %s11, 3
    %p166 = pnand %p164, %p165
    %p167 = pneg %p166
    // Predicated region
    $region29: #{downsample_forward.5} parent=5 // pred_check
      _
    $region30: #{downsample_forward.5} parent=5 // pred_check_branch
      %169 = sbr.rel (%p166) target = $region32
    $region31: #{downsample_forward.5} parent=5 // pred_region
      %s170 = ssub.s32 %s11, 1
      %p171 = scmp.lt.s32.totalorder %s16, 1
      %s172 = scalar_select %p171, %s16, 1
      %s173 = smul.addr %s172, 32
      %s174 = smul.addr %s173, 8
      %s175 = scalar_lea.vmem %s0, %s174
      %p176 = pneg %p37
      %p177 = pneg %p34
      %p178 = pneg %p58
      %p179 = pneg %p55
      %p180 = pneg %p79
      %p181 = pneg %p76
      %p182 = pneg %p105
      %p183 = pneg %p102
      %p184 = scmp.lt.s32.totalorder %s16, 1
      %s185 = scalar_select %p184, %s16, 1
      %s186 = smul.addr %s185, 32
      %s187 = smul.addr %s186, 8
      %s188 = scalar_lea.vmem %s3, %s187
      %p189 = pneg %p131
      %p190 = pneg %p128
      %p191 = scmp.lt.s32.totalorder %s16, 1
      %s192 = scalar_select %p191, %s16, 1
      %s193 = smul.addr %s192, 8
      %s194 = smul.addr %s193, 8
      %s195 = scalar_lea.vmem %s4, %s194
      %p196 = scmp.lt.s32.totalorder %s16, 1
      %s197 = scalar_select %p196, %s16, 1
      %s198 = smul.addr %s197, 32
      %s199 = smul.addr %s198, 8
      %s200 = scalar_lea.vmem %s0, %s199
      %p201 = scmp.lt.s32.totalorder %s16, 1
      %s202 = scalar_select %p201, %s16, 1
      %s203 = smul.addr %s202, 32
      %s204 = smul.addr %s203, 8
      %s205 = scalar_lea.vmem %s3, %s204
      %p206 = scmp.lt.s32.totalorder %s16, 1
      %s207 = scalar_select %p206, %s16, 1
      %s208 = smul.addr %s207, 8
      %s209 = smul.addr %s208, 8
      %s210 = scalar_lea.vmem %s4, %s209
      %v211 = vld [vmem:[%s200] sm:$0xff]
      %v212 = vld [vmem:[%s200 + $0x8] sm:$0xff]
      %v213 = vld [vmem:[%s200 + $0x10] sm:$0xff]
      %v214 = vld [vmem:[%s200 + $0x18] sm:$0xff]
      %v215 = vld [vmem:[%s200 + $0x20] sm:$0xff]
      %v216 = vld [vmem:[%s200 + $0x28] sm:$0xff]
      %v217 = vld [vmem:[%s200 + $0x30] sm:$0xff]
      %v218 = vld [vmem:[%s200 + $0x38] sm:$0xff]
      %v219 = vld [vmem:[%s200 + $0x40] sm:$0xff]
      %v220 = vld [vmem:[%s200 + $0x48] sm:$0xff]
      %v221 = vld [vmem:[%s200 + $0x50] sm:$0xff]
      %v222 = vld [vmem:[%s200 + $0x58] sm:$0xff]
      %v223 = vld [vmem:[%s200 + $0x60] sm:$0xff]
      %v224 = vld [vmem:[%s200 + $0x68] sm:$0xff]
      %v225 = vld [vmem:[%s200 + $0x70] sm:$0xff]
      %v226 = vld [vmem:[%s200 + $0x78] sm:$0xff]
      %v227 = vld [vmem:[%s200 + $0x80] sm:$0xff]
      %v228 = vld [vmem:[%s200 + $0x88] sm:$0xff]
      %v229 = vld [vmem:[%s200 + $0x90] sm:$0xff]
      %v230 = vld [vmem:[%s200 + $0x98] sm:$0xff]
      %v231 = vld [vmem:[%s200 + $0xa0] sm:$0xff]
      %v232 = vld [vmem:[%s200 + $0xa8] sm:$0xff]
      %v233 = vld [vmem:[%s200 + $0xb0] sm:$0xff]
      %v234 = vld [vmem:[%s200 + $0xb8] sm:$0xff]
      %v235 = vld [vmem:[%s200 + $0xc0] sm:$0xff]
      %v236 = vld [vmem:[%s200 + $0xc8] sm:$0xff]
      %v237 = vld [vmem:[%s200 + $0xd0] sm:$0xff]
      %v238 = vld [vmem:[%s200 + $0xd8] sm:$0xff]
      %v239 = vld [vmem:[%s200 + $0xe0] sm:$0xff]
      %v240 = vld [vmem:[%s200 + $0xe8] sm:$0xff]
      %v241 = vld [vmem:[%s200 + $0xf0] sm:$0xff]
      %v242 = vld [vmem:[%s200 + $0xf8] sm:$0xff]
      %v243 = vld [vmem:[%s1] sm:$0x1]
      %v245 = vlaneseq
      %v246 = vshrl.u32 %v245, 7
      %v247 = vsub.s32 0, %v246
      %v248 = vrot.slane %v243, %v247
      %v250 = vmul.f32 %v211, %v248
      %v251 = vmul.f32 %v212, %v248
      %v252 = vmul.f32 %v213, %v248
      %v253 = vmul.f32 %v214, %v248
      %v254 = vmul.f32 %v215, %v248
      %v255 = vmul.f32 %v216, %v248
      %v256 = vmul.f32 %v217, %v248
      %v257 = vmul.f32 %v218, %v248
      %v258 = vmul.f32 %v219, %v248
      %v259 = vmul.f32 %v220, %v248
      %v260 = vmul.f32 %v221, %v248
      %v261 = vmul.f32 %v222, %v248
      %v262 = vmul.f32 %v223, %v248
      %v263 = vmul.f32 %v224, %v248
      %v264 = vmul.f32 %v225, %v248
      %v265 = vmul.f32 %v226, %v248
      %v266 = vmul.f32 %v227, %v248
      %v267 = vmul.f32 %v228, %v248
      %v268 = vmul.f32 %v229, %v248
      %v269 = vmul.f32 %v230, %v248
      %v270 = vmul.f32 %v231, %v248
      %v271 = vmul.f32 %v232, %v248
      %v272 = vmul.f32 %v233, %v248
      %v273 = vmul.f32 %v234, %v248
      %v274 = vmul.f32 %v235, %v248
      %v275 = vmul.f32 %v236, %v248
      %v276 = vmul.f32 %v237, %v248
      %v277 = vmul.f32 %v238, %v248
      %v278 = vmul.f32 %v239, %v248
      %v279 = vmul.f32 %v240, %v248
      %v280 = vmul.f32 %v241, %v248
      %v281 = vmul.f32 %v242, %v248
      %v282 = vld [vmem:[%s2] sm:$0x1]
      %v284 = vlaneseq
      %v285 = vshrl.u32 %v284, 7
      %v286 = vsub.s32 0, %v285
      %v287 = vrot.slane %v282, %v286
      %v289 = vadd.f32 %v250, %v287
      %v290 = vadd.f32 %v251, %v287
      %v291 = vadd.f32 %v252, %v287
      %v292 = vadd.f32 %v253, %v287
      %v293 = vadd.f32 %v254, %v287
      %v294 = vadd.f32 %v255, %v287
      %v295 = vadd.f32 %v256, %v287
      %v296 = vadd.f32 %v257, %v287
      %v297 = vadd.f32 %v258, %v287
      %v298 = vadd.f32 %v259, %v287
      %v299 = vadd.f32 %v260, %v287
      %v300 = vadd.f32 %v261, %v287
      %v301 = vadd.f32 %v262, %v287
      %v302 = vadd.f32 %v263, %v287
      %v303 = vadd.f32 %v264, %v287
      %v304 = vadd.f32 %v265, %v287
      %v305 = vadd.f32 %v266, %v287
      %v306 = vadd.f32 %v267, %v287
      %v307 = vadd.f32 %v268, %v287
      %v308 = vadd.f32 %v269, %v287
      %v309 = vadd.f32 %v270, %v287
      %v310 = vadd.f32 %v271, %v287
      %v311 = vadd.f32 %v272, %v287
      %v312 = vadd.f32 %v273, %v287
      %v313 = vadd.f32 %v274, %v287
      %v314 = vadd.f32 %v275, %v287
      %v315 = vadd.f32 %v276, %v287
      %v316 = vadd.f32 %v277, %v287
      %v317 = vadd.f32 %v278, %v287
      %v318 = vadd.f32 %v279, %v287
      %v319 = vadd.f32 %v280, %v287
      %v320 = vadd.f32 %v281, %v287
      %v321 = vmax.f32 %v289, 0.0
      %v322 = vmax.f32 %v290, 0.0
      %v323 = vmax.f32 %v291, 0.0
      %v324 = vmax.f32 %v292, 0.0
      %v325 = vmax.f32 %v293, 0.0
      %v326 = vmax.f32 %v294, 0.0
      %v327 = vmax.f32 %v295, 0.0
      %v328 = vmax.f32 %v296, 0.0
      %v329 = vmax.f32 %v297, 0.0
      %v330 = vmax.f32 %v298, 0.0
      %v331 = vmax.f32 %v299, 0.0
      %v332 = vmax.f32 %v300, 0.0
      %v333 = vmax.f32 %v301, 0.0
      %v334 = vmax.f32 %v302, 0.0
      %v335 = vmax.f32 %v303, 0.0
      %v336 = vmax.f32 %v304, 0.0
      %v337 = vmax.f32 %v305, 0.0
      %v338 = vmax.f32 %v306, 0.0
      %v339 = vmax.f32 %v307, 0.0
      %v340 = vmax.f32 %v308, 0.0
      %v341 = vmax.f32 %v309, 0.0
      %v342 = vmax.f32 %v310, 0.0
      %v343 = vmax.f32 %v311, 0.0
      %v344 = vmax.f32 %v312, 0.0
      %v345 = vmax.f32 %v313, 0.0
      %v346 = vmax.f32 %v314, 0.0
      %v347 = vmax.f32 %v315, 0.0
      %v348 = vmax.f32 %v316, 0.0
      %v349 = vmax.f32 %v317, 0.0
      %v350 = vmax.f32 %v318, 0.0
      %v351 = vmax.f32 %v319, 0.0
      %v352 = vmax.f32 %v320, 0.0
      %vm353 = vcmask 64512
      %354 = vst.msk [vmem:[%s205] sm:$0xff] %vm353, %v321
      %355 = vst.msk [vmem:[%s205 + $0x8] sm:$0xff] %vm353, %v322
      %356 = vst.msk [vmem:[%s205 + $0x10] sm:$0xff] %vm353, %v323
      %357 = vst.msk [vmem:[%s205 + $0x18] sm:$0xff] %vm353, %v324
      %358 = vst.msk [vmem:[%s205 + $0x20] sm:$0xff] %vm353, %v325
      %359 = vst.msk [vmem:[%s205 + $0x28] sm:$0xff] %vm353, %v326
      %360 = vst.msk [vmem:[%s205 + $0x30] sm:$0xff] %vm353, %v327
      %361 = vst.msk [vmem:[%s205 + $0x38] sm:$0xff] %vm353, %v328
      %362 = vst.msk [vmem:[%s205 + $0x40] sm:$0xff] %vm353, %v329
      %363 = vst.msk [vmem:[%s205 + $0x48] sm:$0xff] %vm353, %v330
      %364 = vst.msk [vmem:[%s205 + $0x50] sm:$0xff] %vm353, %v331
      %365 = vst.msk [vmem:[%s205 + $0x58] sm:$0xff] %vm353, %v332
      %366 = vst.msk [vmem:[%s205 + $0x60] sm:$0xff] %vm353, %v333
      %367 = vst.msk [vmem:[%s205 + $0x68] sm:$0xff] %vm353, %v334
      %368 = vst.msk [vmem:[%s205 + $0x70] sm:$0xff] %vm353, %v335
      %369 = vst.msk [vmem:[%s205 + $0x78] sm:$0xff] %vm353, %v336
      %370 = vst.msk [vmem:[%s205 + $0x80] sm:$0xff] %vm353, %v337
      %371 = vst.msk [vmem:[%s205 + $0x88] sm:$0xff] %vm353, %v338
      %372 = vst.msk [vmem:[%s205 + $0x90] sm:$0xff] %vm353, %v339
      %373 = vst.msk [vmem:[%s205 + $0x98] sm:$0xff] %vm353, %v340
      %374 = vst.msk [vmem:[%s205 + $0xa0] sm:$0xff] %vm353, %v341
      %375 = vst.msk [vmem:[%s205 + $0xa8] sm:$0xff] %vm353, %v342
      %376 = vst.msk [vmem:[%s205 + $0xb0] sm:$0xff] %vm353, %v343
      %377 = vst.msk [vmem:[%s205 + $0xb8] sm:$0xff] %vm353, %v344
      %378 = vst.msk [vmem:[%s205 + $0xc0] sm:$0xff] %vm353, %v345
      %379 = vst.msk [vmem:[%s205 + $0xc8] sm:$0xff] %vm353, %v346
      %380 = vst.msk [vmem:[%s205 + $0xd0] sm:$0xff] %vm353, %v347
      %381 = vst.msk [vmem:[%s205 + $0xd8] sm:$0xff] %vm353, %v348
      %382 = vst.msk [vmem:[%s205 + $0xe0] sm:$0xff] %vm353, %v349
      %383 = vst.msk [vmem:[%s205 + $0xe8] sm:$0xff] %vm353, %v350
      %384 = vst.msk [vmem:[%s205 + $0xf0] sm:$0xff] %vm353, %v351
      %385 = vst.msk [vmem:[%s205 + $0xf8] sm:$0xff] %vm353, %v352
      %v386 = vld [vmem:[%s205] ss:$2 sm:$0xff]
      %s387 = scalar_lea.vmem %s205, 16
      %v388 = vld [vmem:[%s387] ss:$2 sm:$0xff]
      %s389 = scalar_lea.vmem %s205, 32
      %v390 = vld [vmem:[%s389] ss:$2 sm:$0xff]
      %s391 = scalar_lea.vmem %s205, 48
      %v392 = vld [vmem:[%s391] ss:$2 sm:$0xff]
      %s393 = scalar_lea.vmem %s205, 64
      %v394 = vld [vmem:[%s393] ss:$2 sm:$0xff]
      %s395 = scalar_lea.vmem %s205, 80
      %v396 = vld [vmem:[%s395] ss:$2 sm:$0xff]
      %s397 = scalar_lea.vmem %s205, 96
      %v398 = vld [vmem:[%s397] ss:$2 sm:$0xff]
      %s399 = scalar_lea.vmem %s205, 112
      %v400 = vld [vmem:[%s399] ss:$2 sm:$0xff]
      %s401 = scalar_lea.vmem %s205, 128
      %v402 = vld [vmem:[%s401] ss:$2 sm:$0xff]
      %s403 = scalar_lea.vmem %s205, 144
      %v404 = vld [vmem:[%s403] ss:$2 sm:$0xff]
      %s405 = scalar_lea.vmem %s205, 160
      %v406 = vld [vmem:[%s405] ss:$2 sm:$0xff]
      %s407 = scalar_lea.vmem %s205, 176
      %v408 = vld [vmem:[%s407] ss:$2 sm:$0xff]
      %s409 = scalar_lea.vmem %s205, 192
      %v410 = vld [vmem:[%s409] ss:$2 sm:$0xff]
      %s411 = scalar_lea.vmem %s205, 208
      %v412 = vld [vmem:[%s411] ss:$2 sm:$0xff]
      %s413 = scalar_lea.vmem %s205, 224
      %v414 = vld [vmem:[%s413] ss:$2 sm:$0xff]
      %s415 = scalar_lea.vmem %s205, 240
      %v416 = vld [vmem:[%s415] ss:$2 sm:$0xff]
      %s417 = scalar_lea.vmem %s205, 1
      %v418 = vld [vmem:[%s417] ss:$2 sm:$0xff]
      %s419 = scalar_lea.vmem %s205, 17
      %v420 = vld [vmem:[%s419] ss:$2 sm:$0xff]
      %s421 = scalar_lea.vmem %s205, 33
      %v422 = vld [vmem:[%s421] ss:$2 sm:$0xff]
      %s423 = scalar_lea.vmem %s205, 49
      %v424 = vld [vmem:[%s423] ss:$2 sm:$0xff]
      %s425 = scalar_lea.vmem %s205, 65
      %v426 = vld [vmem:[%s425] ss:$2 sm:$0xff]
      %s427 = scalar_lea.vmem %s205, 81
      %v428 = vld [vmem:[%s427] ss:$2 sm:$0xff]
      %s429 = scalar_lea.vmem %s205, 97
      %v430 = vld [vmem:[%s429] ss:$2 sm:$0xff]
      %s431 = scalar_lea.vmem %s205, 113
      %v432 = vld [vmem:[%s431] ss:$2 sm:$0xff]
      %s433 = scalar_lea.vmem %s205, 129
      %v434 = vld [vmem:[%s433] ss:$2 sm:$0xff]
      %s435 = scalar_lea.vmem %s205, 145
      %v436 = vld [vmem:[%s435] ss:$2 sm:$0xff]
      %s437 = scalar_lea.vmem %s205, 161
      %v438 = vld [vmem:[%s437] ss:$2 sm:$0xff]
      %s439 = scalar_lea.vmem %s205, 177
      %v440 = vld [vmem:[%s439] ss:$2 sm:$0xff]
      %s441 = scalar_lea.vmem %s205, 193
      %v442 = vld [vmem:[%s441] ss:$2 sm:$0xff]
      %s443 = scalar_lea.vmem %s205, 209
      %v444 = vld [vmem:[%s443] ss:$2 sm:$0xff]
      %s445 = scalar_lea.vmem %s205, 225
      %v446 = vld [vmem:[%s445] ss:$2 sm:$0xff]
      %s447 = scalar_lea.vmem %s205, 241
      %v448 = vld [vmem:[%s447] ss:$2 sm:$0xff]
      %v449 = vmax.f32 %v386, %v418
      %v450 = vmax.f32 %v388, %v420
      %v451 = vmax.f32 %v390, %v422
      %v452 = vmax.f32 %v392, %v424
      %v453 = vmax.f32 %v394, %v426
      %v454 = vmax.f32 %v396, %v428
      %v455 = vmax.f32 %v398, %v430
      %v456 = vmax.f32 %v400, %v432
      %v457 = vmax.f32 %v402, %v434
      %v458 = vmax.f32 %v404, %v436
      %v459 = vmax.f32 %v406, %v438
      %v460 = vmax.f32 %v408, %v440
      %v461 = vmax.f32 %v410, %v442
      %v462 = vmax.f32 %v412, %v444
      %v463 = vmax.f32 %v414, %v446
      %v464 = vmax.f32 %v416, %v448
      %v465 = vsel %vm353, %v449, -inf
      %v466 = vsel %vm353, %v450, -inf
      %v467 = vmax.f32 %v465, %v466
      %v468 = vsel %vm353, %v451, -inf
      %v469 = vsel %vm353, %v452, -inf
      %v470 = vmax.f32 %v468, %v469
      %v471 = vsel %vm353, %v453, -inf
      %v472 = vsel %vm353, %v454, -inf
      %v473 = vmax.f32 %v471, %v472
      %v474 = vsel %vm353, %v455, -inf
      %v475 = vsel %vm353, %v456, -inf
      %v476 = vmax.f32 %v474, %v475
      %v477 = vsel %vm353, %v457, -inf
      %v478 = vsel %vm353, %v458, -inf
      %v479 = vmax.f32 %v477, %v478
      %v480 = vsel %vm353, %v459, -inf
      %v481 = vsel %vm353, %v460, -inf
      %v482 = vmax.f32 %v480, %v481
      %v483 = vsel %vm353, %v461, -inf
      %v484 = vsel %vm353, %v462, -inf
      %v485 = vmax.f32 %v483, %v484
      %v486 = vsel %vm353, %v463, -inf
      %v487 = vsel %vm353, %v464, -inf
      %v488 = vmax.f32 %v486, %v487
      %489 = vst.msk [vmem:[%s210] sm:$0xff] %vm353, %v467
      %490 = vst.msk [vmem:[%s210 + $0x8] sm:$0xff] %vm353, %v470
      %491 = vst.msk [vmem:[%s210 + $0x10] sm:$0xff] %vm353, %v473
      %492 = vst.msk [vmem:[%s210 + $0x18] sm:$0xff] %vm353, %v476
      %493 = vst.msk [vmem:[%s210 + $0x20] sm:$0xff] %vm353, %v479
      %494 = vst.msk [vmem:[%s210 + $0x28] sm:$0xff] %vm353, %v482
      %495 = vst.msk [vmem:[%s210 + $0x30] sm:$0xff] %vm353, %v485
      %496 = vst.msk [vmem:[%s210 + $0x38] sm:$0xff] %vm353, %v488
      %p497 = scmp.lt.s32.totalorder %s16, 1
      %s498 = scalar_select %p497, %s16, 1
      %s499 = smul.addr %s498, 32
      %s500 = smul.addr %s499, 8
      %s501 = scalar_lea.vmem %s3, %s500
      %p502 = scmp.lt.s32.totalorder %s16, 1
      %s503 = scalar_select %p502, %s16, 1
      %s504 = smul.addr %s503, 8
      %s505 = smul.addr %s504, 8
      %s506 = scalar_lea.vmem %s4, %s505
      // Predicated region
      $region33: #{downsample_forward.5} parent=31 // pred_check
        %p507 = pneg %p102
      $region34: #{downsample_forward.5} parent=31 // pred_check_branch
        %509 = sbr.rel (%p507) target = $region36
      $region35: #{downsample_forward.5} parent=31 // pred_region
        _
      $region36: #{downsample_forward.5} parent=31 // pred_fallthru
        _
      // Predicated region
      $region37: #{downsample_forward.5} parent=31 // pred_check
        %p510 = pneg %p128
      $region38: #{downsample_forward.5} parent=31 // pred_check_branch
        %512 = sbr.rel (%p510) target = $region40
      $region39: #{downsample_forward.5} parent=31 // pred_region
        _
      $region40: #{downsample_forward.5} parent=31 // pred_fallthru
        _
    $region32: #{downsample_forward.5} parent=5 // pred_fallthru
      _
    %p513 = scmp.le.s32.totalorder 2, %s11
    // Predicated region
    $region41: #{downsample_forward.5} parent=5 // pred_check
      %p514 = pneg %p513
    $region42: #{downsample_forward.5} parent=5 // pred_check_branch
      %516 = sbr.rel (%p514) target = $region44
    $region43: #{downsample_forward.5} parent=5 // pred_region
      %s517 = ssub.s32 %s11, 2
      // Predicated region
      $region45: #{downsample_forward.5} parent=43 // pred_check
        %p518 = pneg %p108
      $region46: #{downsample_forward.5} parent=43 // pred_check_branch
        %520 = sbr.rel (%p518) target = $region48
      $region47: #{downsample_forward.5} parent=43 // pred_region
        %p521 = scmp.lt.s32.totalorder %s17, 1
        %s522 = scalar_select %p521, %s17, 1
        %s523 = smul.addr %s522, 32
        %s524 = smul.addr %s523, 8
        %s525 = scalar_lea.vmem %s3, %s524
      $region48: #{downsample_forward.5} parent=43 // pred_fallthru
        _
      // Predicated region
      $region49: #{downsample_forward.5} parent=43 // pred_check
        %p526 = pneg %p134
      $region50: #{downsample_forward.5} parent=43 // pred_check_branch
        %528 = sbr.rel (%p526) target = $region52
      $region51: #{downsample_forward.5} parent=43 // pred_region
        %p529 = scmp.lt.s32.totalorder %s17, 1
        %s530 = scalar_select %p529, %s17, 1
        %s531 = smul.addr %s530, 8
        %s532 = smul.addr %s531, 8
        %s533 = scalar_lea.vmem %s4, %s532
      $region52: #{downsample_forward.5} parent=43 // pred_fallthru
        _
    $region44: #{downsample_forward.5} parent=5 // pred_fallthru
      _
  $region6: #{downsample_forward.5} parent=0 // loop_footer
    %s15 = sadd.s32 1, %s11
  $region7: #{downsample_forward.5} parent=0 // loop_footer_branch
    %10 = sbr.rel target = $region3
  $region8: #{downsample_forward.5} parent=0 // loop_exit
    _

// kernel: downsample_forward.4
$region0: #{downsample_forward.4}
  #allocation0 [shape = 'u32[]', space=smem, size = 0x4, offset = 0x4, fixed_abs, tag = 'smem constant byte address 0x4 - core index']
  #allocation1 [shape = 'u32[144,128]{1,0:T(1,128)}', space=vmem, size = 0x12000, scoped, tag = 'internal scratch']
  #allocation2 [shape = 'f32[1,18,16,8]{3,2,1,0:T(8,128)}', space=vmem, size = 0x24000, scoped, tag = 'scratch operand']
  %s0 = inlined_call_operand.vmem [shape: f32[2,16,16,8], index: 0, kind: input, shape index: {}]
  %s1 = inlined_call_operand.vmem [shape: f32[1,8], index: 1, kind: input, shape index: {}]
  %s2 = inlined_call_operand.vmem [shape: f32[1,8], index: 2, kind: input, shape index: {}]
  %s3 = inlined_call_operand.vmem [shape: f32[72,8], index: 3, kind: input, shape index: {}]
  %s4 = inlined_call_operand.vmem [shape: f32[1,8], index: 4, kind: input, shape index: {}]
  %s5 = inlined_call_operand.vmem [shape: f32[2,16,16,8], index: 5, kind: output, shape index: {0}]
  %s6 = inlined_call_operand.vmem [shape: f32[1,8], index: 6, kind: output, shape index: {1}]
  %s7 = inlined_call_operand.vmem [shape: f32[1,8], index: 7, kind: output, shape index: {2}]
  %8 = xla_tuple %s5, %s6, %s7
  %s9 = sld [smem:[#allocation0]]
  $region73: #{downsample_forward.4} parent=0
    _
  %s11 = ssub.s32 1, %s9
  %s12 = scalar_select 0, %s11, %s9
  loop: start=0, step=1, limit=4
  $region2: #{downsample_forward.4} parent=0 // loop_pre_header
    _
  $region3: #{downsample_forward.4} parent=0 // loop_header
    %s14 = sphi 0, %s18
    %p15 = scmp.ge.s32.totalorder %s14, 4
    %s24 = sphi 0, %s26
    %s27 = sphi 0, %s24
    %s28 = sphi 0, %s27
    %s44 = sphi 0, %s28
    %s48 = sphi 0, %s48
    %s50 = sphi 0, %s48
    %s51 = sphi 0, %s50
    %s65 = sphi 0, %s51
    %s69 = sphi 0, %s69
    %s71 = sphi 0, %s69
    %s72 = sphi 0, %s71
    %s86 = sphi 0, %s72
    %s90 = sphi 0, %s90
    %s92 = sphi 0, %s90
    %s93 = sphi 0, %s92
    %s107 = sphi 0, %s93
    %s111 = sphi 0, %s111
    %s113 = sphi 0, %s111
    %s114 = sphi 0, %s113
    %s128 = sphi 0, %s114
    %s134 = sphi 0, %s136
    %s137 = sphi 0, %s134
    %s138 = sphi 0, %s137
    %s154 = sphi 0, %s138
    %s158 = sphi 0, %s158
    %s160 = sphi 0, %s158
    %s161 = sphi 0, %s160
    %s175 = sphi 0, %s161
    %s179 = sphi 0, %s179
    %s181 = sphi 0, %s179
    %s182 = sphi 0, %s181
    %s196 = sphi 0, %s182
  $region4: #{downsample_forward.4} parent=0 // loop_header_branch
    %17 = sbr.rel (%p15) target = $region8
  $region5: #{downsample_forward.4} parent=0 // loop_body
    %s19 = ssub.s32 %s14, 1
    %s20 = ssub.s32 %s14, 2
    %s21 = sadd.s32 %s14, 1
    %s22 = ssub.s32 %s14, %s21
    %p23 = scmp.eq.s32.totalorder %s22, 0
    %s25 = sadd.s32 %s24, 1
    %s26 = scalar_select %p23, %s24, %s25
    %p29 = pneg %p23
    %p30 = scmp.eq.s32.totalorder %s14, 1
    %p31 = por %p29, %p30
    %p32 = scmp.ne.s32.totalorder %s24, %s27
    %p33 = scmp.eq.s32.totalorder %s14, 0
    %p34 = por %p32, %p33
    %p35 = scmp.ne.s32.totalorder %s24, %s27
    %p36 = scmp.eq.s32.totalorder %s19, 1
    %p37 = por %p35, %p36
    %p38 = scmp.ne.s32.totalorder %s27, %s28
    %p39 = scmp.eq.s32.totalorder %s19, 0
    %p40 = por %p38, %p39
    %p41 = scmp.ne.s32.totalorder %s27, %s28
    %p42 = scmp.eq.s32.totalorder %s20, 1
    %p43 = por %p41, %p42
    %p45 = scmp.ne.s32.totalorder %s28, %s44
    %p46 = scmp.eq.s32.totalorder %s20, 0
    %p47 = por %p45, %p46
    %s49 = sadd.s32 %s48, 1
    %p52 = scmp.eq.s32.totalorder %s14, 1
    %p53 = scmp.ne.s32.totalorder %s48, %s50
    %p54 = scmp.eq.s32.totalorder %s14, 0
    %p55 = por %p53, %p54
    %p56 = scmp.ne.s32.totalorder %s48, %s50
    %p57 = scmp.eq.s32.totalorder %s19, 1
    %p58 = por %p56, %p57
    %p59 = scmp.ne.s32.totalorder %s50, %s51
    %p60 = scmp.eq.s32.totalorder %s19, 0
    %p61 = por %p59, %p60
    %p62 = scmp.ne.s32.totalorder %s50, %s51
    %p63 = scmp.eq.s32.totalorder %s20, 1
    %p64 = por %p62, %p63
    %p66 = scmp.ne.s32.totalorder %s51, %s65
    %p67 = scmp.eq.s32.totalorder %s20, 0
    %p68 = por %p66, %p67
    %s70 = sadd.s32 %s69, 1
    %p73 = scmp.eq.s32.totalorder %s14, 1
    %p74 = scmp.ne.s32.totalorder %s69, %s71
    %p75 = scmp.eq.s32.totalorder %s14, 0
    %p76 = por %p74, %p75
    %p77 = scmp.ne.s32.totalorder %s69, %s71
    %p78 = scmp.eq.s32.totalorder %s19, 1
    %p79 = por %p77, %p78
    %p80 = scmp.ne.s32.totalorder %s71, %s72
    %p81 = scmp.eq.s32.totalorder %s19, 0
    %p82 = por %p80, %p81
    %p83 = scmp.ne.s32.totalorder %s71, %s72
    %p84 = scmp.eq.s32.totalorder %s20, 1
    %p85 = por %p83, %p84
    %p87 = scmp.ne.s32.totalorder %s72, %s86
    %p88 = scmp.eq.s32.totalorder %s20, 0
    %p89 = por %p87, %p88
    %s91 = sadd.s32 %s90, 1
    %p94 = scmp.eq.s32.totalorder %s14, 1
    %p95 = scmp.ne.s32.totalorder %s90, %s92
    %p96 = scmp.eq.s32.totalorder %s14, 0
    %p97 = por %p95, %p96
    %p98 = scmp.ne.s32.totalorder %s90, %s92
    %p99 = scmp.eq.s32.totalorder %s19, 1
    %p100 = por %p98, %p99
    %p101 = scmp.ne.s32.totalorder %s92, %s93
    %p102 = scmp.eq.s32.totalorder %s19, 0
    %p103 = por %p101, %p102
    %p104 = scmp.ne.s32.totalorder %s92, %s93
    %p105 = scmp.eq.s32.totalorder %s20, 1
    %p106 = por %p104, %p105
    %p108 = scmp.ne.s32.totalorder %s93, %s107
    %p109 = scmp.eq.s32.totalorder %s20, 0
    %p110 = por %p108, %p109
    %s112 = sadd.s32 %s111, 1
    %p115 = scmp.eq.s32.totalorder %s14, 1
    %p116 = scmp.ne.s32.totalorder %s111, %s113
    %p117 = scmp.eq.s32.totalorder %s14, 0
    %p118 = por %p116, %p117
    %p119 = scmp.ne.s32.totalorder %s111, %s113
    %p120 = scmp.eq.s32.totalorder %s19, 1
    %p121 = por %p119, %p120
    %p122 = scmp.ne.s32.totalorder %s113, %s114
    %p123 = scmp.eq.s32.totalorder %s19, 0
    %p124 = por %p122, %p123
    %p125 = scmp.ne.s32.totalorder %s113, %s114
    %p126 = scmp.eq.s32.totalorder %s20, 1
    %p127 = por %p125, %p126
    %p129 = scmp.ne.s32.totalorder %s114, %s128
    %p130 = scmp.eq.s32.totalorder %s20, 0
    %p131 = por %p129, %p130
    %s132 = ssub.s32 %s14, %s21
    %p133 = scmp.eq.s32.totalorder %s132, 0
    %s135 = sadd.s32 %s134, 1
    %s136 = scalar_select %p133, %s134, %s135
    %p139 = pneg %p133
    %p140 = scmp.eq.s32.totalorder %s14, 1
    %p141 = por %p139, %p140
    %p142 = scmp.ne.s32.totalorder %s134, %s137
    %p143 = scmp.eq.s32.totalorder %s14, 0
    %p144 = por %p142, %p143
    %p145 = scmp.ne.s32.totalorder %s134, %s137
    %p146 = scmp.eq.s32.totalorder %s19, 1
    %p147 = por %p145, %p146
    %p148 = scmp.ne.s32.totalorder %s137, %s138
    %p149 = scmp.eq.s32.totalorder %s19, 0
    %p150 = por %p148, %p149
    %p151 = scmp.ne.s32.totalorder %s137, %s138
    %p152 = scmp.eq.s32.totalorder %s20, 1
    %p153 = por %p151, %p152
    %p155 = scmp.ne.s32.totalorder %s138, %s154
    %p156 = scmp.eq.s32.totalorder %s20, 0
    %p157 = por %p155, %p156
    %s159 = sadd.s32 %s158, 1
    %p162 = scmp.eq.s32.totalorder %s14, 1
    %p163 = scmp.ne.s32.totalorder %s158, %s160
    %p164 = scmp.eq.s32.totalorder %s14, 0
    %p165 = por %p163, %p164
    %p166 = scmp.ne.s32.totalorder %s158, %s160
    %p167 = scmp.eq.s32.totalorder %s19, 1
    %p168 = por %p166, %p167
    %p169 = scmp.ne.s32.totalorder %s160, %s161
    %p170 = scmp.eq.s32.totalorder %s19, 0
    %p171 = por %p169, %p170
    %p172 = scmp.ne.s32.totalorder %s160, %s161
    %p173 = scmp.eq.s32.totalorder %s20, 1
    %p174 = por %p172, %p173
    %p176 = scmp.ne.s32.totalorder %s161, %s175
    %p177 = scmp.eq.s32.totalorder %s20, 0
    %p178 = por %p176, %p177
    %s180 = sadd.s32 %s179, 1
    %p183 = scmp.eq.s32.totalorder %s14, 1
    %p184 = scmp.ne.s32.totalorder %s179, %s181
    %p185 = scmp.eq.s32.totalorder %s14, 0
    %p186 = por %p184, %p185
    %p187 = scmp.ne.s32.totalorder %s179, %s181
    %p188 = scmp.eq.s32.totalorder %s19, 1
    %p189 = por %p187, %p188
    %p190 = scmp.ne.s32.totalorder %s181, %s182
    %p191 = scmp.eq.s32.totalorder %s19, 0
    %p192 = por %p190, %p191
    %p193 = scmp.ne.s32.totalorder %s181, %s182
    %p194 = scmp.eq.s32.totalorder %s20, 1
    %p195 = por %p193, %p194
    %p197 = scmp.ne.s32.totalorder %s182, %s196
    %p198 = scmp.eq.s32.totalorder %s20, 0
    %p199 = por %p197, %p198
    %p200 = scmp.le.s32.totalorder 1, %s14
    %p201 = scmp.lt.s32.totalorder %s14, 3
    %p202 = pnand %p200, %p201
    %p203 = pneg %p202
    // Predicated region
    $region9: #{downsample_forward.4} parent=5 // pred_check
      _
    $region10: #{downsample_forward.4} parent=5 // pred_check_branch
      %205 = sbr.rel (%p202) target = $region12
    $region11: #{downsample_forward.4} parent=5 // pred_region
      %s206 = ssub.s32 %s14, 1
      // Predicated region
      $region13: #{downsample_forward.4} parent=11 // pred_check
        %p207 = pneg %p61
      $region14: #{downsample_forward.4} parent=11 // pred_check_branch
        %209 = sbr.rel (%p207) target = $region16
      $region15: #{downsample_forward.4} parent=11 // pred_region
        _
      $region16: #{downsample_forward.4} parent=11 // pred_fallthru
        _
      // Predicated region
      $region17: #{downsample_forward.4} parent=11 // pred_check
        %p210 = pneg %p82
      $region18: #{downsample_forward.4} parent=11 // pred_check_branch
        %212 = sbr.rel (%p210) target = $region20
      $region19: #{downsample_forward.4} parent=11 // pred_region
        _
      $region20: #{downsample_forward.4} parent=11 // pred_fallthru
        _
      // Predicated region
      $region21: #{downsample_forward.4} parent=11 // pred_check
        %p213 = pneg %p103
      $region22: #{downsample_forward.4} parent=11 // pred_check_branch
        %215 = sbr.rel (%p213) target = $region24
      $region23: #{downsample_forward.4} parent=11 // pred_region
        _
      $region24: #{downsample_forward.4} parent=11 // pred_fallthru
        _
      // Predicated region
      $region25: #{downsample_forward.4} parent=11 // pred_check
        %p216 = pneg %p124
      $region26: #{downsample_forward.4} parent=11 // pred_check_branch
        %218 = sbr.rel (%p216) target = $region28
      $region27: #{downsample_forward.4} parent=11 // pred_region
        _
      $region28: #{downsample_forward.4} parent=11 // pred_fallthru
        _
    $region12: #{downsample_forward.4} parent=5 // pred_fallthru
      _
    %p219 = scmp.lt.s32.totalorder %s14, 2
    // Predicated region
    $region29: #{downsample_forward.4} parent=5 // pred_check
      %p220 = pneg %p219
    $region30: #{downsample_forward.4} parent=5 // pred_check_branch
      %222 = sbr.rel (%p220) target = $region32
    $region31: #{downsample_forward.4} parent=5 // pred_region
      // Predicated region
      $region33: #{downsample_forward.4} parent=31 // pred_check
        %p223 = pneg %p34
      $region34: #{downsample_forward.4} parent=31 // pred_check_branch
        %225 = sbr.rel (%p223) target = $region36
      $region35: #{downsample_forward.4} parent=31 // pred_region
        %p226 = scmp.lt.s32.totalorder %s14, 1
        %s227 = scalar_select %p226, %s14, 1
        %s228 = smul.addr %s227, 32
        %s229 = smul.addr %s228, 8
        %s230 = scalar_lea.vmem %s0, %s229
      $region36: #{downsample_forward.4} parent=31 // pred_fallthru
        _
    $region32: #{downsample_forward.4} parent=5 // pred_fallthru
      _
    %p231 = scmp.le.s32.totalorder 1, %s14
    %p232 = scmp.lt.s32.totalorder %s14, 3
    %p233 = pnand %p231, %p232
    %p234 = pneg %p233
    // Predicated region
    $region37: #{downsample_forward.4} parent=5 // pred_check
      _
    $region38: #{downsample_forward.4} parent=5 // pred_check_branch
      %236 = sbr.rel (%p233) target = $region40
    $region39: #{downsample_forward.4} parent=5 // pred_region
      %s237 = ssub.s32 %s14, 1
      %p238 = scmp.lt.s32.totalorder %s19, 1
      %s239 = scalar_select %p238, %s19, 1
      %s240 = smul.addr %s239, 32
      %s241 = smul.addr %s240, 8
      %s242 = scalar_lea.vmem %s0, %s241
      %p243 = pneg %p40
      %p244 = pneg %p37
      %p245 = pneg %p61
      %p246 = pneg %p58
      %p247 = pneg %p82
      %p248 = pneg %p79
      %p249 = pneg %p103
      %p250 = pneg %p100
      %p251 = pneg %p124
      %p252 = pneg %p121
      %p253 = pneg %p150
      %p254 = pneg %p147
      %p255 = scmp.lt.s32.totalorder %s19, 1
      %s256 = scalar_select %p255, %s19, 1
      %s257 = smul.addr %s256, 32
      %s258 = smul.addr %s257, 8
      %s259 = scalar_lea.vmem %s5, %s258
      %p260 = pneg %p171
      %p261 = pneg %p168
      %p262 = pneg %p192
      %p263 = pneg %p189
      %p264 = scmp.lt.s32.totalorder %s19, 1
      %s265 = scalar_select %p264, %s19, 1
      %s266 = smul.addr %s265, 32
      %s267 = smul.addr %s266, 8
      %s268 = scalar_lea.vmem %s0, %s267
      %p269 = scmp.lt.s32.totalorder %s19, 1
      %s270 = scalar_select %p269, %s19, 1
      %s271 = smul.addr %s270, 32
      %s272 = smul.addr %s271, 8
      %s273 = scalar_lea.vmem %s5, %s272
      %v274 = vld [vmem:[%s268] sm:$0xff]
      %v275 = vld [vmem:[%s268 + $0x8] sm:$0xff]
      %v276 = vld [vmem:[%s268 + $0x10] sm:$0xff]
      %v277 = vld [vmem:[%s268 + $0x18] sm:$0xff]
      %v278 = vld [vmem:[%s268 + $0x20] sm:$0xff]
      %v279 = vld [vmem:[%s268 + $0x28] sm:$0xff]
      %v280 = vld [vmem:[%s268 + $0x30] sm:$0xff]
      %v281 = vld [vmem:[%s268 + $0x38] sm:$0xff]
      %v282 = vld [vmem:[%s268 + $0x40] sm:$0xff]
      %v283 = vld [vmem:[%s268 + $0x48] sm:$0xff]
      %v284 = vld [vmem:[%s268 + $0x50] sm:$0xff]
      %v285 = vld [vmem:[%s268 + $0x58] sm:$0xff]
      %v286 = vld [vmem:[%s268 + $0x60] sm:$0xff]
      %v287 = vld [vmem:[%s268 + $0x68] sm:$0xff]
      %v288 = vld [vmem:[%s268 + $0x70] sm:$0xff]
      %v289 = vld [vmem:[%s268 + $0x78] sm:$0xff]
      %v290 = vld [vmem:[%s268 + $0x80] sm:$0xff]
      %v291 = vld [vmem:[%s268 + $0x88] sm:$0xff]
      %v292 = vld [vmem:[%s268 + $0x90] sm:$0xff]
      %v293 = vld [vmem:[%s268 + $0x98] sm:$0xff]
      %v294 = vld [vmem:[%s268 + $0xa0] sm:$0xff]
      %v295 = vld [vmem:[%s268 + $0xa8] sm:$0xff]
      %v296 = vld [vmem:[%s268 + $0xb0] sm:$0xff]
      %v297 = vld [vmem:[%s268 + $0xb8] sm:$0xff]
      %v298 = vld [vmem:[%s268 + $0xc0] sm:$0xff]
      %v299 = vld [vmem:[%s268 + $0xc8] sm:$0xff]
      %v300 = vld [vmem:[%s268 + $0xd0] sm:$0xff]
      %v301 = vld [vmem:[%s268 + $0xd8] sm:$0xff]
      %v302 = vld [vmem:[%s268 + $0xe0] sm:$0xff]
      %v303 = vld [vmem:[%s268 + $0xe8] sm:$0xff]
      %v304 = vld [vmem:[%s268 + $0xf0] sm:$0xff]
      %v305 = vld [vmem:[%s268 + $0xf8] sm:$0xff]
      %v306 = vld [vmem:[%s1] sm:$0x1]
      %v308 = vlaneseq
      %v309 = vshrl.u32 %v308, 7
      %v310 = vsub.s32 0, %v309
      %v311 = vrot.slane %v306, %v310
      %v313 = vmul.f32 %v274, %v311
      %v314 = vmul.f32 %v275, %v311
      %v315 = vmul.f32 %v276, %v311
      %v316 = vmul.f32 %v277, %v311
      %v317 = vmul.f32 %v278, %v311
      %v318 = vmul.f32 %v279, %v311
      %v319 = vmul.f32 %v280, %v311
      %v320 = vmul.f32 %v281, %v311
      %v321 = vmul.f32 %v282, %v311
      %v322 = vmul.f32 %v283, %v311
      %v323 = vmul.f32 %v284, %v311
      %v324 = vmul.f32 %v285, %v311
      %v325 = vmul.f32 %v286, %v311
      %v326 = vmul.f32 %v287, %v311
      %v327 = vmul.f32 %v288, %v311
      %v328 = vmul.f32 %v289, %v311
      %v329 = vmul.f32 %v290, %v311
      %v330 = vmul.f32 %v291, %v311
      %v331 = vmul.f32 %v292, %v311
      %v332 = vmul.f32 %v293, %v311
      %v333 = vmul.f32 %v294, %v311
      %v334 = vmul.f32 %v295, %v311
      %v335 = vmul.f32 %v296, %v311
      %v336 = vmul.f32 %v297, %v311
      %v337 = vmul.f32 %v298, %v311
      %v338 = vmul.f32 %v299, %v311
      %v339 = vmul.f32 %v300, %v311
      %v340 = vmul.f32 %v301, %v311
      %v341 = vmul.f32 %v302, %v311
      %v342 = vmul.f32 %v303, %v311
      %v343 = vmul.f32 %v304, %v311
      %v344 = vmul.f32 %v305, %v311
      %v345 = vld [vmem:[%s2] sm:$0x1]
      %v347 = vlaneseq
      %v348 = vshrl.u32 %v347, 7
      %v349 = vsub.s32 0, %v348
      %v350 = vrot.slane %v345, %v349
      %v352 = vadd.f32 %v313, %v350
      %v353 = vadd.f32 %v314, %v350
      %v354 = vadd.f32 %v315, %v350
      %v355 = vadd.f32 %v316, %v350
      %v356 = vadd.f32 %v317, %v350
      %v357 = vadd.f32 %v318, %v350
      %v358 = vadd.f32 %v319, %v350
      %v359 = vadd.f32 %v320, %v350
      %v360 = vadd.f32 %v321, %v350
      %v361 = vadd.f32 %v322, %v350
      %v362 = vadd.f32 %v323, %v350
      %v363 = vadd.f32 %v324, %v350
      %v364 = vadd.f32 %v325, %v350
      %v365 = vadd.f32 %v326, %v350
      %v366 = vadd.f32 %v327, %v350
      %v367 = vadd.f32 %v328, %v350
      %v368 = vadd.f32 %v329, %v350
      %v369 = vadd.f32 %v330, %v350
      %v370 = vadd.f32 %v331, %v350
      %v371 = vadd.f32 %v332, %v350
      %v372 = vadd.f32 %v333, %v350
      %v373 = vadd.f32 %v334, %v350
      %v374 = vadd.f32 %v335, %v350
      %v375 = vadd.f32 %v336, %v350
      %v376 = vadd.f32 %v337, %v350
      %v377 = vadd.f32 %v338, %v350
      %v378 = vadd.f32 %v339, %v350
      %v379 = vadd.f32 %v340, %v350
      %v380 = vadd.f32 %v341, %v350
      %v381 = vadd.f32 %v342, %v350
      %v382 = vadd.f32 %v343, %v350
      %v383 = vadd.f32 %v344, %v350
      %v384 = vmax.f32 %v352, 0.0
      %v385 = vmax.f32 %v353, 0.0
      %v386 = vmax.f32 %v354, 0.0
      %v387 = vmax.f32 %v355, 0.0
      %v388 = vmax.f32 %v356, 0.0
      %v389 = vmax.f32 %v357, 0.0
      %v390 = vmax.f32 %v358, 0.0
      %v391 = vmax.f32 %v359, 0.0
      %v392 = vmax.f32 %v360, 0.0
      %v393 = vmax.f32 %v361, 0.0
      %v394 = vmax.f32 %v362, 0.0
      %v395 = vmax.f32 %v363, 0.0
      %v396 = vmax.f32 %v364, 0.0
      %v397 = vmax.f32 %v365, 0.0
      %v398 = vmax.f32 %v366, 0.0
      %v399 = vmax.f32 %v367, 0.0
      %v400 = vmax.f32 %v368, 0.0
      %v401 = vmax.f32 %v369, 0.0
      %v402 = vmax.f32 %v370, 0.0
      %v403 = vmax.f32 %v371, 0.0
      %v404 = vmax.f32 %v372, 0.0
      %v405 = vmax.f32 %v373, 0.0
      %v406 = vmax.f32 %v374, 0.0
      %v407 = vmax.f32 %v375, 0.0
      %v408 = vmax.f32 %v376, 0.0
      %v409 = vmax.f32 %v377, 0.0
      %v410 = vmax.f32 %v378, 0.0
      %v411 = vmax.f32 %v379, 0.0
      %v412 = vmax.f32 %v380, 0.0
      %v413 = vmax.f32 %v381, 0.0
      %v414 = vmax.f32 %v382, 0.0
      %v415 = vmax.f32 %v383, 0.0
      %vm416 = vcmask 64512
      %417 = vst.msk [vmem:[#allocation2] sm:$0xff] %vm416, 0.0
      %418 = vst.msk [vmem:[#allocation2 + $0x8] sm:$0xff] %vm416, 0.0
      %s419 = scalar_lea.vmem [#allocation2], 272
      %420 = vst.msk [vmem:[%s419] sm:$0xff] %vm416, 0.0
      %421 = vst.msk [vmem:[%s419 + $0x8] sm:$0xff] %vm416, 0.0
      %s422 = scalar_lea.vmem [#allocation2], 16
      %423 = vst.msk [vmem:[%s422] sm:$0xff] %vm416, %v384
      %424 = vst.msk [vmem:[%s422 + $0x8] sm:$0xff] %vm416, %v385
      %425 = vst.msk [vmem:[%s422 + $0x10] sm:$0xff] %vm416, %v386
      %426 = vst.msk [vmem:[%s422 + $0x18] sm:$0xff] %vm416, %v387
      %427 = vst.msk [vmem:[%s422 + $0x20] sm:$0xff] %vm416, %v388
      %428 = vst.msk [vmem:[%s422 + $0x28] sm:$0xff] %vm416, %v389
      %429 = vst.msk [vmem:[%s422 + $0x30] sm:$0xff] %vm416, %v390
      %430 = vst.msk [vmem:[%s422 + $0x38] sm:$0xff] %vm416, %v391
      %431 = vst.msk [vmem:[%s422 + $0x40] sm:$0xff] %vm416, %v392
      %432 = vst.msk [vmem:[%s422 + $0x48] sm:$0xff] %vm416, %v393
      %433 = vst.msk [vmem:[%s422 + $0x50] sm:$0xff] %vm416, %v394
      %434 = vst.msk [vmem:[%s422 + $0x58] sm:$0xff] %vm416, %v395
      %435 = vst.msk [vmem:[%s422 + $0x60] sm:$0xff] %vm416, %v396
      %436 = vst.msk [vmem:[%s422 + $0x68] sm:$0xff] %vm416, %v397
      %437 = vst.msk [vmem:[%s422 + $0x70] sm:$0xff] %vm416, %v398
      %438 = vst.msk [vmem:[%s422 + $0x78] sm:$0xff] %vm416, %v399
      %439 = vst.msk [vmem:[%s422 + $0x80] sm:$0xff] %vm416, %v400
      %440 = vst.msk [vmem:[%s422 + $0x88] sm:$0xff] %vm416, %v401
      %441 = vst.msk [vmem:[%s422 + $0x90] sm:$0xff] %vm416, %v402
      %442 = vst.msk [vmem:[%s422 + $0x98] sm:$0xff] %vm416, %v403
      %443 = vst.msk [vmem:[%s422 + $0xa0] sm:$0xff] %vm416, %v404
      %444 = vst.msk [vmem:[%s422 + $0xa8] sm:$0xff] %vm416, %v405
      %445 = vst.msk [vmem:[%s422 + $0xb0] sm:$0xff] %vm416, %v406
      %446 = vst.msk [vmem:[%s422 + $0xb8] sm:$0xff] %vm416, %v407
      %447 = vst.msk [vmem:[%s422 + $0xc0] sm:$0xff] %vm416, %v408
      %448 = vst.msk [vmem:[%s422 + $0xc8] sm:$0xff] %vm416, %v409
      %449 = vst.msk [vmem:[%s422 + $0xd0] sm:$0xff] %vm416, %v410
      %450 = vst.msk [vmem:[%s422 + $0xd8] sm:$0xff] %vm416, %v411
      %451 = vst.msk [vmem:[%s422 + $0xe0] sm:$0xff] %vm416, %v412
      %452 = vst.msk [vmem:[%s422 + $0xe8] sm:$0xff] %vm416, %v413
      %453 = vst.msk [vmem:[%s422 + $0xf0] sm:$0xff] %vm416, %v414
      %454 = vst.msk [vmem:[%s422 + $0xf8] sm:$0xff] %vm416, %v415
      %v455 = vld [vmem:[#allocation2] sm:$0xff]
      %v456 = vld [vmem:[#allocation2 + $0x8] sm:$0xff]
      %v457 = vld [vmem:[#allocation2 + $0x10] sm:$0xff]
      %v458 = vld [vmem:[#allocation2 + $0x18] sm:$0xff]
      %v459 = vld [vmem:[#allocation2 + $0x20] sm:$0xff]
      %v460 = vld [vmem:[#allocation2 + $0x28] sm:$0xff]
      %v461 = vld [vmem:[#allocation2 + $0x30] sm:$0xff]
      %v462 = vld [vmem:[#allocation2 + $0x38] sm:$0xff]
      %v463 = vld [vmem:[#allocation2 + $0x40] sm:$0xff]
      %v464 = vld [vmem:[#allocation2 + $0x48] sm:$0xff]
      %v465 = vld [vmem:[#allocation2 + $0x50] sm:$0xff]
      %v466 = vld [vmem:[#allocation2 + $0x58] sm:$0xff]
      %v467 = vld [vmem:[#allocation2 + $0x60] sm:$0xff]
      %v468 = vld [vmem:[#allocation2 + $0x68] sm:$0xff]
      %v469 = vld [vmem:[#allocation2 + $0x70] sm:$0xff]
      %v470 = vld [vmem:[#allocation2 + $0x78] sm:$0xff]
      %v471 = vld [vmem:[#allocation2 + $0x80] sm:$0xff]
      %v472 = vld [vmem:[#allocation2 + $0x88] sm:$0xff]
      %v473 = vld [vmem:[#allocation2 + $0x90] sm:$0xff]
      %v474 = vld [vmem:[#allocation2 + $0x98] sm:$0xff]
      %v475 = vld [vmem:[#allocation2 + $0xa0] sm:$0xff]
      %v476 = vld [vmem:[#allocation2 + $0xa8] sm:$0xff]
      %v477 = vld [vmem:[#allocation2 + $0xb0] sm:$0xff]
      %v478 = vld [vmem:[#allocation2 + $0xb8] sm:$0xff]
      %v479 = vld [vmem:[#allocation2 + $0xc0] sm:$0xff]
      %v480 = vld [vmem:[#allocation2 + $0xc8] sm:$0xff]
      %v481 = vld [vmem:[#allocation2 + $0xd0] sm:$0xff]
      %v482 = vld [vmem:[#allocation2 + $0xd8] sm:$0xff]
      %v483 = vld [vmem:[#allocation2 + $0xe0] sm:$0xff]
      %v484 = vld [vmem:[#allocation2 + $0xe8] sm:$0xff]
      %v485 = vld [vmem:[#allocation2 + $0xf0] sm:$0xff]
      %v486 = vld [vmem:[#allocation2 + $0xf8] sm:$0xff]
      %v487 = vld [vmem:[#allocation2 + $0x100] sm:$0xff]
      %v488 = vld [vmem:[#allocation2 + $0x108] sm:$0xff]
      %v489 = vld [vmem:[#allocation2 + $0x110] sm:$0xff]
      %v490 = vld [vmem:[#allocation2 + $0x118] sm:$0xff]
      %v491 = vlaneseq
      %v492 = vshrl.u32 %v491, 7
      %v493 = vadd.s32 %v492, 8
      %vm494 = vcmp.ne.s32.totalorder %v492, 0
      %vm495 = vcmp.ne.s32.totalorder %v493, 0
      %vm496 = vcmp.ne.s32.totalorder %v492, 15
      %vm497 = vcmp.ne.s32.totalorder %v493, 15
      %v498 = vrot.slane %v455, 7
      %v499 = vrot.slane %v457, 7
      %v500 = vrot.slane %v459, 7
      %v501 = vrot.slane %v461, 7
      %v502 = vrot.slane %v463, 7
      %v503 = vrot.slane %v465, 7
      %v504 = vrot.slane %v467, 7
      %v505 = vrot.slane %v469, 7
      %v506 = vrot.slane %v471, 7
      %v507 = vrot.slane %v473, 7
      %v508 = vrot.slane %v475, 7
      %v509 = vrot.slane %v477, 7
      %v510 = vrot.slane %v479, 7
      %v511 = vrot.slane %v481, 7
      %v512 = vrot.slane %v483, 7
      %v513 = vrot.slane %v485, 7
      %v514 = vrot.slane %v456, 7
      %v515 = vrot.slane %v458, 7
      %v516 = vrot.slane %v460, 7
      %v517 = vrot.slane %v462, 7
      %v518 = vrot.slane %v464, 7
      %v519 = vrot.slane %v466, 7
      %v520 = vrot.slane %v468, 7
      %v521 = vrot.slane %v470, 7
      %v522 = vrot.slane %v472, 7
      %v523 = vrot.slane %v474, 7
      %v524 = vrot.slane %v476, 7
      %v525 = vrot.slane %v478, 7
      %v526 = vrot.slane %v480, 7
      %v527 = vrot.slane %v482, 7
      %v528 = vrot.slane %v484, 7
      %v529 = vrot.slane %v486, 7
      %vm530 = vcmp.lt.s32.totalorder %v492, 1
      %v531 = vsel %vm530, %v498, %v514
      %v532 = vsel %vm530, %v499, %v515
      %v533 = vsel %vm530, %v500, %v516
      %v534 = vsel %vm530, %v501, %v517
      %v535 = vsel %vm530, %v502, %v518
      %v536 = vsel %vm530, %v503, %v519
      %v537 = vsel %vm530, %v504, %v520
      %v538 = vsel %vm530, %v505, %v521
      %v539 = vsel %vm530, %v506, %v522
      %v540 = vsel %vm530, %v507, %v523
      %v541 = vsel %vm530, %v508, %v524
      %v542 = vsel %vm530, %v509, %v525
      %v543 = vsel %vm530, %v510, %v526
      %v544 = vsel %vm530, %v511, %v527
      %v545 = vsel %vm530, %v512, %v528
      %v546 = vsel %vm530, %v513, %v529
      %v547 = vsel %vm530, %v514, %v498
      %v548 = vsel %vm530, %v515, %v499
      %v549 = vsel %vm530, %v516, %v500
      %v550 = vsel %vm530, %v517, %v501
      %v551 = vsel %vm530, %v518, %v502
      %v552 = vsel %vm530, %v519, %v503
      %v553 = vsel %vm530, %v520, %v504
      %v554 = vsel %vm530, %v521, %v505
      %v555 = vsel %vm530, %v522, %v506
      %v556 = vsel %vm530, %v523, %v507
      %v557 = vsel %vm530, %v524, %v508
      %v558 = vsel %vm530, %v525, %v509
      %v559 = vsel %vm530, %v526, %v510
      %v560 = vsel %vm530, %v527, %v511
      %v561 = vsel %vm530, %v528, %v512
      %v562 = vsel %vm530, %v529, %v513
      %v563 = vsel %vm494, 1, 0
      %v564 = vsel %vm495, 1, 0
      %vm565 = vcmp.eq.s32.totalorder %v563, 1
      %vm566 = vcmp.eq.s32.totalorder %v564, 1
      %v567 = vsel %vm565, %v547, 0.0
      %v568 = vsel %vm566, %v531, 0.0
      %v569 = vsel %vm565, %v548, 0.0
      %v570 = vsel %vm566, %v532, 0.0
      %v571 = vsel %vm565, %v549, 0.0
      %v572 = vsel %vm566, %v533, 0.0
      %v573 = vsel %vm565, %v550, 0.0
      %v574 = vsel %vm566, %v534, 0.0
      %v575 = vsel %vm565, %v551, 0.0
      %v576 = vsel %vm566, %v535, 0.0
      %v577 = vsel %vm565, %v552, 0.0
      %v578 = vsel %vm566, %v536, 0.0
      %v579 = vsel %vm565, %v553, 0.0
      %v580 = vsel %vm566, %v537, 0.0
      %v581 = vsel %vm565, %v554, 0.0
      %v582 = vsel %vm566, %v538, 0.0
      %v583 = vsel %vm565, %v555, 0.0
      %v584 = vsel %vm566, %v539, 0.0
      %v585 = vsel %vm565, %v556, 0.0
      %v586 = vsel %vm566, %v540, 0.0
      %v587 = vsel %vm565, %v557, 0.0
      %v588 = vsel %vm566, %v541, 0.0
      %v589 = vsel %vm565, %v558, 0.0
      %v590 = vsel %vm566, %v542, 0.0
      %v591 = vsel %vm565, %v559, 0.0
      %v592 = vsel %vm566, %v543, 0.0
      %v593 = vsel %vm565, %v560, 0.0
      %v594 = vsel %vm566, %v544, 0.0
      %v595 = vsel %vm565, %v561, 0.0
      %v596 = vsel %vm566, %v545, 0.0
      %v597 = vsel %vm565, %v562, 0.0
      %v598 = vsel %vm566, %v546, 0.0
      %v599 = vrot.slane %v455, 1
      %v600 = vrot.slane %v457, 1
      %v601 = vrot.slane %v459, 1
      %v602 = vrot.slane %v461, 1
      %v603 = vrot.slane %v463, 1
      %v604 = vrot.slane %v465, 1
      %v605 = vrot.slane %v467, 1
      %v606 = vrot.slane %v469, 1
      %v607 = vrot.slane %v471, 1
      %v608 = vrot.slane %v473, 1
      %v609 = vrot.slane %v475, 1
      %v610 = vrot.slane %v477, 1
      %v611 = vrot.slane %v479, 1
      %v612 = vrot.slane %v481, 1
      %v613 = vrot.slane %v483, 1
      %v614 = vrot.slane %v485, 1
      %v615 = vrot.slane %v456, 1
      %v616 = vrot.slane %v458, 1
      %v617 = vrot.slane %v460, 1
      %v618 = vrot.slane %v462, 1
      %v619 = vrot.slane %v464, 1
      %v620 = vrot.slane %v466, 1
      %v621 = vrot.slane %v468, 1
      %v622 = vrot.slane %v470, 1
      %v623 = vrot.slane %v472, 1
      %v624 = vrot.slane %v474, 1
      %v625 = vrot.slane %v476, 1
      %v626 = vrot.slane %v478, 1
      %v627 = vrot.slane %v480, 1
      %v628 = vrot.slane %v482, 1
      %v629 = vrot.slane %v484, 1
      %v630 = vrot.slane %v486, 1
      %vm631 = vcmp.lt.s32.totalorder %v492, 7
      %v632 = vsel %vm631, %v599, %v615
      %v633 = vsel %vm631, %v600, %v616
      %v634 = vsel %vm631, %v601, %v617
      %v635 = vsel %vm631, %v602, %v618
      %v636 = vsel %vm631, %v603, %v619
      %v637 = vsel %vm631, %v604, %v620
      %v638 = vsel %vm631, %v605, %v621
      %v639 = vsel %vm631, %v606, %v622
      %v640 = vsel %vm631, %v607, %v623
      %v641 = vsel %vm631, %v608, %v624
      %v642 = vsel %vm631, %v609, %v625
      %v643 = vsel %vm631, %v610, %v626
      %v644 = vsel %vm631, %v611, %v627
      %v645 = vsel %vm631, %v612, %v628
      %v646 = vsel %vm631, %v613, %v629
      %v647 = vsel %vm631, %v614, %v630
      %v648 = vsel %vm631, %v615, %v599
      %v649 = vsel %vm631, %v616, %v600
      %v650 = vsel %vm631, %v617, %v601
      %v651 = vsel %vm631, %v618, %v602
      %v652 = vsel %vm631, %v619, %v603
      %v653 = vsel %vm631, %v620, %v604
      %v654 = vsel %vm631, %v621, %v605
      %v655 = vsel %vm631, %v622, %v606
      %v656 = vsel %vm631, %v623, %v607
      %v657 = vsel %vm631, %v624, %v608
      %v658 = vsel %vm631, %v625, %v609
      %v659 = vsel %vm631, %v626, %v610
      %v660 = vsel %vm631, %v627, %v611
      %v661 = vsel %vm631, %v628, %v612
      %v662 = vsel %vm631, %v629, %v613
      %v663 = vsel %vm631, %v630, %v614
      %v664 = vsel %vm496, 1, 0
      %v665 = vsel %vm497, 1, 0
      %vm666 = vcmp.eq.s32.totalorder %v664, 1
      %vm667 = vcmp.eq.s32.totalorder %v665, 1
      %v668 = vsel %vm666, %v632, 0.0
      %v669 = vsel %vm667, %v648, 0.0
      %v670 = vsel %vm666, %v633, 0.0
      %v671 = vsel %vm667, %v649, 0.0
      %v672 = vsel %vm666, %v634, 0.0
      %v673 = vsel %vm667, %v650, 0.0
      %v674 = vsel %vm666, %v635, 0.0
      %v675 = vsel %vm667, %v651, 0.0
      %v676 = vsel %vm666, %v636, 0.0
      %v677 = vsel %vm667, %v652, 0.0
      %v678 = vsel %vm666, %v637, 0.0
      %v679 = vsel %vm667, %v653, 0.0
      %v680 = vsel %vm666, %v638, 0.0
      %v681 = vsel %vm667, %v654, 0.0
      %v682 = vsel %vm666, %v639, 0.0
      %v683 = vsel %vm667, %v655, 0.0
      %v684 = vsel %vm666, %v640, 0.0
      %v685 = vsel %vm667, %v656, 0.0
      %v686 = vsel %vm666, %v641, 0.0
      %v687 = vsel %vm667, %v657, 0.0
      %v688 = vsel %vm666, %v642, 0.0
      %v689 = vsel %vm667, %v658, 0.0
      %v690 = vsel %vm666, %v643, 0.0
      %v691 = vsel %vm667, %v659, 0.0
      %v692 = vsel %vm666, %v644, 0.0
      %v693 = vsel %vm667, %v660, 0.0
      %v694 = vsel %vm666, %v645, 0.0
      %v695 = vsel %vm667, %v661, 0.0
      %v696 = vsel %vm666, %v646, 0.0
      %v697 = vsel %vm667, %v662, 0.0
      %v698 = vsel %vm666, %v647, 0.0
      %v699 = vsel %vm667, %v663, 0.0
      %v700 = vrot.slane %v487, 7
      %v701 = vrot.slane %v488, 7
      %v702 = vsel %vm530, %v700, %v701
      %v703 = vsel %vm530, %v701, %v700
      %v704 = vsel %vm565, %v703, 0.0
      %v705 = vsel %vm566, %v702, 0.0
      %v706 = vrot.slane %v487, 1
      %v707 = vrot.slane %v488, 1
      %v708 = vsel %vm631, %v706, %v707
      %v709 = vsel %vm631, %v707, %v706
      %v710 = vsel %vm666, %v708, 0.0
      %v711 = vsel %vm667, %v709, 0.0
      %v712 = vrot.slane %v489, 7
      %v713 = vrot.slane %v490, 7
      %v714 = vsel %vm530, %v712, %v713
      %v715 = vsel %vm530, %v713, %v712
      %v716 = vsel %vm565, %v715, 0.0
      %v717 = vsel %vm566, %v714, 0.0
      %v718 = vrot.slane %v489, 1
      %v719 = vrot.slane %v490, 1
      %v720 = vsel %vm631, %v718, %v719
      %v721 = vsel %vm631, %v719, %v718
      %v722 = vsel %vm666, %v720, 0.0
      %v723 = vsel %vm667, %v721, 0.0
      %756 = vrot.lane.b32.xlu0 %v455, 8
      %v757 = vpop.permute.xlu0 %756
      %758 = vrot.lane.b32.xlu0 %v456, 8
      %v759 = vpop.permute.xlu0 %758
      %760 = vrot.lane.b32.xlu0 %v457, 8
      %v761 = vpop.permute.xlu0 %760
      %762 = vrot.lane.b32.xlu0 %v458, 8
      %v763 = vpop.permute.xlu0 %762
      %764 = vrot.lane.b32.xlu0 %v459, 8
      %v765 = vpop.permute.xlu0 %764
      %766 = vrot.lane.b32.xlu0 %v460, 8
      %v767 = vpop.permute.xlu0 %766
      %768 = vrot.lane.b32.xlu0 %v461, 8
      %v769 = vpop.permute.xlu0 %768
      %770 = vrot.lane.b32.xlu0 %v462, 8
      %v771 = vpop.permute.xlu0 %770
      %772 = vrot.lane.b32.xlu0 %v463, 8
      %v773 = vpop.permute.xlu0 %772
      %774 = vrot.lane.b32.xlu0 %v464, 8
      %v775 = vpop.permute.xlu0 %774
      %776 = vrot.lane.b32.xlu0 %v465, 8
      %v777 = vpop.permute.xlu0 %776
      %778 = vrot.lane.b32.xlu0 %v466, 8
      %v779 = vpop.permute.xlu0 %778
      %780 = vrot.lane.b32.xlu0 %v467, 8
      %v781 = vpop.permute.xlu0 %780
      %782 = vrot.lane.b32.xlu0 %v468, 8
      %v783 = vpop.permute.xlu0 %782
      %784 = vrot.lane.b32.xlu0 %v469, 8
      %v785 = vpop.permute.xlu0 %784
      %786 = vrot.lane.b32.xlu0 %v470, 8
      %v787 = vpop.permute.xlu0 %786
      %788 = vrot.lane.b32.xlu0 %v471, 8
      %v789 = vpop.permute.xlu0 %788
      %790 = vrot.lane.b32.xlu0 %v472, 8
      %v791 = vpop.permute.xlu0 %790
      %792 = vrot.lane.b32.xlu0 %v473, 8
      %v793 = vpop.permute.xlu0 %792
      %794 = vrot.lane.b32.xlu0 %v474, 8
      %v795 = vpop.permute.xlu0 %794
      %796 = vrot.lane.b32.xlu0 %v475, 8
      %v797 = vpop.permute.xlu0 %796
      %798 = vrot.lane.b32.xlu0 %v476, 8
      %v799 = vpop.permute.xlu0 %798
      %800 = vrot.lane.b32.xlu0 %v477, 8
      %v801 = vpop.permute.xlu0 %800
      %802 = vrot.lane.b32.xlu0 %v478, 8
      %v803 = vpop.permute.xlu0 %802
      %804 = vrot.lane.b32.xlu0 %v479, 8
      %v805 = vpop.permute.xlu0 %804
      %806 = vrot.lane.b32.xlu0 %v480, 8
      %v807 = vpop.permute.xlu0 %806
      %808 = vrot.lane.b32.xlu0 %v481, 8
      %v809 = vpop.permute.xlu0 %808
      %810 = vrot.lane.b32.xlu0 %v482, 8
      %v811 = vpop.permute.xlu0 %810
      %812 = vrot.lane.b32.xlu0 %v483, 8
      %v813 = vpop.permute.xlu0 %812
      %814 = vrot.lane.b32.xlu0 %v484, 8
      %v815 = vpop.permute.xlu0 %814
      %816 = vrot.lane.b32.xlu0 %v485, 8
      %v817 = vpop.permute.xlu0 %816
      %818 = vrot.lane.b32.xlu0 %v486, 8
      %v819 = vpop.permute.xlu0 %818
      %884 = vrot.lane.b32.xlu0 %v668, 16
      %v885 = vpop.permute.xlu0 %884
      %886 = vrot.lane.b32.xlu0 %v669, 16
      %v887 = vpop.permute.xlu0 %886
      %888 = vrot.lane.b32.xlu0 %v670, 16
      %v889 = vpop.permute.xlu0 %888
      %890 = vrot.lane.b32.xlu0 %v671, 16
      %v891 = vpop.permute.xlu0 %890
      %892 = vrot.lane.b32.xlu0 %v672, 16
      %v893 = vpop.permute.xlu0 %892
      %894 = vrot.lane.b32.xlu0 %v673, 16
      %v895 = vpop.permute.xlu0 %894
      %896 = vrot.lane.b32.xlu0 %v674, 16
      %v897 = vpop.permute.xlu0 %896
      %898 = vrot.lane.b32.xlu0 %v675, 16
      %v899 = vpop.permute.xlu0 %898
      %900 = vrot.lane.b32.xlu0 %v676, 16
      %v901 = vpop.permute.xlu0 %900
      %902 = vrot.lane.b32.xlu0 %v677, 16
      %v903 = vpop.permute.xlu0 %902
      %904 = vrot.lane.b32.xlu0 %v678, 16
      %v905 = vpop.permute.xlu0 %904
      %906 = vrot.lane.b32.xlu0 %v679, 16
      %v907 = vpop.permute.xlu0 %906
      %908 = vrot.lane.b32.xlu0 %v680, 16
      %v909 = vpop.permute.xlu0 %908
      %910 = vrot.lane.b32.xlu0 %v681, 16
      %v911 = vpop.permute.xlu0 %910
      %912 = vrot.lane.b32.xlu0 %v682, 16
      %v913 = vpop.permute.xlu0 %912
      %914 = vrot.lane.b32.xlu0 %v683, 16
      %v915 = vpop.permute.xlu0 %914
      %916 = vrot.lane.b32.xlu0 %v684, 16
      %v917 = vpop.permute.xlu0 %916
      %918 = vrot.lane.b32.xlu0 %v685, 16
      %v919 = vpop.permute.xlu0 %918
      %920 = vrot.lane.b32.xlu0 %v686, 16
      %v921 = vpop.permute.xlu0 %920
      %922 = vrot.lane.b32.xlu0 %v687, 16
      %v923 = vpop.permute.xlu0 %922
      %924 = vrot.lane.b32.xlu0 %v688, 16
      %v925 = vpop.permute.xlu0 %924
      %926 = vrot.lane.b32.xlu0 %v689, 16
      %v927 = vpop.permute.xlu0 %926
      %928 = vrot.lane.b32.xlu0 %v690, 16
      %v929 = vpop.permute.xlu0 %928
      %930 = vrot.lane.b32.xlu0 %v691, 16
      %v931 = vpop.permute.xlu0 %930
      %932 = vrot.lane.b32.xlu0 %v692, 16
      %v933 = vpop.permute.xlu0 %932
      %934 = vrot.lane.b32.xlu0 %v693, 16
      %v935 = vpop.permute.xlu0 %934
      %936 = vrot.lane.b32.xlu0 %v694, 16
      %v937 = vpop.permute.xlu0 %936
      %938 = vrot.lane.b32.xlu0 %v695, 16
      %v939 = vpop.permute.xlu0 %938
      %940 = vrot.lane.b32.xlu0 %v696, 16
      %v941 = vpop.permute.xlu0 %940
      %942 = vrot.lane.b32.xlu0 %v697, 16
      %v943 = vpop.permute.xlu0 %942
      %944 = vrot.lane.b32.xlu0 %v698, 16
      %v945 = vpop.permute.xlu0 %944
      %946 = vrot.lane.b32.xlu0 %v699, 16
      %v947 = vpop.permute.xlu0 %946
      %1012 = vrot.lane.b32.xlu0 %v569, 24
      %v1013 = vpop.permute.xlu0 %1012
      %1014 = vrot.lane.b32.xlu0 %v570, 24
      %v1015 = vpop.permute.xlu0 %1014
      %1016 = vrot.lane.b32.xlu0 %v571, 24
      %v1017 = vpop.permute.xlu0 %1016
      %1018 = vrot.lane.b32.xlu0 %v572, 24
      %v1019 = vpop.permute.xlu0 %1018
      %1020 = vrot.lane.b32.xlu0 %v573, 24
      %v1021 = vpop.permute.xlu0 %1020
      %1022 = vrot.lane.b32.xlu0 %v574, 24
      %v1023 = vpop.permute.xlu0 %1022
      %1024 = vrot.lane.b32.xlu0 %v575, 24
      %v1025 = vpop.permute.xlu0 %1024
      %1026 = vrot.lane.b32.xlu0 %v576, 24
      %v1027 = vpop.permute.xlu0 %1026
      %1028 = vrot.lane.b32.xlu0 %v577, 24
      %v1029 = vpop.permute.xlu0 %1028
      %1030 = vrot.lane.b32.xlu0 %v578, 24
      %v1031 = vpop.permute.xlu0 %1030
      %1032 = vrot.lane.b32.xlu0 %v579, 24
      %v1033 = vpop.permute.xlu0 %1032
      %1034 = vrot.lane.b32.xlu0 %v580, 24
      %v1035 = vpop.permute.xlu0 %1034
      %1036 = vrot.lane.b32.xlu0 %v581, 24
      %v1037 = vpop.permute.xlu0 %1036
      %1038 = vrot.lane.b32.xlu0 %v582, 24
      %v1039 = vpop.permute.xlu0 %1038
      %1040 = vrot.lane.b32.xlu0 %v583, 24
      %v1041 = vpop.permute.xlu0 %1040
      %1042 = vrot.lane.b32.xlu0 %v584, 24
      %v1043 = vpop.permute.xlu0 %1042
      %1044 = vrot.lane.b32.xlu0 %v585, 24
      %v1045 = vpop.permute.xlu0 %1044
      %1046 = vrot.lane.b32.xlu0 %v586, 24
      %v1047 = vpop.permute.xlu0 %1046
      %1048 = vrot.lane.b32.xlu0 %v587, 24
      %v1049 = vpop.permute.xlu0 %1048
      %1050 = vrot.lane.b32.xlu0 %v588, 24
      %v1051 = vpop.permute.xlu0 %1050
      %1052 = vrot.lane.b32.xlu0 %v589, 24
      %v1053 = vpop.permute.xlu0 %1052
      %1054 = vrot.lane.b32.xlu0 %v590, 24
      %v1055 = vpop.permute.xlu0 %1054
      %1056 = vrot.lane.b32.xlu0 %v591, 24
      %v1057 = vpop.permute.xlu0 %1056
      %1058 = vrot.lane.b32.xlu0 %v592, 24
      %v1059 = vpop.permute.xlu0 %1058
      %1060 = vrot.lane.b32.xlu0 %v593, 24
      %v1061 = vpop.permute.xlu0 %1060
      %1062 = vrot.lane.b32.xlu0 %v594, 24
      %v1063 = vpop.permute.xlu0 %1062
      %1064 = vrot.lane.b32.xlu0 %v595, 24
      %v1065 = vpop.permute.xlu0 %1064
      %1066 = vrot.lane.b32.xlu0 %v596, 24
      %v1067 = vpop.permute.xlu0 %1066
      %1068 = vrot.lane.b32.xlu0 %v597, 24
      %v1069 = vpop.permute.xlu0 %1068
      %1070 = vrot.lane.b32.xlu0 %v598, 24
      %v1071 = vpop.permute.xlu0 %1070
      %1072 = vrot.lane.b32.xlu0 %v704, 24
      %v1073 = vpop.permute.xlu0 %1072
      %1074 = vrot.lane.b32.xlu0 %v705, 24
      %v1075 = vpop.permute.xlu0 %1074
      %1110 = vrot.lane.b32.xlu0 %v457, 32
      %v1111 = vpop.permute.xlu0 %1110
      %1112 = vrot.lane.b32.xlu0 %v458, 32
      %v1113 = vpop.permute.xlu0 %1112
      %1114 = vrot.lane.b32.xlu0 %v459, 32
      %v1115 = vpop.permute.xlu0 %1114
      %1116 = vrot.lane.b32.xlu0 %v460, 32
      %v1117 = vpop.permute.xlu0 %1116
      %1118 = vrot.lane.b32.xlu0 %v461, 32
      %v1119 = vpop.permute.xlu0 %1118
      %1120 = vrot.lane.b32.xlu0 %v462, 32
      %v1121 = vpop.permute.xlu0 %1120
      %1122 = vrot.lane.b32.xlu0 %v463, 32
      %v1123 = vpop.permute.xlu0 %1122
      %1124 = vrot.lane.b32.xlu0 %v464, 32
      %v1125 = vpop.permute.xlu0 %1124
      %1126 = vrot.lane.b32.xlu0 %v465, 32
      %v1127 = vpop.permute.xlu0 %1126
      %1128 = vrot.lane.b32.xlu0 %v466, 32
      %v1129 = vpop.permute.xlu0 %1128
      %1130 = vrot.lane.b32.xlu0 %v467, 32
      %v1131 = vpop.permute.xlu0 %1130
      %1132 = vrot.lane.b32.xlu0 %v468, 32
      %v1133 = vpop.permute.xlu0 %1132
      %1134 = vrot.lane.b32.xlu0 %v469, 32
      %v1135 = vpop.permute.xlu0 %1134
      %1136 = vrot.lane.b32.xlu0 %v470, 32
      %v1137 = vpop.permute.xlu0 %1136
      %1138 = vrot.lane.b32.xlu0 %v471, 32
      %v1139 = vpop.permute.xlu0 %1138
      %1140 = vrot.lane.b32.xlu0 %v472, 32
      %v1141 = vpop.permute.xlu0 %1140
      %1142 = vrot.lane.b32.xlu0 %v473, 32
      %v1143 = vpop.permute.xlu0 %1142
      %1144 = vrot.lane.b32.xlu0 %v474, 32
      %v1145 = vpop.permute.xlu0 %1144
      %1146 = vrot.lane.b32.xlu0 %v475, 32
      %v1147 = vpop.permute.xlu0 %1146
      %1148 = vrot.lane.b32.xlu0 %v476, 32
      %v1149 = vpop.permute.xlu0 %1148
      %1150 = vrot.lane.b32.xlu0 %v477, 32
      %v1151 = vpop.permute.xlu0 %1150
      %1152 = vrot.lane.b32.xlu0 %v478, 32
      %v1153 = vpop.permute.xlu0 %1152
      %1154 = vrot.lane.b32.xlu0 %v479, 32
      %v1155 = vpop.permute.xlu0 %1154
      %1156 = vrot.lane.b32.xlu0 %v480, 32
      %v1157 = vpop.permute.xlu0 %1156
      %1158 = vrot.lane.b32.xlu0 %v481, 32
      %v1159 = vpop.permute.xlu0 %1158
      %1160 = vrot.lane.b32.xlu0 %v482, 32
      %v1161 = vpop.permute.xlu0 %1160
      %1162 = vrot.lane.b32.xlu0 %v483, 32
      %v1163 = vpop.permute.xlu0 %1162
      %1164 = vrot.lane.b32.xlu0 %v484, 32
      %v1165 = vpop.permute.xlu0 %1164
      %1166 = vrot.lane.b32.xlu0 %v485, 32
      %v1167 = vpop.permute.xlu0 %1166
      %1168 = vrot.lane.b32.xlu0 %v486, 32
      %v1169 = vpop.permute.xlu0 %1168
      %1170 = vrot.lane.b32.xlu0 %v487, 32
      %v1171 = vpop.permute.xlu0 %1170
      %1172 = vrot.lane.b32.xlu0 %v488, 32
      %v1173 = vpop.permute.xlu0 %1172
      %1208 = vrot.lane.b32.xlu0 %v670, 40
      %v1209 = vpop.permute.xlu0 %1208
      %1210 = vrot.lane.b32.xlu0 %v671, 40
      %v1211 = vpop.permute.xlu0 %1210
      %1212 = vrot.lane.b32.xlu0 %v672, 40
      %v1213 = vpop.permute.xlu0 %1212
      %1214 = vrot.lane.b32.xlu0 %v673, 40
      %v1215 = vpop.permute.xlu0 %1214
      %1216 = vrot.lane.b32.xlu0 %v674, 40
      %v1217 = vpop.permute.xlu0 %1216
      %1218 = vrot.lane.b32.xlu0 %v675, 40
      %v1219 = vpop.permute.xlu0 %1218
      %1220 = vrot.lane.b32.xlu0 %v676, 40
      %v1221 = vpop.permute.xlu0 %1220
      %1222 = vrot.lane.b32.xlu0 %v677, 40
      %v1223 = vpop.permute.xlu0 %1222
      %1224 = vrot.lane.b32.xlu0 %v678, 40
      %v1225 = vpop.permute.xlu0 %1224
      %1226 = vrot.lane.b32.xlu0 %v679, 40
      %v1227 = vpop.permute.xlu0 %1226
      %1228 = vrot.lane.b32.xlu0 %v680, 40
      %v1229 = vpop.permute.xlu0 %1228
      %1230 = vrot.lane.b32.xlu0 %v681, 40
      %v1231 = vpop.permute.xlu0 %1230
      %1232 = vrot.lane.b32.xlu0 %v682, 40
      %v1233 = vpop.permute.xlu0 %1232
      %1234 = vrot.lane.b32.xlu0 %v683, 40
      %v1235 = vpop.permute.xlu0 %1234
      %1236 = vrot.lane.b32.xlu0 %v684, 40
      %v1237 = vpop.permute.xlu0 %1236
      %1238 = vrot.lane.b32.xlu0 %v685, 40
      %v1239 = vpop.permute.xlu0 %1238
      %1240 = vrot.lane.b32.xlu0 %v686, 40
      %v1241 = vpop.permute.xlu0 %1240
      %1242 = vrot.lane.b32.xlu0 %v687, 40
      %v1243 = vpop.permute.xlu0 %1242
      %1244 = vrot.lane.b32.xlu0 %v688, 40
      %v1245 = vpop.permute.xlu0 %1244
      %1246 = vrot.lane.b32.xlu0 %v689, 40
      %v1247 = vpop.permute.xlu0 %1246
      %1248 = vrot.lane.b32.xlu0 %v690, 40
      %v1249 = vpop.permute.xlu0 %1248
      %1250 = vrot.lane.b32.xlu0 %v691, 40
      %v1251 = vpop.permute.xlu0 %1250
      %1252 = vrot.lane.b32.xlu0 %v692, 40
      %v1253 = vpop.permute.xlu0 %1252
      %1254 = vrot.lane.b32.xlu0 %v693, 40
      %v1255 = vpop.permute.xlu0 %1254
      %1256 = vrot.lane.b32.xlu0 %v694, 40
      %v1257 = vpop.permute.xlu0 %1256
      %1258 = vrot.lane.b32.xlu0 %v695, 40
      %v1259 = vpop.permute.xlu0 %1258
      %1260 = vrot.lane.b32.xlu0 %v696, 40
      %v1261 = vpop.permute.xlu0 %1260
      %1262 = vrot.lane.b32.xlu0 %v697, 40
      %v1263 = vpop.permute.xlu0 %1262
      %1264 = vrot.lane.b32.xlu0 %v698, 40
      %v1265 = vpop.permute.xlu0 %1264
      %1266 = vrot.lane.b32.xlu0 %v699, 40
      %v1267 = vpop.permute.xlu0 %1266
      %1268 = vrot.lane.b32.xlu0 %v710, 40
      %v1269 = vpop.permute.xlu0 %1268
      %1270 = vrot.lane.b32.xlu0 %v711, 40
      %v1271 = vpop.permute.xlu0 %1270
      %1306 = vrot.lane.b32.xlu0 %v571, 48
      %v1307 = vpop.permute.xlu0 %1306
      %1308 = vrot.lane.b32.xlu0 %v572, 48
      %v1309 = vpop.permute.xlu0 %1308
      %1310 = vrot.lane.b32.xlu0 %v573, 48
      %v1311 = vpop.permute.xlu0 %1310
      %1312 = vrot.lane.b32.xlu0 %v574, 48
      %v1313 = vpop.permute.xlu0 %1312
      %1314 = vrot.lane.b32.xlu0 %v575, 48
      %v1315 = vpop.permute.xlu0 %1314
      %1316 = vrot.lane.b32.xlu0 %v576, 48
      %v1317 = vpop.permute.xlu0 %1316
      %1318 = vrot.lane.b32.xlu0 %v577, 48
      %v1319 = vpop.permute.xlu0 %1318
      %1320 = vrot.lane.b32.xlu0 %v578, 48
      %v1321 = vpop.permute.xlu0 %1320
      %1322 = vrot.lane.b32.xlu0 %v579, 48
      %v1323 = vpop.permute.xlu0 %1322
      %1324 = vrot.lane.b32.xlu0 %v580, 48
      %v1325 = vpop.permute.xlu0 %1324
      %1326 = vrot.lane.b32.xlu0 %v581, 48
      %v1327 = vpop.permute.xlu0 %1326
      %1328 = vrot.lane.b32.xlu0 %v582, 48
      %v1329 = vpop.permute.xlu0 %1328
      %1330 = vrot.lane.b32.xlu0 %v583, 48
      %v1331 = vpop.permute.xlu0 %1330
      %1332 = vrot.lane.b32.xlu0 %v584, 48
      %v1333 = vpop.permute.xlu0 %1332
      %1334 = vrot.lane.b32.xlu0 %v585, 48
      %v1335 = vpop.permute.xlu0 %1334
      %1336 = vrot.lane.b32.xlu0 %v586, 48
      %v1337 = vpop.permute.xlu0 %1336
      %1338 = vrot.lane.b32.xlu0 %v587, 48
      %v1339 = vpop.permute.xlu0 %1338
      %1340 = vrot.lane.b32.xlu0 %v588, 48
      %v1341 = vpop.permute.xlu0 %1340
      %1342 = vrot.lane.b32.xlu0 %v589, 48
      %v1343 = vpop.permute.xlu0 %1342
      %1344 = vrot.lane.b32.xlu0 %v590, 48
      %v1345 = vpop.permute.xlu0 %1344
      %1346 = vrot.lane.b32.xlu0 %v591, 48
      %v1347 = vpop.permute.xlu0 %1346
      %1348 = vrot.lane.b32.xlu0 %v592, 48
      %v1349 = vpop.permute.xlu0 %1348
      %1350 = vrot.lane.b32.xlu0 %v593, 48
      %v1351 = vpop.permute.xlu0 %1350
      %1352 = vrot.lane.b32.xlu0 %v594, 48
      %v1353 = vpop.permute.xlu0 %1352
      %1354 = vrot.lane.b32.xlu0 %v595, 48
      %v1355 = vpop.permute.xlu0 %1354
      %1356 = vrot.lane.b32.xlu0 %v596, 48
      %v1357 = vpop.permute.xlu0 %1356
      %1358 = vrot.lane.b32.xlu0 %v597, 48
      %v1359 = vpop.permute.xlu0 %1358
      %1360 = vrot.lane.b32.xlu0 %v598, 48
      %v1361 = vpop.permute.xlu0 %1360
      %1362 = vrot.lane.b32.xlu0 %v704, 48
      %v1363 = vpop.permute.xlu0 %1362
      %1364 = vrot.lane.b32.xlu0 %v705, 48
      %v1365 = vpop.permute.xlu0 %1364
      %1366 = vrot.lane.b32.xlu0 %v716, 48
      %v1367 = vpop.permute.xlu0 %1366
      %1368 = vrot.lane.b32.xlu0 %v717, 48
      %v1369 = vpop.permute.xlu0 %1368
      %1404 = vrot.lane.b32.xlu0 %v459, 56
      %v1405 = vpop.permute.xlu0 %1404
      %1406 = vrot.lane.b32.xlu0 %v460, 56
      %v1407 = vpop.permute.xlu0 %1406
      %1408 = vrot.lane.b32.xlu0 %v461, 56
      %v1409 = vpop.permute.xlu0 %1408
      %1410 = vrot.lane.b32.xlu0 %v462, 56
      %v1411 = vpop.permute.xlu0 %1410
      %1412 = vrot.lane.b32.xlu0 %v463, 56
      %v1413 = vpop.permute.xlu0 %1412
      %1414 = vrot.lane.b32.xlu0 %v464, 56
      %v1415 = vpop.permute.xlu0 %1414
      %1416 = vrot.lane.b32.xlu0 %v465, 56
      %v1417 = vpop.permute.xlu0 %1416
      %1418 = vrot.lane.b32.xlu0 %v466, 56
      %v1419 = vpop.permute.xlu0 %1418
      %1420 = vrot.lane.b32.xlu0 %v467, 56
      %v1421 = vpop.permute.xlu0 %1420
      %1422 = vrot.lane.b32.xlu0 %v468, 56
      %v1423 = vpop.permute.xlu0 %1422
      %1424 = vrot.lane.b32.xlu0 %v469, 56
      %v1425 = vpop.permute.xlu0 %1424
      %1426 = vrot.lane.b32.xlu0 %v470, 56
      %v1427 = vpop.permute.xlu0 %1426
      %1428 = vrot.lane.b32.xlu0 %v471, 56
      %v1429 = vpop.permute.xlu0 %1428
      %1430 = vrot.lane.b32.xlu0 %v472, 56
      %v1431 = vpop.permute.xlu0 %1430
      %1432 = vrot.lane.b32.xlu0 %v473, 56
      %v1433 = vpop.permute.xlu0 %1432
      %1434 = vrot.lane.b32.xlu0 %v474, 56
      %v1435 = vpop.permute.xlu0 %1434
      %1436 = vrot.lane.b32.xlu0 %v475, 56
      %v1437 = vpop.permute.xlu0 %1436
      %1438 = vrot.lane.b32.xlu0 %v476, 56
      %v1439 = vpop.permute.xlu0 %1438
      %1440 = vrot.lane.b32.xlu0 %v477, 56
      %v1441 = vpop.permute.xlu0 %1440
      %1442 = vrot.lane.b32.xlu0 %v478, 56
      %v1443 = vpop.permute.xlu0 %1442
      %1444 = vrot.lane.b32.xlu0 %v479, 56
      %v1445 = vpop.permute.xlu0 %1444
      %1446 = vrot.lane.b32.xlu0 %v480, 56
      %v1447 = vpop.permute.xlu0 %1446
      %1448 = vrot.lane.b32.xlu0 %v481, 56
      %v1449 = vpop.permute.xlu0 %1448
      %1450 = vrot.lane.b32.xlu0 %v482, 56
      %v1451 = vpop.permute.xlu0 %1450
      %1452 = vrot.lane.b32.xlu0 %v483, 56
      %v1453 = vpop.permute.xlu0 %1452
      %1454 = vrot.lane.b32.xlu0 %v484, 56
      %v1455 = vpop.permute.xlu0 %1454
      %1456 = vrot.lane.b32.xlu0 %v485, 56
      %v1457 = vpop.permute.xlu0 %1456
      %1458 = vrot.lane.b32.xlu0 %v486, 56
      %v1459 = vpop.permute.xlu0 %1458
      %1460 = vrot.lane.b32.xlu0 %v487, 56
      %v1461 = vpop.permute.xlu0 %1460
      %1462 = vrot.lane.b32.xlu0 %v488, 56
      %v1463 = vpop.permute.xlu0 %1462
      %1464 = vrot.lane.b32.xlu0 %v489, 56
      %v1465 = vpop.permute.xlu0 %1464
      %1466 = vrot.lane.b32.xlu0 %v490, 56
      %v1467 = vpop.permute.xlu0 %1466
      %1502 = vrot.lane.b32.xlu0 %v672, 64
      %v1503 = vpop.permute.xlu0 %1502
      %1504 = vrot.lane.b32.xlu0 %v673, 64
      %v1505 = vpop.permute.xlu0 %1504
      %1506 = vrot.lane.b32.xlu0 %v674, 64
      %v1507 = vpop.permute.xlu0 %1506
      %1508 = vrot.lane.b32.xlu0 %v675, 64
      %v1509 = vpop.permute.xlu0 %1508
      %1510 = vrot.lane.b32.xlu0 %v676, 64
      %v1511 = vpop.permute.xlu0 %1510
      %1512 = vrot.lane.b32.xlu0 %v677, 64
      %v1513 = vpop.permute.xlu0 %1512
      %1514 = vrot.lane.b32.xlu0 %v678, 64
      %v1515 = vpop.permute.xlu0 %1514
      %1516 = vrot.lane.b32.xlu0 %v679, 64
      %v1517 = vpop.permute.xlu0 %1516
      %1518 = vrot.lane.b32.xlu0 %v680, 64
      %v1519 = vpop.permute.xlu0 %1518
      %1520 = vrot.lane.b32.xlu0 %v681, 64
      %v1521 = vpop.permute.xlu0 %1520
      %1522 = vrot.lane.b32.xlu0 %v682, 64
      %v1523 = vpop.permute.xlu0 %1522
      %1524 = vrot.lane.b32.xlu0 %v683, 64
      %v1525 = vpop.permute.xlu0 %1524
      %1526 = vrot.lane.b32.xlu0 %v684, 64
      %v1527 = vpop.permute.xlu0 %1526
      %1528 = vrot.lane.b32.xlu0 %v685, 64
      %v1529 = vpop.permute.xlu0 %1528
      %1530 = vrot.lane.b32.xlu0 %v686, 64
      %v1531 = vpop.permute.xlu0 %1530
      %1532 = vrot.lane.b32.xlu0 %v687, 64
      %v1533 = vpop.permute.xlu0 %1532
      %1534 = vrot.lane.b32.xlu0 %v688, 64
      %v1535 = vpop.permute.xlu0 %1534
      %1536 = vrot.lane.b32.xlu0 %v689, 64
      %v1537 = vpop.permute.xlu0 %1536
      %1538 = vrot.lane.b32.xlu0 %v690, 64
      %v1539 = vpop.permute.xlu0 %1538
      %1540 = vrot.lane.b32.xlu0 %v691, 64
      %v1541 = vpop.permute.xlu0 %1540
      %1542 = vrot.lane.b32.xlu0 %v692, 64
      %v1543 = vpop.permute.xlu0 %1542
      %1544 = vrot.lane.b32.xlu0 %v693, 64
      %v1545 = vpop.permute.xlu0 %1544
      %1546 = vrot.lane.b32.xlu0 %v694, 64
      %v1547 = vpop.permute.xlu0 %1546
      %1548 = vrot.lane.b32.xlu0 %v695, 64
      %v1549 = vpop.permute.xlu0 %1548
      %1550 = vrot.lane.b32.xlu0 %v696, 64
      %v1551 = vpop.permute.xlu0 %1550
      %1552 = vrot.lane.b32.xlu0 %v697, 64
      %v1553 = vpop.permute.xlu0 %1552
      %1554 = vrot.lane.b32.xlu0 %v698, 64
      %v1555 = vpop.permute.xlu0 %1554
      %1556 = vrot.lane.b32.xlu0 %v699, 64
      %v1557 = vpop.permute.xlu0 %1556
      %1558 = vrot.lane.b32.xlu0 %v710, 64
      %v1559 = vpop.permute.xlu0 %1558
      %1560 = vrot.lane.b32.xlu0 %v711, 64
      %v1561 = vpop.permute.xlu0 %1560
      %1562 = vrot.lane.b32.xlu0 %v722, 64
      %v1563 = vpop.permute.xlu0 %1562
      %1564 = vrot.lane.b32.xlu0 %v723, 64
      %v1565 = vpop.permute.xlu0 %1564
      %v1598 = vsel %vm416, %v567, %v757
      %v1599 = vsel %vm416, %v568, %v759
      %v1600 = vsel %vm416, %v569, %v761
      %v1601 = vsel %vm416, %v570, %v763
      %v1602 = vsel %vm416, %v571, %v765
      %v1603 = vsel %vm416, %v572, %v767
      %v1604 = vsel %vm416, %v573, %v769
      %v1605 = vsel %vm416, %v574, %v771
      %v1606 = vsel %vm416, %v575, %v773
      %v1607 = vsel %vm416, %v576, %v775
      %v1608 = vsel %vm416, %v577, %v777
      %v1609 = vsel %vm416, %v578, %v779
      %v1610 = vsel %vm416, %v579, %v781
      %v1611 = vsel %vm416, %v580, %v783
      %v1612 = vsel %vm416, %v581, %v785
      %v1613 = vsel %vm416, %v582, %v787
      %v1614 = vsel %vm416, %v583, %v789
      %v1615 = vsel %vm416, %v584, %v791
      %v1616 = vsel %vm416, %v585, %v793
      %v1617 = vsel %vm416, %v586, %v795
      %v1618 = vsel %vm416, %v587, %v797
      %v1619 = vsel %vm416, %v588, %v799
      %v1620 = vsel %vm416, %v589, %v801
      %v1621 = vsel %vm416, %v590, %v803
      %v1622 = vsel %vm416, %v591, %v805
      %v1623 = vsel %vm416, %v592, %v807
      %v1624 = vsel %vm416, %v593, %v809
      %v1625 = vsel %vm416, %v594, %v811
      %v1626 = vsel %vm416, %v595, %v813
      %v1627 = vsel %vm416, %v596, %v815
      %v1628 = vsel %vm416, %v597, %v817
      %v1629 = vsel %vm416, %v598, %v819
      %vm1630 = vcmask 130048
      %v1631 = vsel %vm1630, %v1598, %v885
      %v1632 = vsel %vm1630, %v1599, %v887
      %v1633 = vsel %vm1630, %v1600, %v889
      %v1634 = vsel %vm1630, %v1601, %v891
      %v1635 = vsel %vm1630, %v1602, %v893
      %v1636 = vsel %vm1630, %v1603, %v895
      %v1637 = vsel %vm1630, %v1604, %v897
      %v1638 = vsel %vm1630, %v1605, %v899
      %v1639 = vsel %vm1630, %v1606, %v901
      %v1640 = vsel %vm1630, %v1607, %v903
      %v1641 = vsel %vm1630, %v1608, %v905
      %v1642 = vsel %vm1630, %v1609, %v907
      %v1643 = vsel %vm1630, %v1610, %v909
      %v1644 = vsel %vm1630, %v1611, %v911
      %v1645 = vsel %vm1630, %v1612, %v913
      %v1646 = vsel %vm1630, %v1613, %v915
      %v1647 = vsel %vm1630, %v1614, %v917
      %v1648 = vsel %vm1630, %v1615, %v919
      %v1649 = vsel %vm1630, %v1616, %v921
      %v1650 = vsel %vm1630, %v1617, %v923
      %v1651 = vsel %vm1630, %v1618, %v925
      %v1652 = vsel %vm1630, %v1619, %v927
      %v1653 = vsel %vm1630, %v1620, %v929
      %v1654 = vsel %vm1630, %v1621, %v931
      %v1655 = vsel %vm1630, %v1622, %v933
      %v1656 = vsel %vm1630, %v1623, %v935
      %v1657 = vsel %vm1630, %v1624, %v937
      %v1658 = vsel %vm1630, %v1625, %v939
      %v1659 = vsel %vm1630, %v1626, %v941
      %v1660 = vsel %vm1630, %v1627, %v943
      %v1661 = vsel %vm1630, %v1628, %v945
      %v1662 = vsel %vm1630, %v1629, %v947
      %vm1663 = vcmask 195584
      %v1664 = vsel %vm1663, %v1631, %v1013
      %v1665 = vsel %vm1663, %v1632, %v1015
      %v1666 = vsel %vm1663, %v1633, %v1017
      %v1667 = vsel %vm1663, %v1634, %v1019
      %v1668 = vsel %vm1663, %v1635, %v1021
      %v1669 = vsel %vm1663, %v1636, %v1023
      %v1670 = vsel %vm1663, %v1637, %v1025
      %v1671 = vsel %vm1663, %v1638, %v1027
      %v1672 = vsel %vm1663, %v1639, %v1029
      %v1673 = vsel %vm1663, %v1640, %v1031
      %v1674 = vsel %vm1663, %v1641, %v1033
      %v1675 = vsel %vm1663, %v1642, %v1035
      %v1676 = vsel %vm1663, %v1643, %v1037
      %v1677 = vsel %vm1663, %v1644, %v1039
      %v1678 = vsel %vm1663, %v1645, %v1041
      %v1679 = vsel %vm1663, %v1646, %v1043
      %v1680 = vsel %vm1663, %v1647, %v1045
      %v1681 = vsel %vm1663, %v1648, %v1047
      %v1682 = vsel %vm1663, %v1649, %v1049
      %v1683 = vsel %vm1663, %v1650, %v1051
      %v1684 = vsel %vm1663, %v1651, %v1053
      %v1685 = vsel %vm1663, %v1652, %v1055
      %v1686 = vsel %vm1663, %v1653, %v1057
      %v1687 = vsel %vm1663, %v1654, %v1059
      %v1688 = vsel %vm1663, %v1655, %v1061
      %v1689 = vsel %vm1663, %v1656, %v1063
      %v1690 = vsel %vm1663, %v1657, %v1065
      %v1691 = vsel %vm1663, %v1658, %v1067
      %v1692 = vsel %vm1663, %v1659, %v1069
      %v1693 = vsel %vm1663, %v1660, %v1071
      %v1694 = vsel %vm1663, %v1661, %v1073
      %v1695 = vsel %vm1663, %v1662, %v1075
      %vm1696 = vcmask 261120
      %v1697 = vsel %vm1696, %v1664, %v1111
      %v1698 = vsel %vm1696, %v1665, %v1113
      %v1699 = vsel %vm1696, %v1666, %v1115
      %v1700 = vsel %vm1696, %v1667, %v1117
      %v1701 = vsel %vm1696, %v1668, %v1119
      %v1702 = vsel %vm1696, %v1669, %v1121
      %v1703 = vsel %vm1696, %v1670, %v1123
      %v1704 = vsel %vm1696, %v1671, %v1125
      %v1705 = vsel %vm1696, %v1672, %v1127
      %v1706 = vsel %vm1696, %v1673, %v1129
      %v1707 = vsel %vm1696, %v1674, %v1131
      %v1708 = vsel %vm1696, %v1675, %v1133
      %v1709 = vsel %vm1696, %v1676, %v1135
      %v1710 = vsel %vm1696, %v1677, %v1137
      %v1711 = vsel %vm1696, %v1678, %v1139
      %v1712 = vsel %vm1696, %v1679, %v1141
      %v1713 = vsel %vm1696, %v1680, %v1143
      %v1714 = vsel %vm1696, %v1681, %v1145
      %v1715 = vsel %vm1696, %v1682, %v1147
      %v1716 = vsel %vm1696, %v1683, %v1149
      %v1717 = vsel %vm1696, %v1684, %v1151
      %v1718 = vsel %vm1696, %v1685, %v1153
      %v1719 = vsel %vm1696, %v1686, %v1155
      %v1720 = vsel %vm1696, %v1687, %v1157
      %v1721 = vsel %vm1696, %v1688, %v1159
      %v1722 = vsel %vm1696, %v1689, %v1161
      %v1723 = vsel %vm1696, %v1690, %v1163
      %v1724 = vsel %vm1696, %v1691, %v1165
      %v1725 = vsel %vm1696, %v1692, %v1167
      %v1726 = vsel %vm1696, %v1693, %v1169
      %v1727 = vsel %vm1696, %v1694, %v1171
      %v1728 = vsel %vm1696, %v1695, %v1173
      %vm1729 = vcmask 326656
      %v1730 = vsel %vm1729, %v1697, %v1209
      %v1731 = vsel %vm1729, %v1698, %v1211
      %v1732 = vsel %vm1729, %v1699, %v1213
      %v1733 = vsel %vm1729, %v1700, %v1215
      %v1734 = vsel %vm1729, %v1701, %v1217
      %v1735 = vsel %vm1729, %v1702, %v1219
      %v1736 = vsel %vm1729, %v1703, %v1221
      %v1737 = vsel %vm1729, %v1704, %v1223
      %v1738 = vsel %vm1729, %v1705, %v1225
      %v1739 = vsel %vm1729, %v1706, %v1227
      %v1740 = vsel %vm1729, %v1707, %v1229
      %v1741 = vsel %vm1729, %v1708, %v1231
      %v1742 = vsel %vm1729, %v1709, %v1233
      %v1743 = vsel %vm1729, %v1710, %v1235
      %v1744 = vsel %vm1729, %v1711, %v1237
      %v1745 = vsel %vm1729, %v1712, %v1239
      %v1746 = vsel %vm1729, %v1713, %v1241
      %v1747 = vsel %vm1729, %v1714, %v1243
      %v1748 = vsel %vm1729, %v1715, %v1245
      %v1749 = vsel %vm1729, %v1716, %v1247
      %v1750 = vsel %vm1729, %v1717, %v1249
      %v1751 = vsel %vm1729, %v1718, %v1251
      %v1752 = vsel %vm1729, %v1719, %v1253
      %v1753 = vsel %vm1729, %v1720, %v1255
      %v1754 = vsel %vm1729, %v1721, %v1257
      %v1755 = vsel %vm1729, %v1722, %v1259
      %v1756 = vsel %vm1729, %v1723, %v1261
      %v1757 = vsel %vm1729, %v1724, %v1263
      %v1758 = vsel %vm1729, %v1725, %v1265
      %v1759 = vsel %vm1729, %v1726, %v1267
      %v1760 = vsel %vm1729, %v1727, %v1269
      %v1761 = vsel %vm1729, %v1728, %v1271
      %vm1762 = vcmask 392192
      %v1763 = vsel %vm1762, %v1730, %v1307
      %v1764 = vsel %vm1762, %v1731, %v1309
      %v1765 = vsel %vm1762, %v1732, %v1311
      %v1766 = vsel %vm1762, %v1733, %v1313
      %v1767 = vsel %vm1762, %v1734, %v1315
      %v1768 = vsel %vm1762, %v1735, %v1317
      %v1769 = vsel %vm1762, %v1736, %v1319
      %v1770 = vsel %vm1762, %v1737, %v1321
      %v1771 = vsel %vm1762, %v1738, %v1323
      %v1772 = vsel %vm1762, %v1739, %v1325
      %v1773 = vsel %vm1762, %v1740, %v1327
      %v1774 = vsel %vm1762, %v1741, %v1329
      %v1775 = vsel %vm1762, %v1742, %v1331
      %v1776 = vsel %vm1762, %v1743, %v1333
      %v1777 = vsel %vm1762, %v1744, %v1335
      %v1778 = vsel %vm1762, %v1745, %v1337
      %v1779 = vsel %vm1762, %v1746, %v1339
      %v1780 = vsel %vm1762, %v1747, %v1341
      %v1781 = vsel %vm1762, %v1748, %v1343
      %v1782 = vsel %vm1762, %v1749, %v1345
      %v1783 = vsel %vm1762, %v1750, %v1347
      %v1784 = vsel %vm1762, %v1751, %v1349
      %v1785 = vsel %vm1762, %v1752, %v1351
      %v1786 = vsel %vm1762, %v1753, %v1353
      %v1787 = vsel %vm1762, %v1754, %v1355
      %v1788 = vsel %vm1762, %v1755, %v1357
      %v1789 = vsel %vm1762, %v1756, %v1359
      %v1790 = vsel %vm1762, %v1757, %v1361
      %v1791 = vsel %vm1762, %v1758, %v1363
      %v1792 = vsel %vm1762, %v1759, %v1365
      %v1793 = vsel %vm1762, %v1760, %v1367
      %v1794 = vsel %vm1762, %v1761, %v1369
      %vm1795 = vcmask 457728
      %v1796 = vsel %vm1795, %v1763, %v1405
      %v1797 = vsel %vm1795, %v1764, %v1407
      %v1798 = vsel %vm1795, %v1765, %v1409
      %v1799 = vsel %vm1795, %v1766, %v1411
      %v1800 = vsel %vm1795, %v1767, %v1413
      %v1801 = vsel %vm1795, %v1768, %v1415
      %v1802 = vsel %vm1795, %v1769, %v1417
      %v1803 = vsel %vm1795, %v1770, %v1419
      %v1804 = vsel %vm1795, %v1771, %v1421
      %v1805 = vsel %vm1795, %v1772, %v1423
      %v1806 = vsel %vm1795, %v1773, %v1425
      %v1807 = vsel %vm1795, %v1774, %v1427
      %v1808 = vsel %vm1795, %v1775, %v1429
      %v1809 = vsel %vm1795, %v1776, %v1431
      %v1810 = vsel %vm1795, %v1777, %v1433
      %v1811 = vsel %vm1795, %v1778, %v1435
      %v1812 = vsel %vm1795, %v1779, %v1437
      %v1813 = vsel %vm1795, %v1780, %v1439
      %v1814 = vsel %vm1795, %v1781, %v1441
      %v1815 = vsel %vm1795, %v1782, %v1443
      %v1816 = vsel %vm1795, %v1783, %v1445
      %v1817 = vsel %vm1795, %v1784, %v1447
      %v1818 = vsel %vm1795, %v1785, %v1449
      %v1819 = vsel %vm1795, %v1786, %v1451
      %v1820 = vsel %vm1795, %v1787, %v1453
      %v1821 = vsel %vm1795, %v1788, %v1455
      %v1822 = vsel %vm1795, %v1789, %v1457
      %v1823 = vsel %vm1795, %v1790, %v1459
      %v1824 = vsel %vm1795, %v1791, %v1461
      %v1825 = vsel %vm1795, %v1792, %v1463
      %v1826 = vsel %vm1795, %v1793, %v1465
      %v1827 = vsel %vm1795, %v1794, %v1467
      %vm1828 = vcmask 523264
      %v1829 = vsel %vm1828, %v1796, %v1503
      %v1830 = vsel %vm1828, %v1797, %v1505
      %v1831 = vsel %vm1828, %v1798, %v1507
      %v1832 = vsel %vm1828, %v1799, %v1509
      %v1833 = vsel %vm1828, %v1800, %v1511
      %v1834 = vsel %vm1828, %v1801, %v1513
      %v1835 = vsel %vm1828, %v1802, %v1515
      %v1836 = vsel %vm1828, %v1803, %v1517
      %v1837 = vsel %vm1828, %v1804, %v1519
      %v1838 = vsel %vm1828, %v1805, %v1521
      %v1839 = vsel %vm1828, %v1806, %v1523
      %v1840 = vsel %vm1828, %v1807, %v1525
      %v1841 = vsel %vm1828, %v1808, %v1527
      %v1842 = vsel %vm1828, %v1809, %v1529
      %v1843 = vsel %vm1828, %v1810, %v1531
      %v1844 = vsel %vm1828, %v1811, %v1533
      %v1845 = vsel %vm1828, %v1812, %v1535
      %v1846 = vsel %vm1828, %v1813, %v1537
      %v1847 = vsel %vm1828, %v1814, %v1539
      %v1848 = vsel %vm1828, %v1815, %v1541
      %v1849 = vsel %vm1828, %v1816, %v1543
      %v1850 = vsel %vm1828, %v1817, %v1545
      %v1851 = vsel %vm1828, %v1818, %v1547
      %v1852 = vsel %vm1828, %v1819, %v1549
      %v1853 = vsel %vm1828, %v1820, %v1551
      %v1854 = vsel %vm1828, %v1821, %v1553
      %v1855 = vsel %vm1828, %v1822, %v1555
      %v1856 = vsel %vm1828, %v1823, %v1557
      %v1857 = vsel %vm1828, %v1824, %v1559
      %v1858 = vsel %vm1828, %v1825, %v1561
      %v1859 = vsel %vm1828, %v1826, %v1563
      %v1860 = vsel %vm1828, %v1827, %v1565
      %v1861 = vld [vmem:[%s3] sm:$0xff]
      %v1862 = vld [vmem:[%s3 + $0x8] sm:$0xff]
      %v1863 = vld [vmem:[%s3 + $0x10] sm:$0xff]
      %v1864 = vld [vmem:[%s3 + $0x18] sm:$0xff]
      %v1865 = vld [vmem:[%s3 + $0x20] sm:$0xff]
      %v1866 = vld [vmem:[%s3 + $0x28] sm:$0xff]
      %v1867 = vld [vmem:[%s3 + $0x30] sm:$0xff]
      %v1868 = vld [vmem:[%s3 + $0x38] sm:$0xff]
      %v1869 = vld [vmem:[%s3 + $0x40] sm:$0xff]
      %v1870 = vld [vmem:[%s4] sm:$0x1]
      %v1872 = vlaneseq
      %v1873 = vshrl.u32 %v1872, 7
      %v1874 = vsub.s32 0, %v1873
      %v1875 = vrot.slane %v1870, %v1874
      %vm1877 = vcmask 588800
      %v1879 = vsel %vm1877, %v1829, 0
      %v1882 = vsel %vm1877, %v1830, 0
      %v1885 = vsel %vm1877, %v1831, 0
      %v1888 = vsel %vm1877, %v1832, 0
      %v1891 = vsel %vm1877, %v1833, 0
      %v1894 = vsel %vm1877, %v1834, 0
      %v1897 = vsel %vm1877, %v1835, 0
      %v1900 = vsel %vm1877, %v1836, 0
      %v1903 = vsel %vm1877, %v1837, 0
      %v1906 = vsel %vm1877, %v1838, 0
      %v1909 = vsel %vm1877, %v1839, 0
      %v1912 = vsel %vm1877, %v1840, 0
      %v1915 = vsel %vm1877, %v1841, 0
      %v1918 = vsel %vm1877, %v1842, 0
      %v1921 = vsel %vm1877, %v1843, 0
      %v1924 = vsel %vm1877, %v1844, 0
      %v1927 = vsel %vm1877, %v1845, 0
      %v1930 = vsel %vm1877, %v1846, 0
      %v1933 = vsel %vm1877, %v1847, 0
      %v1936 = vsel %vm1877, %v1848, 0
      %v1939 = vsel %vm1877, %v1849, 0
      %v1942 = vsel %vm1877, %v1850, 0
      %v1945 = vsel %vm1877, %v1851, 0
      %v1948 = vsel %vm1877, %v1852, 0
      %v1951 = vsel %vm1877, %v1853, 0
      %v1954 = vsel %vm1877, %v1854, 0
      %v1957 = vsel %vm1877, %v1855, 0
      %v1960 = vsel %vm1877, %v1856, 0
      %v1963 = vsel %vm1877, %v1857, 0
      %v1966 = vsel %vm1877, %v1858, 0
      %v1969 = vsel %vm1877, %v1859, 0
      %v1972 = vsel %vm1877, %v1860, 0
      %1974 = vmatprep.subr.mxu0 0.0
      %1975 = vmatpush1.msra.mxu0 %v1861
      %1976 = vmatprep.subr.mxu0 0.0
      %1977 = vmatpush1.msra.mxu0 %v1862
      %1978 = vmatprep.subr.mxu0 0.0
      %1979 = vmatpush1.msra.mxu0 %v1863
      %1980 = vmatprep.subr.mxu0 0.0
      %1981 = vmatpush1.msra.mxu0 %v1864
      %1982 = vmatprep.subr.mxu0 0.0
      %1983 = vmatpush1.msra.mxu0 %v1865
      %1984 = vmatprep.subr.mxu0 0.0
      %1985 = vmatpush1.msra.mxu0 %v1866
      %1986 = vmatprep.subr.mxu0 0.0
      %1987 = vmatpush1.msra.mxu0 %v1867
      %1988 = vmatprep.subr.mxu0 0.0
      %1989 = vmatpush1.msra.mxu0 %v1868
      %1990 = vmatprep.subr.mxu0 0.0
      %1991 = vmatpush1.msra.mxu0 %v1869
      %1992 = vmatprep.subr.mxu0 0.0
      %1993 = vmatpush1.msra.mxu0 0.0
      %1994 = vmatprep.subr.mxu0 0.0
      %1995 = vmatpush1.msra.mxu0 0.0
      %1996 = vmatprep.subr.mxu0 0.0
      %1997 = vmatpush1.msra.mxu0 0.0
      %1998 = vmatprep.subr.mxu0 0.0
      %1999 = vmatpush1.msra.mxu0 0.0
      %2000 = vmatprep.subr.mxu0 0.0
      %2001 = vmatpush1.msra.mxu0 0.0
      %2002 = vmatprep.subr.mxu0 0.0
      %2003 = vmatpush1.msra.mxu0 0.0
      %2004 = vmatprep.subr.mxu0 0.0
      %2005 = vmatpush1.msra.mxu0 0.0
      %2006 = vmatprep.subr.mxu0 0.0
      %2007 = vmatpush1.msra.mxu0 0.0
      %2008 = vmatprep.subr.mxu0 0.0
      %2009 = vmatpush1.msra.mxu0 0.0
      %2010 = vmatprep.subr.mxu0 0.0
      %2011 = vmatpush1.msra.mxu0 0.0
      %2012 = vmatprep.subr.mxu0 0.0
      %2013 = vmatpush1.msra.mxu0 0.0
      %2014 = vmatprep.subr.mxu0 0.0
      %2015 = vmatpush1.msra.mxu0 0.0
      %2016 = vmatprep.subr.mxu0 0.0
      %2017 = vmatpush1.msra.mxu0 0.0
      %2018 = vmatprep.subr.mxu0 0.0
      %2019 = vmatpush1.msra.mxu0 0.0
      %2020 = vmatprep.subr.mxu0 0.0
      %2021 = vmatpush1.msra.mxu0 0.0
      %2022 = vmatprep.subr.mxu0 0.0
      %2023 = vmatpush1.msra.mxu0 0.0
      %2024 = vmatprep.subr.mxu0 0.0
      %2025 = vmatpush1.msra.mxu0 0.0
      %2026 = vmatprep.subr.mxu0 0.0
      %2027 = vmatpush1.msra.mxu0 0.0
      %2028 = vmatprep.subr.mxu0 0.0
      %2029 = vmatpush1.msra.mxu0 0.0
      %2030 = vmatprep.subr.mxu0 0.0
      %2031 = vmatpush1.msra.mxu0 0.0
      %2032 = vmatprep.subr.mxu0 0.0
      %2033 = vmatpush1.msra.mxu0 0.0
      %2034 = vmatprep.subr.mxu0 0.0
      %2035 = vmatpush1.msra.mxu0 0.0
      %2036 = vmatprep.subr.mxu0 0.0
      %2037 = vmatpush1.msra.mxu0 0.0
      %2038 = vmatprep.mubr.f32.mxu0 0.0
      %2039 = vmatmul.mubr.f32.gmra.mrb[0].mxu0 %v1879
      %v2040 = vpop.f32.mrb[0].mxu0
      %v2041 = vadd.f32 %v1875, %v2040
      %v2042 = vpop.f32.mrb[0].mxu0
      %2043 = vmatprep.mubr.f32.mxu0 0.0
      %2044 = vmatmul.mubr.f32.gmra.mrb[0].mxu0 %v1882
      %v2045 = vpop.f32.mrb[0].mxu0
      %v2046 = vadd.f32 %v1875, %v2045
      %v2047 = vpop.f32.mrb[0].mxu0
      %2048 = vmatprep.mubr.f32.mxu0 0.0
      %2049 = vmatmul.mubr.f32.gmra.mrb[0].mxu0 %v1885
      %v2050 = vpop.f32.mrb[0].mxu0
      %v2051 = vadd.f32 %v1875, %v2050
      %v2052 = vpop.f32.mrb[0].mxu0
      %2053 = vmatprep.mubr.f32.mxu0 0.0
      %2054 = vmatmul.mubr.f32.gmra.mrb[0].mxu0 %v1888
      %v2055 = vpop.f32.mrb[0].mxu0
      %v2056 = vadd.f32 %v1875, %v2055
      %v2057 = vpop.f32.mrb[0].mxu0
      %2058 = vmatprep.mubr.f32.mxu0 0.0
      %2059 = vmatmul.mubr.f32.gmra.mrb[0].mxu0 %v1891
      %v2060 = vpop.f32.mrb[0].mxu0
      %v2061 = vadd.f32 %v1875, %v2060
      %v2062 = vpop.f32.mrb[0].mxu0
      %2063 = vmatprep.mubr.f32.mxu0 0.0
      %2064 = vmatmul.mubr.f32.gmra.mrb[0].mxu0 %v1894
      %v2065 = vpop.f32.mrb[0].mxu0
      %v2066 = vadd.f32 %v1875, %v2065
      %v2067 = vpop.f32.mrb[0].mxu0
      %2068 = vmatprep.mubr.f32.mxu0 0.0
      %2069 = vmatmul.mubr.f32.gmra.mrb[0].mxu0 %v1897
      %v2070 = vpop.f32.mrb[0].mxu0
      %v2071 = vadd.f32 %v1875, %v2070
      %v2072 = vpop.f32.mrb[0].mxu0
      %2073 = vmatprep.mubr.f32.mxu0 0.0
      %2074 = vmatmul.mubr.f32.gmra.mrb[0].mxu0 %v1900
      %v2075 = vpop.f32.mrb[0].mxu0
      %v2076 = vadd.f32 %v1875, %v2075
      %v2077 = vpop.f32.mrb[0].mxu0
      %2078 = vmatprep.mubr.f32.mxu0 0.0
      %2079 = vmatmul.mubr.f32.gmra.mrb[0].mxu0 %v1903
      %v2080 = vpop.f32.mrb[0].mxu0
      %v2081 = vadd.f32 %v1875, %v2080
      %v2082 = vpop.f32.mrb[0].mxu0
      %2083 = vmatprep.mubr.f32.mxu0 0.0
      %2084 = vmatmul.mubr.f32.gmra.mrb[0].mxu0 %v1906
      %v2085 = vpop.f32.mrb[0].mxu0
      %v2086 = vadd.f32 %v1875, %v2085
      %v2087 = vpop.f32.mrb[0].mxu0
      %2088 = vmatprep.mubr.f32.mxu0 0.0
      %2089 = vmatmul.mubr.f32.gmra.mrb[0].mxu0 %v1909
      %v2090 = vpop.f32.mrb[0].mxu0
      %v2091 = vadd.f32 %v1875, %v2090
      %v2092 = vpop.f32.mrb[0].mxu0
      %2093 = vmatprep.mubr.f32.mxu0 0.0
      %2094 = vmatmul.mubr.f32.gmra.mrb[0].mxu0 %v1912
      %v2095 = vpop.f32.mrb[0].mxu0
      %v2096 = vadd.f32 %v1875, %v2095
      %v2097 = vpop.f32.mrb[0].mxu0
      %2098 = vmatprep.mubr.f32.mxu0 0.0
      %2099 = vmatmul.mubr.f32.gmra.mrb[0].mxu0 %v1915
      %v2100 = vpop.f32.mrb[0].mxu0
      %v2101 = vadd.f32 %v1875, %v2100
      %v2102 = vpop.f32.mrb[0].mxu0
      %2103 = vmatprep.mubr.f32.mxu0 0.0
      %2104 = vmatmul.mubr.f32.gmra.mrb[0].mxu0 %v1918
      %v2105 = vpop.f32.mrb[0].mxu0
      %v2106 = vadd.f32 %v1875, %v2105
      %v2107 = vpop.f32.mrb[0].mxu0
      %2108 = vmatprep.mubr.f32.mxu0 0.0
      %2109 = vmatmul.mubr.f32.gmra.mrb[0].mxu0 %v1921
      %v2110 = vpop.f32.mrb[0].mxu0
      %v2111 = vadd.f32 %v1875, %v2110
      %v2112 = vpop.f32.mrb[0].mxu0
      %2113 = vmatprep.mubr.f32.mxu0 0.0
      %2114 = vmatmul.mubr.f32.gmra.mrb[0].mxu0 %v1924
      %v2115 = vpop.f32.mrb[0].mxu0
      %v2116 = vadd.f32 %v1875, %v2115
      %v2117 = vpop.f32.mrb[0].mxu0
      %2118 = vmatprep.mubr.f32.mxu0 0.0
      %2119 = vmatmul.mubr.f32.gmra.mrb[0].mxu0 %v1927
      %v2120 = vpop.f32.mrb[0].mxu0
      %v2121 = vadd.f32 %v1875, %v2120
      %v2122 = vpop.f32.mrb[0].mxu0
      %2123 = vmatprep.mubr.f32.mxu0 0.0
      %2124 = vmatmul.mubr.f32.gmra.mrb[0].mxu0 %v1930
      %v2125 = vpop.f32.mrb[0].mxu0
      %v2126 = vadd.f32 %v1875, %v2125
      %v2127 = vpop.f32.mrb[0].mxu0
      %2128 = vmatprep.mubr.f32.mxu0 0.0
      %2129 = vmatmul.mubr.f32.gmra.mrb[0].mxu0 %v1933
      %v2130 = vpop.f32.mrb[0].mxu0
      %v2131 = vadd.f32 %v1875, %v2130
      %v2132 = vpop.f32.mrb[0].mxu0
      %2133 = vmatprep.mubr.f32.mxu0 0.0
      %2134 = vmatmul.mubr.f32.gmra.mrb[0].mxu0 %v1936
      %v2135 = vpop.f32.mrb[0].mxu0
      %v2136 = vadd.f32 %v1875, %v2135
      %v2137 = vpop.f32.mrb[0].mxu0
      %2138 = vmatprep.mubr.f32.mxu0 0.0
      %2139 = vmatmul.mubr.f32.gmra.mrb[0].mxu0 %v1939
      %v2140 = vpop.f32.mrb[0].mxu0
      %v2141 = vadd.f32 %v1875, %v2140
      %v2142 = vpop.f32.mrb[0].mxu0
      %2143 = vmatprep.mubr.f32.mxu0 0.0
      %2144 = vmatmul.mubr.f32.gmra.mrb[0].mxu0 %v1942
      %v2145 = vpop.f32.mrb[0].mxu0
      %v2146 = vadd.f32 %v1875, %v2145
      %v2147 = vpop.f32.mrb[0].mxu0
      %2148 = vmatprep.mubr.f32.mxu0 0.0
      %2149 = vmatmul.mubr.f32.gmra.mrb[0].mxu0 %v1945
      %v2150 = vpop.f32.mrb[0].mxu0
      %v2151 = vadd.f32 %v1875, %v2150
      %v2152 = vpop.f32.mrb[0].mxu0
      %2153 = vmatprep.mubr.f32.mxu0 0.0
      %2154 = vmatmul.mubr.f32.gmra.mrb[0].mxu0 %v1948
      %v2155 = vpop.f32.mrb[0].mxu0
      %v2156 = vadd.f32 %v1875, %v2155
      %v2157 = vpop.f32.mrb[0].mxu0
      %2158 = vmatprep.mubr.f32.mxu0 0.0
      %2159 = vmatmul.mubr.f32.gmra.mrb[0].mxu0 %v1951
      %v2160 = vpop.f32.mrb[0].mxu0
      %v2161 = vadd.f32 %v1875, %v2160
      %v2162 = vpop.f32.mrb[0].mxu0
      %2163 = vmatprep.mubr.f32.mxu0 0.0
      %2164 = vmatmul.mubr.f32.gmra.mrb[0].mxu0 %v1954
      %v2165 = vpop.f32.mrb[0].mxu0
      %v2166 = vadd.f32 %v1875, %v2165
      %v2167 = vpop.f32.mrb[0].mxu0
      %2168 = vmatprep.mubr.f32.mxu0 0.0
      %2169 = vmatmul.mubr.f32.gmra.mrb[0].mxu0 %v1957
      %v2170 = vpop.f32.mrb[0].mxu0
      %v2171 = vadd.f32 %v1875, %v2170
      %v2172 = vpop.f32.mrb[0].mxu0
      %2173 = vmatprep.mubr.f32.mxu0 0.0
      %2174 = vmatmul.mubr.f32.gmra.mrb[0].mxu0 %v1960
      %v2175 = vpop.f32.mrb[0].mxu0
      %v2176 = vadd.f32 %v1875, %v2175
      %v2177 = vpop.f32.mrb[0].mxu0
      %2178 = vmatprep.mubr.f32.mxu0 0.0
      %2179 = vmatmul.mubr.f32.gmra.mrb[0].mxu0 %v1963
      %v2180 = vpop.f32.mrb[0].mxu0
      %v2181 = vadd.f32 %v1875, %v2180
      %v2182 = vpop.f32.mrb[0].mxu0
      %2183 = vmatprep.mubr.f32.mxu0 0.0
      %2184 = vmatmul.mubr.f32.gmra.mrb[0].mxu0 %v1966
      %v2185 = vpop.f32.mrb[0].mxu0
      %v2186 = vadd.f32 %v1875, %v2185
      %v2187 = vpop.f32.mrb[0].mxu0
      %2188 = vmatprep.mubr.f32.mxu0 0.0
      %2189 = vmatmul.mubr.f32.gmra.mrb[0].mxu0 %v1969
      %v2190 = vpop.f32.mrb[0].mxu0
      %v2191 = vadd.f32 %v1875, %v2190
      %v2192 = vpop.f32.mrb[0].mxu0
      %2193 = vmatprep.mubr.f32.mxu0 0.0
      %2194 = vmatmul.mubr.f32.gmra.mrb[0].mxu0 %v1972
      %v2195 = vpop.f32.mrb[0].mxu0
      %v2196 = vadd.f32 %v1875, %v2195
      %v2197 = vpop.f32.mrb[0].mxu0
      %2198 = vdwg.mxu0
      %2199 = vst.msk [vmem:[%s273] sm:$0xff] %vm416, %v2041
      %2200 = vst.msk [vmem:[%s273 + $0x8] sm:$0xff] %vm416, %v2046
      %2201 = vst.msk [vmem:[%s273 + $0x10] sm:$0xff] %vm416, %v2051
      %2202 = vst.msk [vmem:[%s273 + $0x18] sm:$0xff] %vm416, %v2056
      %2203 = vst.msk [vmem:[%s273 + $0x20] sm:$0xff] %vm416, %v2061
      %2204 = vst.msk [vmem:[%s273 + $0x28] sm:$0xff] %vm416, %v2066
      %2205 = vst.msk [vmem:[%s273 + $0x30] sm:$0xff] %vm416, %v2071
      %2206 = vst.msk [vmem:[%s273 + $0x38] sm:$0xff] %vm416, %v2076
      %2207 = vst.msk [vmem:[%s273 + $0x40] sm:$0xff] %vm416, %v2081
      %2208 = vst.msk [vmem:[%s273 + $0x48] sm:$0xff] %vm416, %v2086
      %2209 = vst.msk [vmem:[%s273 + $0x50] sm:$0xff] %vm416, %v2091
      %2210 = vst.msk [vmem:[%s273 + $0x58] sm:$0xff] %vm416, %v2096
      %2211 = vst.msk [vmem:[%s273 + $0x60] sm:$0xff] %vm416, %v2101
      %2212 = vst.msk [vmem:[%s273 + $0x68] sm:$0xff] %vm416, %v2106
      %2213 = vst.msk [vmem:[%s273 + $0x70] sm:$0xff] %vm416, %v2111
      %2214 = vst.msk [vmem:[%s273 + $0x78] sm:$0xff] %vm416, %v2116
      %2215 = vst.msk [vmem:[%s273 + $0x80] sm:$0xff] %vm416, %v2121
      %2216 = vst.msk [vmem:[%s273 + $0x88] sm:$0xff] %vm416, %v2126
      %2217 = vst.msk [vmem:[%s273 + $0x90] sm:$0xff] %vm416, %v2131
      %2218 = vst.msk [vmem:[%s273 + $0x98] sm:$0xff] %vm416, %v2136
      %2219 = vst.msk [vmem:[%s273 + $0xa0] sm:$0xff] %vm416, %v2141
      %2220 = vst.msk [vmem:[%s273 + $0xa8] sm:$0xff] %vm416, %v2146
      %2221 = vst.msk [vmem:[%s273 + $0xb0] sm:$0xff] %vm416, %v2151
      %2222 = vst.msk [vmem:[%s273 + $0xb8] sm:$0xff] %vm416, %v2156
      %2223 = vst.msk [vmem:[%s273 + $0xc0] sm:$0xff] %vm416, %v2161
      %2224 = vst.msk [vmem:[%s273 + $0xc8] sm:$0xff] %vm416, %v2166
      %2225 = vst.msk [vmem:[%s273 + $0xd0] sm:$0xff] %vm416, %v2171
      %2226 = vst.msk [vmem:[%s273 + $0xd8] sm:$0xff] %vm416, %v2176
      %2227 = vst.msk [vmem:[%s273 + $0xe0] sm:$0xff] %vm416, %v2181
      %2228 = vst.msk [vmem:[%s273 + $0xe8] sm:$0xff] %vm416, %v2186
      %2229 = vst.msk [vmem:[%s273 + $0xf0] sm:$0xff] %vm416, %v2191
      %2230 = vst.msk [vmem:[%s273 + $0xf8] sm:$0xff] %vm416, %v2196
      %p2231 = scmp.eq.s32.totalorder %s19, 0
      // Predicated region
      $region41: #{downsample_forward.4} parent=39 // pred_check
        %p2232 = pneg %p2231
      $region42: #{downsample_forward.4} parent=39 // pred_check_branch
        %2234 = sbr.rel (%p2232) target = $region44
      $region43: #{downsample_forward.4} parent=39 // pred_region
        %vm2235 = vcmask 57344
        %2236 = vst.msk [vmem:[%s6] sm:$0x1] %vm2235, 0.0
        %2237 = vst.msk [vmem:[%s7] sm:$0x1] %vm2235, 0.0
      $region44: #{downsample_forward.4} parent=39 // pred_fallthru
        _
      %v2238 = vld [vmem:[%s6] sm:$0x1]
      %v2239 = vsel %vm416, %v2041, 0.0
      %v2240 = vsel %vm416, %v2046, 0.0
      %v2241 = vadd.f32 %v2239, %v2240
      %v2242 = vsel %vm416, %v2051, 0.0
      %v2243 = vadd.f32 %v2241, %v2242
      %v2244 = vsel %vm416, %v2056, 0.0
      %v2245 = vadd.f32 %v2243, %v2244
      %v2246 = vsel %vm416, %v2061, 0.0
      %v2247 = vadd.f32 %v2245, %v2246
      %v2248 = vsel %vm416, %v2066, 0.0
      %v2249 = vadd.f32 %v2247, %v2248
      %v2250 = vsel %vm416, %v2071, 0.0
      %v2251 = vadd.f32 %v2249, %v2250
      %v2252 = vsel %vm416, %v2076, 0.0
      %v2253 = vadd.f32 %v2251, %v2252
      %v2254 = vsel %vm416, %v2081, 0.0
      %v2255 = vadd.f32 %v2253, %v2254
      %v2256 = vsel %vm416, %v2086, 0.0
      %v2257 = vadd.f32 %v2255, %v2256
      %v2258 = vsel %vm416, %v2091, 0.0
      %v2259 = vadd.f32 %v2257, %v2258
      %v2260 = vsel %vm416, %v2096, 0.0
      %v2261 = vadd.f32 %v2259, %v2260
      %v2262 = vsel %vm416, %v2101, 0.0
      %v2263 = vadd.f32 %v2261, %v2262
      %v2264 = vsel %vm416, %v2106, 0.0
      %v2265 = vadd.f32 %v2263, %v2264
      %v2266 = vsel %vm416, %v2111, 0.0
      %v2267 = vadd.f32 %v2265, %v2266
      %v2268 = vsel %vm416, %v2116, 0.0
      %v2269 = vadd.f32 %v2267, %v2268
      %v2270 = vsel %vm416, %v2121, 0.0
      %v2271 = vadd.f32 %v2269, %v2270
      %v2272 = vsel %vm416, %v2126, 0.0
      %v2273 = vadd.f32 %v2271, %v2272
      %v2274 = vsel %vm416, %v2131, 0.0
      %v2275 = vadd.f32 %v2273, %v2274
      %v2276 = vsel %vm416, %v2136, 0.0
      %v2277 = vadd.f32 %v2275, %v2276
      %v2278 = vsel %vm416, %v2141, 0.0
      %v2279 = vadd.f32 %v2277, %v2278
      %v2280 = vsel %vm416, %v2146, 0.0
      %v2281 = vadd.f32 %v2279, %v2280
      %v2282 = vsel %vm416, %v2151, 0.0
      %v2283 = vadd.f32 %v2281, %v2282
      %v2284 = vsel %vm416, %v2156, 0.0
      %v2285 = vadd.f32 %v2283, %v2284
      %v2286 = vsel %vm416, %v2161, 0.0
      %v2287 = vadd.f32 %v2285, %v2286
      %v2288 = vsel %vm416, %v2166, 0.0
      %v2289 = vadd.f32 %v2287, %v2288
      %v2290 = vsel %vm416, %v2171, 0.0
      %v2291 = vadd.f32 %v2289, %v2290
      %v2292 = vsel %vm416, %v2176, 0.0
      %v2293 = vadd.f32 %v2291, %v2292
      %v2294 = vsel %vm416, %v2181, 0.0
      %v2295 = vadd.f32 %v2293, %v2294
      %v2296 = vsel %vm416, %v2186, 0.0
      %v2297 = vadd.f32 %v2295, %v2296
      %v2298 = vsel %vm416, %v2191, 0.0
      %v2299 = vadd.f32 %v2297, %v2298
      %v2300 = vsel %vm416, %v2196, 0.0
      %v2301 = vadd.f32 %v2299, %v2300
      %v2302 = vrot.slane %v2301, 4
      %v2303 = vadd.f32 %v2301, %v2302
      %v2304 = vrot.slane %v2303, 2
      %v2305 = vadd.f32 %v2303, %v2304
      %v2306 = vrot.slane %v2305, 1
      %v2307 = vadd.f32 %v2305, %v2306
      %v2308 = vadd.f32 %v2238, %v2307
      %vm2309 = vcmask 57344
      %2310 = vst.msk [vmem:[%s6] sm:$0x1] %vm2309, %v2308
      %v2311 = vld [vmem:[%s7] sm:$0x1]
      %v2312 = vmul.f32 %v2041, %v2041
      %v2313 = vmul.f32 %v2046, %v2046
      %v2314 = vmul.f32 %v2051, %v2051
      %v2315 = vmul.f32 %v2056, %v2056
      %v2316 = vmul.f32 %v2061, %v2061
      %v2317 = vmul.f32 %v2066, %v2066
      %v2318 = vmul.f32 %v2071, %v2071
      %v2319 = vmul.f32 %v2076, %v2076
      %v2320 = vmul.f32 %v2081, %v2081
      %v2321 = vmul.f32 %v2086, %v2086
      %v2322 = vmul.f32 %v2091, %v2091
      %v2323 = vmul.f32 %v2096, %v2096
      %v2324 = vmul.f32 %v2101, %v2101
      %v2325 = vmul.f32 %v2106, %v2106
      %v2326 = vmul.f32 %v2111, %v2111
      %v2327 = vmul.f32 %v2116, %v2116
      %v2328 = vmul.f32 %v2121, %v2121
      %v2329 = vmul.f32 %v2126, %v2126
      %v2330 = vmul.f32 %v2131, %v2131
      %v2331 = vmul.f32 %v2136, %v2136
      %v2332 = vmul.f32 %v2141, %v2141
      %v2333 = vmul.f32 %v2146, %v2146
      %v2334 = vmul.f32 %v2151, %v2151
      %v2335 = vmul.f32 %v2156, %v2156
      %v2336 = vmul.f32 %v2161, %v2161
      %v2337 = vmul.f32 %v2166, %v2166
      %v2338 = vmul.f32 %v2171, %v2171
      %v2339 = vmul.f32 %v2176, %v2176
      %v2340 = vmul.f32 %v2181, %v2181
      %v2341 = vmul.f32 %v2186, %v2186
      %v2342 = vmul.f32 %v2191, %v2191
      %v2343 = vmul.f32 %v2196, %v2196
      %v2344 = vsel %vm416, %v2312, 0.0
      %v2345 = vsel %vm416, %v2313, 0.0
      %v2346 = vadd.f32 %v2344, %v2345
      %v2347 = vsel %vm416, %v2314, 0.0
      %v2348 = vadd.f32 %v2346, %v2347
      %v2349 = vsel %vm416, %v2315, 0.0
      %v2350 = vadd.f32 %v2348, %v2349
      %v2351 = vsel %vm416, %v2316, 0.0
      %v2352 = vadd.f32 %v2350, %v2351
      %v2353 = vsel %vm416, %v2317, 0.0
      %v2354 = vadd.f32 %v2352, %v2353
      %v2355 = vsel %vm416, %v2318, 0.0
      %v2356 = vadd.f32 %v2354, %v2355
      %v2357 = vsel %vm416, %v2319, 0.0
      %v2358 = vadd.f32 %v2356, %v2357
      %v2359 = vsel %vm416, %v2320, 0.0
      %v2360 = vadd.f32 %v2358, %v2359
      %v2361 = vsel %vm416, %v2321, 0.0
      %v2362 = vadd.f32 %v2360, %v2361
      %v2363 = vsel %vm416, %v2322, 0.0
      %v2364 = vadd.f32 %v2362, %v2363
      %v2365 = vsel %vm416, %v2323, 0.0
      %v2366 = vadd.f32 %v2364, %v2365
      %v2367 = vsel %vm416, %v2324, 0.0
      %v2368 = vadd.f32 %v2366, %v2367
      %v2369 = vsel %vm416, %v2325, 0.0
      %v2370 = vadd.f32 %v2368, %v2369
      %v2371 = vsel %vm416, %v2326, 0.0
      %v2372 = vadd.f32 %v2370, %v2371
      %v2373 = vsel %vm416, %v2327, 0.0
      %v2374 = vadd.f32 %v2372, %v2373
      %v2375 = vsel %vm416, %v2328, 0.0
      %v2376 = vadd.f32 %v2374, %v2375
      %v2377 = vsel %vm416, %v2329, 0.0
      %v2378 = vadd.f32 %v2376, %v2377
      %v2379 = vsel %vm416, %v2330, 0.0
      %v2380 = vadd.f32 %v2378, %v2379
      %v2381 = vsel %vm416, %v2331, 0.0
      %v2382 = vadd.f32 %v2380, %v2381
      %v2383 = vsel %vm416, %v2332, 0.0
      %v2384 = vadd.f32 %v2382, %v2383
      %v2385 = vsel %vm416, %v2333, 0.0
      %v2386 = vadd.f32 %v2384, %v2385
      %v2387 = vsel %vm416, %v2334, 0.0
      %v2388 = vadd.f32 %v2386, %v2387
      %v2389 = vsel %vm416, %v2335, 0.0
      %v2390 = vadd.f32 %v2388, %v2389
      %v2391 = vsel %vm416, %v2336, 0.0
      %v2392 = vadd.f32 %v2390, %v2391
      %v2393 = vsel %vm416, %v2337, 0.0
      %v2394 = vadd.f32 %v2392, %v2393
      %v2395 = vsel %vm416, %v2338, 0.0
      %v2396 = vadd.f32 %v2394, %v2395
      %v2397 = vsel %vm416, %v2339, 0.0
      %v2398 = vadd.f32 %v2396, %v2397
      %v2399 = vsel %vm416, %v2340, 0.0
      %v2400 = vadd.f32 %v2398, %v2399
      %v2401 = vsel %vm416, %v2341, 0.0
      %v2402 = vadd.f32 %v2400, %v2401
      %v2403 = vsel %vm416, %v2342, 0.0
      %v2404 = vadd.f32 %v2402, %v2403
      %v2405 = vsel %vm416, %v2343, 0.0
      %v2406 = vadd.f32 %v2404, %v2405
      %v2407 = vrot.slane %v2406, 4
      %v2408 = vadd.f32 %v2406, %v2407
      %v2409 = vrot.slane %v2408, 2
      %v2410 = vadd.f32 %v2408, %v2409
      %v2411 = vrot.slane %v2410, 1
      %v2412 = vadd.f32 %v2410, %v2411
      %v2413 = vadd.f32 %v2311, %v2412
      %2414 = vst.msk [vmem:[%s7] sm:$0x1] %vm2309, %v2413
      %p2415 = scmp.lt.s32.totalorder %s19, 1
      %s2416 = scalar_select %p2415, %s19, 1
      %s2417 = smul.addr %s2416, 32
      %s2418 = smul.addr %s2417, 8
      %s2419 = scalar_lea.vmem %s5, %s2418
      // Predicated region
      $region45: #{downsample_forward.4} parent=39 // pred_check
        %p2420 = pneg %p147
      $region46: #{downsample_forward.4} parent=39 // pred_check_branch
        %2422 = sbr.rel (%p2420) target = $region48
      $region47: #{downsample_forward.4} parent=39 // pred_region
        _
      $region48: #{downsample_forward.4} parent=39 // pred_fallthru
        _
      // Predicated region
      $region49: #{downsample_forward.4} parent=39 // pred_check
        %p2423 = pneg %p168
      $region50: #{downsample_forward.4} parent=39 // pred_check_branch
        %2425 = sbr.rel (%p2423) target = $region52
      $region51: #{downsample_forward.4} parent=39 // pred_region
        _
      $region52: #{downsample_forward.4} parent=39 // pred_fallthru
        _
      // Predicated region
      $region53: #{downsample_forward.4} parent=39 // pred_check
        %p2426 = pneg %p189
      $region54: #{downsample_forward.4} parent=39 // pred_check_branch
        %2428 = sbr.rel (%p2426) target = $region56
      $region55: #{downsample_forward.4} parent=39 // pred_region
        _
      $region56: #{downsample_forward.4} parent=39 // pred_fallthru
        _
      // Predicated region
      $region57: #{downsample_forward.4} parent=39 // pred_check
        %p2429 = pneg %p168
      $region58: #{downsample_forward.4} parent=39 // pred_check_branch
        %2431 = sbr.rel (%p2429) target = $region60
      $region59: #{downsample_forward.4} parent=39 // pred_region
        _
      $region60: #{downsample_forward.4} parent=39 // pred_fallthru
        _
      // Predicated region
      $region61: #{downsample_forward.4} parent=39 // pred_check
        %p2432 = pneg %p189
      $region62: #{downsample_forward.4} parent=39 // pred_check_branch
        %2434 = sbr.rel (%p2432) target = $region64
      $region63: #{downsample_forward.4} parent=39 // pred_region
        _
      $region64: #{downsample_forward.4} parent=39 // pred_fallthru
        _
    $region40: #{downsample_forward.4} parent=5 // pred_fallthru
      _
    %p2435 = scmp.le.s32.totalorder 2, %s14
    // Predicated region
    $region65: #{downsample_forward.4} parent=5 // pred_check
      %p2436 = pneg %p2435
    $region66: #{downsample_forward.4} parent=5 // pred_check_branch
      %2438 = sbr.rel (%p2436) target = $region68
    $region67: #{downsample_forward.4} parent=5 // pred_region
      %s2439 = ssub.s32 %s14, 2
      // Predicated region
      $region69: #{downsample_forward.4} parent=67 // pred_check
        %p2440 = pneg %p153
      $region70: #{downsample_forward.4} parent=67 // pred_check_branch
        %2442 = sbr.rel (%p2440) target = $region72
      $region71: #{downsample_forward.4} parent=67 // pred_region
        %p2443 = scmp.lt.s32.totalorder %s20, 1
        %s2444 = scalar_select %p2443, %s20, 1
        %s2445 = smul.addr %s2444, 32
        %s2446 = smul.addr %s2445, 8
        %s2447 = scalar_lea.vmem %s5, %s2446
      $region72: #{downsample_forward.4} parent=67 // pred_fallthru
        _
    $region68: #{downsample_forward.4} parent=5 // pred_fallthru
      _
  $region6: #{downsample_forward.4} parent=0 // loop_footer
    %s18 = sadd.s32 1, %s14
  $region7: #{downsample_forward.4} parent=0 // loop_footer_branch
    %13 = sbr.rel target = $region3
  $region8: #{downsample_forward.4} parent=0 // loop_exit
    _

// kernel: downsample_forward.3
$region0: #{downsample_forward.3}
  #allocation0 [shape = 'u32[]', space=smem, size = 0x4, offset = 0x4, fixed_abs, tag = 'smem constant byte address 0x4 - core index']
  #allocation1 [shape = 'u32[144,128]{1,0:T(1,128)}', space=vmem, size = 0x12000, scoped, tag = 'internal scratch']
  #allocation2 [shape = 'f32[1,18,16,4]{3,2,1,0:T(8,128)}', space=vmem, size = 0x24000, scoped, tag = 'scratch operand']
  %s0 = inlined_call_operand.vmem [shape: f32[2,16,16,4], index: 0, kind: input, shape index: {}]
  %s1 = inlined_call_operand.vmem [shape: f32[1,4], index: 1, kind: input, shape index: {}]
  %s2 = inlined_call_operand.vmem [shape: f32[1,4], index: 2, kind: input, shape index: {}]
  %s3 = inlined_call_operand.vmem [shape: f32[36,8], index: 3, kind: input, shape index: {}]
  %s4 = inlined_call_operand.vmem [shape: f32[1,8], index: 4, kind: input, shape index: {}]
  %s5 = inlined_call_operand.vmem [shape: f32[2,16,16,8], index: 5, kind: output, shape index: {0}]
  %s6 = inlined_call_operand.vmem [shape: f32[1,8], index: 6, kind: output, shape index: {1}]
  %s7 = inlined_call_operand.vmem [shape: f32[1,8], index: 7, kind: output, shape index: {2}]
  %8 = xla_tuple %s5, %s6, %s7
  %s9 = sld [smem:[#allocation0]]
  $region73: #{downsample_forward.3} parent=0
    _
  %s11 = ssub.s32 1, %s9
  %s12 = scalar_select 0, %s11, %s9
  loop: start=0, step=1, limit=4
  $region2: #{downsample_forward.3} parent=0 // loop_pre_header
    _
  $region3: #{downsample_forward.3} parent=0 // loop_header
    %s14 = sphi 0, %s18
    %p15 = scmp.ge.s32.totalorder %s14, 4
    %s24 = sphi 0, %s26
    %s27 = sphi 0, %s24
    %s28 = sphi 0, %s27
    %s44 = sphi 0, %s28
    %s48 = sphi 0, %s48
    %s50 = sphi 0, %s48
    %s51 = sphi 0, %s50
    %s65 = sphi 0, %s51
    %s69 = sphi 0, %s69
    %s71 = sphi 0, %s69
    %s72 = sphi 0, %s71
    %s86 = sphi 0, %s72
    %s90 = sphi 0, %s90
    %s92 = sphi 0, %s90
    %s93 = sphi 0, %s92
    %s107 = sphi 0, %s93
    %s111 = sphi 0, %s111
    %s113 = sphi 0, %s111
    %s114 = sphi 0, %s113
    %s128 = sphi 0, %s114
    %s134 = sphi 0, %s136
    %s137 = sphi 0, %s134
    %s138 = sphi 0, %s137
    %s154 = sphi 0, %s138
    %s158 = sphi 0, %s158
    %s160 = sphi 0, %s158
    %s161 = sphi 0, %s160
    %s175 = sphi 0, %s161
    %s179 = sphi 0, %s179
    %s181 = sphi 0, %s179
    %s182 = sphi 0, %s181
    %s196 = sphi 0, %s182
  $region4: #{downsample_forward.3} parent=0 // loop_header_branch
    %17 = sbr.rel (%p15) target = $region8
  $region5: #{downsample_forward.3} parent=0 // loop_body
    %s19 = ssub.s32 %s14, 1
    %s20 = ssub.s32 %s14, 2
    %s21 = sadd.s32 %s14, 1
    %s22 = ssub.s32 %s14, %s21
    %p23 = scmp.eq.s32.totalorder %s22, 0
    %s25 = sadd.s32 %s24, 1
    %s26 = scalar_select %p23, %s24, %s25
    %p29 = pneg %p23
    %p30 = scmp.eq.s32.totalorder %s14, 1
    %p31 = por %p29, %p30
    %p32 = scmp.ne.s32.totalorder %s24, %s27
    %p33 = scmp.eq.s32.totalorder %s14, 0
    %p34 = por %p32, %p33
    %p35 = scmp.ne.s32.totalorder %s24, %s27
    %p36 = scmp.eq.s32.totalorder %s19, 1
    %p37 = por %p35, %p36
    %p38 = scmp.ne.s32.totalorder %s27, %s28
    %p39 = scmp.eq.s32.totalorder %s19, 0
    %p40 = por %p38, %p39
    %p41 = scmp.ne.s32.totalorder %s27, %s28
    %p42 = scmp.eq.s32.totalorder %s20, 1
    %p43 = por %p41, %p42
    %p45 = scmp.ne.s32.totalorder %s28, %s44
    %p46 = scmp.eq.s32.totalorder %s20, 0
    %p47 = por %p45, %p46
    %s49 = sadd.s32 %s48, 1
    %p52 = scmp.eq.s32.totalorder %s14, 1
    %p53 = scmp.ne.s32.totalorder %s48, %s50
    %p54 = scmp.eq.s32.totalorder %s14, 0
    %p55 = por %p53, %p54
    %p56 = scmp.ne.s32.totalorder %s48, %s50
    %p57 = scmp.eq.s32.totalorder %s19, 1
    %p58 = por %p56, %p57
    %p59 = scmp.ne.s32.totalorder %s50, %s51
    %p60 = scmp.eq.s32.totalorder %s19, 0
    %p61 = por %p59, %p60
    %p62 = scmp.ne.s32.totalorder %s50, %s51
    %p63 = scmp.eq.s32.totalorder %s20, 1
    %p64 = por %p62, %p63
    %p66 = scmp.ne.s32.totalorder %s51, %s65
    %p67 = scmp.eq.s32.totalorder %s20, 0
    %p68 = por %p66, %p67
    %s70 = sadd.s32 %s69, 1
    %p73 = scmp.eq.s32.totalorder %s14, 1
    %p74 = scmp.ne.s32.totalorder %s69, %s71
    %p75 = scmp.eq.s32.totalorder %s14, 0
    %p76 = por %p74, %p75
    %p77 = scmp.ne.s32.totalorder %s69, %s71
    %p78 = scmp.eq.s32.totalorder %s19, 1
    %p79 = por %p77, %p78
    %p80 = scmp.ne.s32.totalorder %s71, %s72
    %p81 = scmp.eq.s32.totalorder %s19, 0
    %p82 = por %p80, %p81
    %p83 = scmp.ne.s32.totalorder %s71, %s72
    %p84 = scmp.eq.s32.totalorder %s20, 1
    %p85 = por %p83, %p84
    %p87 = scmp.ne.s32.totalorder %s72, %s86
    %p88 = scmp.eq.s32.totalorder %s20, 0
    %p89 = por %p87, %p88
    %s91 = sadd.s32 %s90, 1
    %p94 = scmp.eq.s32.totalorder %s14, 1
    %p95 = scmp.ne.s32.totalorder %s90, %s92
    %p96 = scmp.eq.s32.totalorder %s14, 0
    %p97 = por %p95, %p96
    %p98 = scmp.ne.s32.totalorder %s90, %s92
    %p99 = scmp.eq.s32.totalorder %s19, 1
    %p100 = por %p98, %p99
    %p101 = scmp.ne.s32.totalorder %s92, %s93
    %p102 = scmp.eq.s32.totalorder %s19, 0
    %p103 = por %p101, %p102
    %p104 = scmp.ne.s32.totalorder %s92, %s93
    %p105 = scmp.eq.s32.totalorder %s20, 1
    %p106 = por %p104, %p105
    %p108 = scmp.ne.s32.totalorder %s93, %s107
    %p109 = scmp.eq.s32.totalorder %s20, 0
    %p110 = por %p108, %p109
    %s112 = sadd.s32 %s111, 1
    %p115 = scmp.eq.s32.totalorder %s14, 1
    %p116 = scmp.ne.s32.totalorder %s111, %s113
    %p117 = scmp.eq.s32.totalorder %s14, 0
    %p118 = por %p116, %p117
    %p119 = scmp.ne.s32.totalorder %s111, %s113
    %p120 = scmp.eq.s32.totalorder %s19, 1
    %p121 = por %p119, %p120
    %p122 = scmp.ne.s32.totalorder %s113, %s114
    %p123 = scmp.eq.s32.totalorder %s19, 0
    %p124 = por %p122, %p123
    %p125 = scmp.ne.s32.totalorder %s113, %s114
    %p126 = scmp.eq.s32.totalorder %s20, 1
    %p127 = por %p125, %p126
    %p129 = scmp.ne.s32.totalorder %s114, %s128
    %p130 = scmp.eq.s32.totalorder %s20, 0
    %p131 = por %p129, %p130
    %s132 = ssub.s32 %s14, %s21
    %p133 = scmp.eq.s32.totalorder %s132, 0
    %s135 = sadd.s32 %s134, 1
    %s136 = scalar_select %p133, %s134, %s135
    %p139 = pneg %p133
    %p140 = scmp.eq.s32.totalorder %s14, 1
    %p141 = por %p139, %p140
    %p142 = scmp.ne.s32.totalorder %s134, %s137
    %p143 = scmp.eq.s32.totalorder %s14, 0
    %p144 = por %p142, %p143
    %p145 = scmp.ne.s32.totalorder %s134, %s137
    %p146 = scmp.eq.s32.totalorder %s19, 1
    %p147 = por %p145, %p146
    %p148 = scmp.ne.s32.totalorder %s137, %s138
    %p149 = scmp.eq.s32.totalorder %s19, 0
    %p150 = por %p148, %p149
    %p151 = scmp.ne.s32.totalorder %s137, %s138
    %p152 = scmp.eq.s32.totalorder %s20, 1
    %p153 = por %p151, %p152
    %p155 = scmp.ne.s32.totalorder %s138, %s154
    %p156 = scmp.eq.s32.totalorder %s20, 0
    %p157 = por %p155, %p156
    %s159 = sadd.s32 %s158, 1
    %p162 = scmp.eq.s32.totalorder %s14, 1
    %p163 = scmp.ne.s32.totalorder %s158, %s160
    %p164 = scmp.eq.s32.totalorder %s14, 0
    %p165 = por %p163, %p164
    %p166 = scmp.ne.s32.totalorder %s158, %s160
    %p167 = scmp.eq.s32.totalorder %s19, 1
    %p168 = por %p166, %p167
    %p169 = scmp.ne.s32.totalorder %s160, %s161
    %p170 = scmp.eq.s32.totalorder %s19, 0
    %p171 = por %p169, %p170
    %p172 = scmp.ne.s32.totalorder %s160, %s161
    %p173 = scmp.eq.s32.totalorder %s20, 1
    %p174 = por %p172, %p173
    %p176 = scmp.ne.s32.totalorder %s161, %s175
    %p177 = scmp.eq.s32.totalorder %s20, 0
    %p178 = por %p176, %p177
    %s180 = sadd.s32 %s179, 1
    %p183 = scmp.eq.s32.totalorder %s14, 1
    %p184 = scmp.ne.s32.totalorder %s179, %s181
    %p185 = scmp.eq.s32.totalorder %s14, 0
    %p186 = por %p184, %p185
    %p187 = scmp.ne.s32.totalorder %s179, %s181
    %p188 = scmp.eq.s32.totalorder %s19, 1
    %p189 = por %p187, %p188
    %p190 = scmp.ne.s32.totalorder %s181, %s182
    %p191 = scmp.eq.s32.totalorder %s19, 0
    %p192 = por %p190, %p191
    %p193 = scmp.ne.s32.totalorder %s181, %s182
    %p194 = scmp.eq.s32.totalorder %s20, 1
    %p195 = por %p193, %p194
    %p197 = scmp.ne.s32.totalorder %s182, %s196
    %p198 = scmp.eq.s32.totalorder %s20, 0
    %p199 = por %p197, %p198
    %p200 = scmp.le.s32.totalorder 1, %s14
    %p201 = scmp.lt.s32.totalorder %s14, 3
    %p202 = pnand %p200, %p201
    %p203 = pneg %p202
    // Predicated region
    $region9: #{downsample_forward.3} parent=5 // pred_check
      _
    $region10: #{downsample_forward.3} parent=5 // pred_check_branch
      %205 = sbr.rel (%p202) target = $region12
    $region11: #{downsample_forward.3} parent=5 // pred_region
      %s206 = ssub.s32 %s14, 1
      // Predicated region
      $region13: #{downsample_forward.3} parent=11 // pred_check
        %p207 = pneg %p61
      $region14: #{downsample_forward.3} parent=11 // pred_check_branch
        %209 = sbr.rel (%p207) target = $region16
      $region15: #{downsample_forward.3} parent=11 // pred_region
        _
      $region16: #{downsample_forward.3} parent=11 // pred_fallthru
        _
      // Predicated region
      $region17: #{downsample_forward.3} parent=11 // pred_check
        %p210 = pneg %p82
      $region18: #{downsample_forward.3} parent=11 // pred_check_branch
        %212 = sbr.rel (%p210) target = $region20
      $region19: #{downsample_forward.3} parent=11 // pred_region
        _
      $region20: #{downsample_forward.3} parent=11 // pred_fallthru
        _
      // Predicated region
      $region21: #{downsample_forward.3} parent=11 // pred_check
        %p213 = pneg %p103
      $region22: #{downsample_forward.3} parent=11 // pred_check_branch
        %215 = sbr.rel (%p213) target = $region24
      $region23: #{downsample_forward.3} parent=11 // pred_region
        _
      $region24: #{downsample_forward.3} parent=11 // pred_fallthru
        _
      // Predicated region
      $region25: #{downsample_forward.3} parent=11 // pred_check
        %p216 = pneg %p124
      $region26: #{downsample_forward.3} parent=11 // pred_check_branch
        %218 = sbr.rel (%p216) target = $region28
      $region27: #{downsample_forward.3} parent=11 // pred_region
        _
      $region28: #{downsample_forward.3} parent=11 // pred_fallthru
        _
    $region12: #{downsample_forward.3} parent=5 // pred_fallthru
      _
    %p219 = scmp.lt.s32.totalorder %s14, 2
    // Predicated region
    $region29: #{downsample_forward.3} parent=5 // pred_check
      %p220 = pneg %p219
    $region30: #{downsample_forward.3} parent=5 // pred_check_branch
      %222 = sbr.rel (%p220) target = $region32
    $region31: #{downsample_forward.3} parent=5 // pred_region
      // Predicated region
      $region33: #{downsample_forward.3} parent=31 // pred_check
        %p223 = pneg %p34
      $region34: #{downsample_forward.3} parent=31 // pred_check_branch
        %225 = sbr.rel (%p223) target = $region36
      $region35: #{downsample_forward.3} parent=31 // pred_region
        %p226 = scmp.lt.s32.totalorder %s14, 1
        %s227 = scalar_select %p226, %s14, 1
        %s228 = smul.addr %s227, 32
        %s229 = smul.addr %s228, 8
        %s230 = scalar_lea.vmem %s0, %s229
      $region36: #{downsample_forward.3} parent=31 // pred_fallthru
        _
    $region32: #{downsample_forward.3} parent=5 // pred_fallthru
      _
    %p231 = scmp.le.s32.totalorder 1, %s14
    %p232 = scmp.lt.s32.totalorder %s14, 3
    %p233 = pnand %p231, %p232
    %p234 = pneg %p233
    // Predicated region
    $region37: #{downsample_forward.3} parent=5 // pred_check
      _
    $region38: #{downsample_forward.3} parent=5 // pred_check_branch
      %236 = sbr.rel (%p233) target = $region40
    $region39: #{downsample_forward.3} parent=5 // pred_region
      %s237 = ssub.s32 %s14, 1
      %p238 = scmp.lt.s32.totalorder %s19, 1
      %s239 = scalar_select %p238, %s19, 1
      %s240 = smul.addr %s239, 32
      %s241 = smul.addr %s240, 8
      %s242 = scalar_lea.vmem %s0, %s241
      %p243 = pneg %p40
      %p244 = pneg %p37
      %p245 = pneg %p61
      %p246 = pneg %p58
      %p247 = pneg %p82
      %p248 = pneg %p79
      %p249 = pneg %p103
      %p250 = pneg %p100
      %p251 = pneg %p124
      %p252 = pneg %p121
      %p253 = pneg %p150
      %p254 = pneg %p147
      %p255 = scmp.lt.s32.totalorder %s19, 1
      %s256 = scalar_select %p255, %s19, 1
      %s257 = smul.addr %s256, 32
      %s258 = smul.addr %s257, 8
      %s259 = scalar_lea.vmem %s5, %s258
      %p260 = pneg %p171
      %p261 = pneg %p168
      %p262 = pneg %p192
      %p263 = pneg %p189
      %p264 = scmp.lt.s32.totalorder %s19, 1
      %s265 = scalar_select %p264, %s19, 1
      %s266 = smul.addr %s265, 32
      %s267 = smul.addr %s266, 8
      %s268 = scalar_lea.vmem %s0, %s267
      %p269 = scmp.lt.s32.totalorder %s19, 1
      %s270 = scalar_select %p269, %s19, 1
      %s271 = smul.addr %s270, 32
      %s272 = smul.addr %s271, 8
      %s273 = scalar_lea.vmem %s5, %s272
      %v274 = vld [vmem:[%s268] sm:$0xff]
      %v275 = vld [vmem:[%s268 + $0x8] sm:$0xff]
      %v276 = vld [vmem:[%s268 + $0x10] sm:$0xff]
      %v277 = vld [vmem:[%s268 + $0x18] sm:$0xff]
      %v278 = vld [vmem:[%s268 + $0x20] sm:$0xff]
      %v279 = vld [vmem:[%s268 + $0x28] sm:$0xff]
      %v280 = vld [vmem:[%s268 + $0x30] sm:$0xff]
      %v281 = vld [vmem:[%s268 + $0x38] sm:$0xff]
      %v282 = vld [vmem:[%s268 + $0x40] sm:$0xff]
      %v283 = vld [vmem:[%s268 + $0x48] sm:$0xff]
      %v284 = vld [vmem:[%s268 + $0x50] sm:$0xff]
      %v285 = vld [vmem:[%s268 + $0x58] sm:$0xff]
      %v286 = vld [vmem:[%s268 + $0x60] sm:$0xff]
      %v287 = vld [vmem:[%s268 + $0x68] sm:$0xff]
      %v288 = vld [vmem:[%s268 + $0x70] sm:$0xff]
      %v289 = vld [vmem:[%s268 + $0x78] sm:$0xff]
      %v290 = vld [vmem:[%s268 + $0x80] sm:$0xff]
      %v291 = vld [vmem:[%s268 + $0x88] sm:$0xff]
      %v292 = vld [vmem:[%s268 + $0x90] sm:$0xff]
      %v293 = vld [vmem:[%s268 + $0x98] sm:$0xff]
      %v294 = vld [vmem:[%s268 + $0xa0] sm:$0xff]
      %v295 = vld [vmem:[%s268 + $0xa8] sm:$0xff]
      %v296 = vld [vmem:[%s268 + $0xb0] sm:$0xff]
      %v297 = vld [vmem:[%s268 + $0xb8] sm:$0xff]
      %v298 = vld [vmem:[%s268 + $0xc0] sm:$0xff]
      %v299 = vld [vmem:[%s268 + $0xc8] sm:$0xff]
      %v300 = vld [vmem:[%s268 + $0xd0] sm:$0xff]
      %v301 = vld [vmem:[%s268 + $0xd8] sm:$0xff]
      %v302 = vld [vmem:[%s268 + $0xe0] sm:$0xff]
      %v303 = vld [vmem:[%s268 + $0xe8] sm:$0xff]
      %v304 = vld [vmem:[%s268 + $0xf0] sm:$0xff]
      %v305 = vld [vmem:[%s268 + $0xf8] sm:$0xff]
      %vm306 = vcmask 31744
      %307 = vst.msk [vmem:[#allocation2] sm:$0xff] %vm306, 0.0
      %308 = vst.msk [vmem:[#allocation2 + $0x8] sm:$0xff] %vm306, 0.0
      %s309 = scalar_lea.vmem [#allocation2], 272
      %310 = vst.msk [vmem:[%s309] sm:$0xff] %vm306, 0.0
      %311 = vst.msk [vmem:[%s309 + $0x8] sm:$0xff] %vm306, 0.0
      %s312 = scalar_lea.vmem [#allocation2], 16
      %313 = vst.msk [vmem:[%s312] sm:$0xff] %vm306, %v274
      %314 = vst.msk [vmem:[%s312 + $0x8] sm:$0xff] %vm306, %v275
      %315 = vst.msk [vmem:[%s312 + $0x10] sm:$0xff] %vm306, %v276
      %316 = vst.msk [vmem:[%s312 + $0x18] sm:$0xff] %vm306, %v277
      %317 = vst.msk [vmem:[%s312 + $0x20] sm:$0xff] %vm306, %v278
      %318 = vst.msk [vmem:[%s312 + $0x28] sm:$0xff] %vm306, %v279
      %319 = vst.msk [vmem:[%s312 + $0x30] sm:$0xff] %vm306, %v280
      %320 = vst.msk [vmem:[%s312 + $0x38] sm:$0xff] %vm306, %v281
      %321 = vst.msk [vmem:[%s312 + $0x40] sm:$0xff] %vm306, %v282
      %322 = vst.msk [vmem:[%s312 + $0x48] sm:$0xff] %vm306, %v283
      %323 = vst.msk [vmem:[%s312 + $0x50] sm:$0xff] %vm306, %v284
      %324 = vst.msk [vmem:[%s312 + $0x58] sm:$0xff] %vm306, %v285
      %325 = vst.msk [vmem:[%s312 + $0x60] sm:$0xff] %vm306, %v286
      %326 = vst.msk [vmem:[%s312 + $0x68] sm:$0xff] %vm306, %v287
      %327 = vst.msk [vmem:[%s312 + $0x70] sm:$0xff] %vm306, %v288
      %328 = vst.msk [vmem:[%s312 + $0x78] sm:$0xff] %vm306, %v289
      %329 = vst.msk [vmem:[%s312 + $0x80] sm:$0xff] %vm306, %v290
      %330 = vst.msk [vmem:[%s312 + $0x88] sm:$0xff] %vm306, %v291
      %331 = vst.msk [vmem:[%s312 + $0x90] sm:$0xff] %vm306, %v292
      %332 = vst.msk [vmem:[%s312 + $0x98] sm:$0xff] %vm306, %v293
      %333 = vst.msk [vmem:[%s312 + $0xa0] sm:$0xff] %vm306, %v294
      %334 = vst.msk [vmem:[%s312 + $0xa8] sm:$0xff] %vm306, %v295
      %335 = vst.msk [vmem:[%s312 + $0xb0] sm:$0xff] %vm306, %v296
      %336 = vst.msk [vmem:[%s312 + $0xb8] sm:$0xff] %vm306, %v297
      %337 = vst.msk [vmem:[%s312 + $0xc0] sm:$0xff] %vm306, %v298
      %338 = vst.msk [vmem:[%s312 + $0xc8] sm:$0xff] %vm306, %v299
      %339 = vst.msk [vmem:[%s312 + $0xd0] sm:$0xff] %vm306, %v300
      %340 = vst.msk [vmem:[%s312 + $0xd8] sm:$0xff] %vm306, %v301
      %341 = vst.msk [vmem:[%s312 + $0xe0] sm:$0xff] %vm306, %v302
      %342 = vst.msk [vmem:[%s312 + $0xe8] sm:$0xff] %vm306, %v303
      %343 = vst.msk [vmem:[%s312 + $0xf0] sm:$0xff] %vm306, %v304
      %344 = vst.msk [vmem:[%s312 + $0xf8] sm:$0xff] %vm306, %v305
      %v345 = vld [vmem:[#allocation2] sm:$0xff]
      %v346 = vld [vmem:[#allocation2 + $0x8] sm:$0xff]
      %v347 = vld [vmem:[#allocation2 + $0x10] sm:$0xff]
      %v348 = vld [vmem:[#allocation2 + $0x18] sm:$0xff]
      %v349 = vld [vmem:[#allocation2 + $0x20] sm:$0xff]
      %v350 = vld [vmem:[#allocation2 + $0x28] sm:$0xff]
      %v351 = vld [vmem:[#allocation2 + $0x30] sm:$0xff]
      %v352 = vld [vmem:[#allocation2 + $0x38] sm:$0xff]
      %v353 = vld [vmem:[#allocation2 + $0x40] sm:$0xff]
      %v354 = vld [vmem:[#allocation2 + $0x48] sm:$0xff]
      %v355 = vld [vmem:[#allocation2 + $0x50] sm:$0xff]
      %v356 = vld [vmem:[#allocation2 + $0x58] sm:$0xff]
      %v357 = vld [vmem:[#allocation2 + $0x60] sm:$0xff]
      %v358 = vld [vmem:[#allocation2 + $0x68] sm:$0xff]
      %v359 = vld [vmem:[#allocation2 + $0x70] sm:$0xff]
      %v360 = vld [vmem:[#allocation2 + $0x78] sm:$0xff]
      %v361 = vld [vmem:[#allocation2 + $0x80] sm:$0xff]
      %v362 = vld [vmem:[#allocation2 + $0x88] sm:$0xff]
      %v363 = vld [vmem:[#allocation2 + $0x90] sm:$0xff]
      %v364 = vld [vmem:[#allocation2 + $0x98] sm:$0xff]
      %v365 = vld [vmem:[#allocation2 + $0xa0] sm:$0xff]
      %v366 = vld [vmem:[#allocation2 + $0xa8] sm:$0xff]
      %v367 = vld [vmem:[#allocation2 + $0xb0] sm:$0xff]
      %v368 = vld [vmem:[#allocation2 + $0xb8] sm:$0xff]
      %v369 = vld [vmem:[#allocation2 + $0xc0] sm:$0xff]
      %v370 = vld [vmem:[#allocation2 + $0xc8] sm:$0xff]
      %v371 = vld [vmem:[#allocation2 + $0xd0] sm:$0xff]
      %v372 = vld [vmem:[#allocation2 + $0xd8] sm:$0xff]
      %v373 = vld [vmem:[#allocation2 + $0xe0] sm:$0xff]
      %v374 = vld [vmem:[#allocation2 + $0xe8] sm:$0xff]
      %v375 = vld [vmem:[#allocation2 + $0xf0] sm:$0xff]
      %v376 = vld [vmem:[#allocation2 + $0xf8] sm:$0xff]
      %v377 = vld [vmem:[#allocation2 + $0x100] sm:$0xff]
      %v378 = vld [vmem:[#allocation2 + $0x108] sm:$0xff]
      %v379 = vld [vmem:[#allocation2 + $0x110] sm:$0xff]
      %v380 = vld [vmem:[#allocation2 + $0x118] sm:$0xff]
      %v381 = vlaneseq
      %v382 = vshrl.u32 %v381, 7
      %v383 = vadd.s32 %v382, 8
      %vm384 = vcmp.ne.s32.totalorder %v382, 0
      %vm385 = vcmp.ne.s32.totalorder %v383, 0
      %vm386 = vcmp.ne.s32.totalorder %v382, 15
      %vm387 = vcmp.ne.s32.totalorder %v383, 15
      %v388 = vrot.slane %v345, 7
      %v389 = vrot.slane %v347, 7
      %v390 = vrot.slane %v349, 7
      %v391 = vrot.slane %v351, 7
      %v392 = vrot.slane %v353, 7
      %v393 = vrot.slane %v355, 7
      %v394 = vrot.slane %v357, 7
      %v395 = vrot.slane %v359, 7
      %v396 = vrot.slane %v361, 7
      %v397 = vrot.slane %v363, 7
      %v398 = vrot.slane %v365, 7
      %v399 = vrot.slane %v367, 7
      %v400 = vrot.slane %v369, 7
      %v401 = vrot.slane %v371, 7
      %v402 = vrot.slane %v373, 7
      %v403 = vrot.slane %v375, 7
      %v404 = vrot.slane %v346, 7
      %v405 = vrot.slane %v348, 7
      %v406 = vrot.slane %v350, 7
      %v407 = vrot.slane %v352, 7
      %v408 = vrot.slane %v354, 7
      %v409 = vrot.slane %v356, 7
      %v410 = vrot.slane %v358, 7
      %v411 = vrot.slane %v360, 7
      %v412 = vrot.slane %v362, 7
      %v413 = vrot.slane %v364, 7
      %v414 = vrot.slane %v366, 7
      %v415 = vrot.slane %v368, 7
      %v416 = vrot.slane %v370, 7
      %v417 = vrot.slane %v372, 7
      %v418 = vrot.slane %v374, 7
      %v419 = vrot.slane %v376, 7
      %vm420 = vcmp.lt.s32.totalorder %v382, 1
      %v421 = vsel %vm420, %v388, %v404
      %v422 = vsel %vm420, %v389, %v405
      %v423 = vsel %vm420, %v390, %v406
      %v424 = vsel %vm420, %v391, %v407
      %v425 = vsel %vm420, %v392, %v408
      %v426 = vsel %vm420, %v393, %v409
      %v427 = vsel %vm420, %v394, %v410
      %v428 = vsel %vm420, %v395, %v411
      %v429 = vsel %vm420, %v396, %v412
      %v430 = vsel %vm420, %v397, %v413
      %v431 = vsel %vm420, %v398, %v414
      %v432 = vsel %vm420, %v399, %v415
      %v433 = vsel %vm420, %v400, %v416
      %v434 = vsel %vm420, %v401, %v417
      %v435 = vsel %vm420, %v402, %v418
      %v436 = vsel %vm420, %v403, %v419
      %v437 = vsel %vm420, %v404, %v388
      %v438 = vsel %vm420, %v405, %v389
      %v439 = vsel %vm420, %v406, %v390
      %v440 = vsel %vm420, %v407, %v391
      %v441 = vsel %vm420, %v408, %v392
      %v442 = vsel %vm420, %v409, %v393
      %v443 = vsel %vm420, %v410, %v394
      %v444 = vsel %vm420, %v411, %v395
      %v445 = vsel %vm420, %v412, %v396
      %v446 = vsel %vm420, %v413, %v397
      %v447 = vsel %vm420, %v414, %v398
      %v448 = vsel %vm420, %v415, %v399
      %v449 = vsel %vm420, %v416, %v400
      %v450 = vsel %vm420, %v417, %v401
      %v451 = vsel %vm420, %v418, %v402
      %v452 = vsel %vm420, %v419, %v403
      %v453 = vsel %vm384, 1, 0
      %v454 = vsel %vm385, 1, 0
      %vm455 = vcmp.eq.s32.totalorder %v453, 1
      %vm456 = vcmp.eq.s32.totalorder %v454, 1
      %v457 = vsel %vm455, %v437, 0.0
      %v458 = vsel %vm456, %v421, 0.0
      %v459 = vsel %vm455, %v438, 0.0
      %v460 = vsel %vm456, %v422, 0.0
      %v461 = vsel %vm455, %v439, 0.0
      %v462 = vsel %vm456, %v423, 0.0
      %v463 = vsel %vm455, %v440, 0.0
      %v464 = vsel %vm456, %v424, 0.0
      %v465 = vsel %vm455, %v441, 0.0
      %v466 = vsel %vm456, %v425, 0.0
      %v467 = vsel %vm455, %v442, 0.0
      %v468 = vsel %vm456, %v426, 0.0
      %v469 = vsel %vm455, %v443, 0.0
      %v470 = vsel %vm456, %v427, 0.0
      %v471 = vsel %vm455, %v444, 0.0
      %v472 = vsel %vm456, %v428, 0.0
      %v473 = vsel %vm455, %v445, 0.0
      %v474 = vsel %vm456, %v429, 0.0
      %v475 = vsel %vm455, %v446, 0.0
      %v476 = vsel %vm456, %v430, 0.0
      %v477 = vsel %vm455, %v447, 0.0
      %v478 = vsel %vm456, %v431, 0.0
      %v479 = vsel %vm455, %v448, 0.0
      %v480 = vsel %vm456, %v432, 0.0
      %v481 = vsel %vm455, %v449, 0.0
      %v482 = vsel %vm456, %v433, 0.0
      %v483 = vsel %vm455, %v450, 0.0
      %v484 = vsel %vm456, %v434, 0.0
      %v485 = vsel %vm455, %v451, 0.0
      %v486 = vsel %vm456, %v435, 0.0
      %v487 = vsel %vm455, %v452, 0.0
      %v488 = vsel %vm456, %v436, 0.0
      %v489 = vrot.slane %v345, 1
      %v490 = vrot.slane %v347, 1
      %v491 = vrot.slane %v349, 1
      %v492 = vrot.slane %v351, 1
      %v493 = vrot.slane %v353, 1
      %v494 = vrot.slane %v355, 1
      %v495 = vrot.slane %v357, 1
      %v496 = vrot.slane %v359, 1
      %v497 = vrot.slane %v361, 1
      %v498 = vrot.slane %v363, 1
      %v499 = vrot.slane %v365, 1
      %v500 = vrot.slane %v367, 1
      %v501 = vrot.slane %v369, 1
      %v502 = vrot.slane %v371, 1
      %v503 = vrot.slane %v373, 1
      %v504 = vrot.slane %v375, 1
      %v505 = vrot.slane %v346, 1
      %v506 = vrot.slane %v348, 1
      %v507 = vrot.slane %v350, 1
      %v508 = vrot.slane %v352, 1
      %v509 = vrot.slane %v354, 1
      %v510 = vrot.slane %v356, 1
      %v511 = vrot.slane %v358, 1
      %v512 = vrot.slane %v360, 1
      %v513 = vrot.slane %v362, 1
      %v514 = vrot.slane %v364, 1
      %v515 = vrot.slane %v366, 1
      %v516 = vrot.slane %v368, 1
      %v517 = vrot.slane %v370, 1
      %v518 = vrot.slane %v372, 1
      %v519 = vrot.slane %v374, 1
      %v520 = vrot.slane %v376, 1
      %vm521 = vcmp.lt.s32.totalorder %v382, 7
      %v522 = vsel %vm521, %v489, %v505
      %v523 = vsel %vm521, %v490, %v506
      %v524 = vsel %vm521, %v491, %v507
      %v525 = vsel %vm521, %v492, %v508
      %v526 = vsel %vm521, %v493, %v509
      %v527 = vsel %vm521, %v494, %v510
      %v528 = vsel %vm521, %v495, %v511
      %v529 = vsel %vm521, %v496, %v512
      %v530 = vsel %vm521, %v497, %v513
      %v531 = vsel %vm521, %v498, %v514
      %v532 = vsel %vm521, %v499, %v515
      %v533 = vsel %vm521, %v500, %v516
      %v534 = vsel %vm521, %v501, %v517
      %v535 = vsel %vm521, %v502, %v518
      %v536 = vsel %vm521, %v503, %v519
      %v537 = vsel %vm521, %v504, %v520
      %v538 = vsel %vm521, %v505, %v489
      %v539 = vsel %vm521, %v506, %v490
      %v540 = vsel %vm521, %v507, %v491
      %v541 = vsel %vm521, %v508, %v492
      %v542 = vsel %vm521, %v509, %v493
      %v543 = vsel %vm521, %v510, %v494
      %v544 = vsel %vm521, %v511, %v495
      %v545 = vsel %vm521, %v512, %v496
      %v546 = vsel %vm521, %v513, %v497
      %v547 = vsel %vm521, %v514, %v498
      %v548 = vsel %vm521, %v515, %v499
      %v549 = vsel %vm521, %v516, %v500
      %v550 = vsel %vm521, %v517, %v501
      %v551 = vsel %vm521, %v518, %v502
      %v552 = vsel %vm521, %v519, %v503
      %v553 = vsel %vm521, %v520, %v504
      %v554 = vsel %vm386, 1, 0
      %v555 = vsel %vm387, 1, 0
      %vm556 = vcmp.eq.s32.totalorder %v554, 1
      %vm557 = vcmp.eq.s32.totalorder %v555, 1
      %v558 = vsel %vm556, %v522, 0.0
      %v559 = vsel %vm557, %v538, 0.0
      %v560 = vsel %vm556, %v523, 0.0
      %v561 = vsel %vm557, %v539, 0.0
      %v562 = vsel %vm556, %v524, 0.0
      %v563 = vsel %vm557, %v540, 0.0
      %v564 = vsel %vm556, %v525, 0.0
      %v565 = vsel %vm557, %v541, 0.0
      %v566 = vsel %vm556, %v526, 0.0
      %v567 = vsel %vm557, %v542, 0.0
      %v568 = vsel %vm556, %v527, 0.0
      %v569 = vsel %vm557, %v543, 0.0
      %v570 = vsel %vm556, %v528, 0.0
      %v571 = vsel %vm557, %v544, 0.0
      %v572 = vsel %vm556, %v529, 0.0
      %v573 = vsel %vm557, %v545, 0.0
      %v574 = vsel %vm556, %v530, 0.0
      %v575 = vsel %vm557, %v546, 0.0
      %v576 = vsel %vm556, %v531, 0.0
      %v577 = vsel %vm557, %v547, 0.0
      %v578 = vsel %vm556, %v532, 0.0
      %v579 = vsel %vm557, %v548, 0.0
      %v580 = vsel %vm556, %v533, 0.0
      %v581 = vsel %vm557, %v549, 0.0
      %v582 = vsel %vm556, %v534, 0.0
      %v583 = vsel %vm557, %v550, 0.0
      %v584 = vsel %vm556, %v535, 0.0
      %v585 = vsel %vm557, %v551, 0.0
      %v586 = vsel %vm556, %v536, 0.0
      %v587 = vsel %vm557, %v552, 0.0
      %v588 = vsel %vm556, %v537, 0.0
      %v589 = vsel %vm557, %v553, 0.0
      %v590 = vrot.slane %v377, 7
      %v591 = vrot.slane %v378, 7
      %v592 = vsel %vm420, %v590, %v591
      %v593 = vsel %vm420, %v591, %v590
      %v594 = vsel %vm455, %v593, 0.0
      %v595 = vsel %vm456, %v592, 0.0
      %v596 = vrot.slane %v377, 1
      %v597 = vrot.slane %v378, 1
      %v598 = vsel %vm521, %v596, %v597
      %v599 = vsel %vm521, %v597, %v596
      %v600 = vsel %vm556, %v598, 0.0
      %v601 = vsel %vm557, %v599, 0.0
      %v602 = vrot.slane %v379, 7
      %v603 = vrot.slane %v380, 7
      %v604 = vsel %vm420, %v602, %v603
      %v605 = vsel %vm420, %v603, %v602
      %v606 = vsel %vm455, %v605, 0.0
      %v607 = vsel %vm456, %v604, 0.0
      %v608 = vrot.slane %v379, 1
      %v609 = vrot.slane %v380, 1
      %v610 = vsel %vm521, %v608, %v609
      %v611 = vsel %vm521, %v609, %v608
      %v612 = vsel %vm556, %v610, 0.0
      %v613 = vsel %vm557, %v611, 0.0
      %646 = vrot.lane.b32.xlu0 %v345, 4
      %v647 = vpop.permute.xlu0 %646
      %648 = vrot.lane.b32.xlu0 %v346, 4
      %v649 = vpop.permute.xlu0 %648
      %650 = vrot.lane.b32.xlu0 %v347, 4
      %v651 = vpop.permute.xlu0 %650
      %652 = vrot.lane.b32.xlu0 %v348, 4
      %v653 = vpop.permute.xlu0 %652
      %654 = vrot.lane.b32.xlu0 %v349, 4
      %v655 = vpop.permute.xlu0 %654
      %656 = vrot.lane.b32.xlu0 %v350, 4
      %v657 = vpop.permute.xlu0 %656
      %658 = vrot.lane.b32.xlu0 %v351, 4
      %v659 = vpop.permute.xlu0 %658
      %660 = vrot.lane.b32.xlu0 %v352, 4
      %v661 = vpop.permute.xlu0 %660
      %662 = vrot.lane.b32.xlu0 %v353, 4
      %v663 = vpop.permute.xlu0 %662
      %664 = vrot.lane.b32.xlu0 %v354, 4
      %v665 = vpop.permute.xlu0 %664
      %666 = vrot.lane.b32.xlu0 %v355, 4
      %v667 = vpop.permute.xlu0 %666
      %668 = vrot.lane.b32.xlu0 %v356, 4
      %v669 = vpop.permute.xlu0 %668
      %670 = vrot.lane.b32.xlu0 %v357, 4
      %v671 = vpop.permute.xlu0 %670
      %672 = vrot.lane.b32.xlu0 %v358, 4
      %v673 = vpop.permute.xlu0 %672
      %674 = vrot.lane.b32.xlu0 %v359, 4
      %v675 = vpop.permute.xlu0 %674
      %676 = vrot.lane.b32.xlu0 %v360, 4
      %v677 = vpop.permute.xlu0 %676
      %678 = vrot.lane.b32.xlu0 %v361, 4
      %v679 = vpop.permute.xlu0 %678
      %680 = vrot.lane.b32.xlu0 %v362, 4
      %v681 = vpop.permute.xlu0 %680
      %682 = vrot.lane.b32.xlu0 %v363, 4
      %v683 = vpop.permute.xlu0 %682
      %684 = vrot.lane.b32.xlu0 %v364, 4
      %v685 = vpop.permute.xlu0 %684
      %686 = vrot.lane.b32.xlu0 %v365, 4
      %v687 = vpop.permute.xlu0 %686
      %688 = vrot.lane.b32.xlu0 %v366, 4
      %v689 = vpop.permute.xlu0 %688
      %690 = vrot.lane.b32.xlu0 %v367, 4
      %v691 = vpop.permute.xlu0 %690
      %692 = vrot.lane.b32.xlu0 %v368, 4
      %v693 = vpop.permute.xlu0 %692
      %694 = vrot.lane.b32.xlu0 %v369, 4
      %v695 = vpop.permute.xlu0 %694
      %696 = vrot.lane.b32.xlu0 %v370, 4
      %v697 = vpop.permute.xlu0 %696
      %698 = vrot.lane.b32.xlu0 %v371, 4
      %v699 = vpop.permute.xlu0 %698
      %700 = vrot.lane.b32.xlu0 %v372, 4
      %v701 = vpop.permute.xlu0 %700
      %702 = vrot.lane.b32.xlu0 %v373, 4
      %v703 = vpop.permute.xlu0 %702
      %704 = vrot.lane.b32.xlu0 %v374, 4
      %v705 = vpop.permute.xlu0 %704
      %706 = vrot.lane.b32.xlu0 %v375, 4
      %v707 = vpop.permute.xlu0 %706
      %708 = vrot.lane.b32.xlu0 %v376, 4
      %v709 = vpop.permute.xlu0 %708
      %774 = vrot.lane.b32.xlu0 %v558, 8
      %v775 = vpop.permute.xlu0 %774
      %776 = vrot.lane.b32.xlu0 %v559, 8
      %v777 = vpop.permute.xlu0 %776
      %778 = vrot.lane.b32.xlu0 %v560, 8
      %v779 = vpop.permute.xlu0 %778
      %780 = vrot.lane.b32.xlu0 %v561, 8
      %v781 = vpop.permute.xlu0 %780
      %782 = vrot.lane.b32.xlu0 %v562, 8
      %v783 = vpop.permute.xlu0 %782
      %784 = vrot.lane.b32.xlu0 %v563, 8
      %v785 = vpop.permute.xlu0 %784
      %786 = vrot.lane.b32.xlu0 %v564, 8
      %v787 = vpop.permute.xlu0 %786
      %788 = vrot.lane.b32.xlu0 %v565, 8
      %v789 = vpop.permute.xlu0 %788
      %790 = vrot.lane.b32.xlu0 %v566, 8
      %v791 = vpop.permute.xlu0 %790
      %792 = vrot.lane.b32.xlu0 %v567, 8
      %v793 = vpop.permute.xlu0 %792
      %794 = vrot.lane.b32.xlu0 %v568, 8
      %v795 = vpop.permute.xlu0 %794
      %796 = vrot.lane.b32.xlu0 %v569, 8
      %v797 = vpop.permute.xlu0 %796
      %798 = vrot.lane.b32.xlu0 %v570, 8
      %v799 = vpop.permute.xlu0 %798
      %800 = vrot.lane.b32.xlu0 %v571, 8
      %v801 = vpop.permute.xlu0 %800
      %802 = vrot.lane.b32.xlu0 %v572, 8
      %v803 = vpop.permute.xlu0 %802
      %804 = vrot.lane.b32.xlu0 %v573, 8
      %v805 = vpop.permute.xlu0 %804
      %806 = vrot.lane.b32.xlu0 %v574, 8
      %v807 = vpop.permute.xlu0 %806
      %808 = vrot.lane.b32.xlu0 %v575, 8
      %v809 = vpop.permute.xlu0 %808
      %810 = vrot.lane.b32.xlu0 %v576, 8
      %v811 = vpop.permute.xlu0 %810
      %812 = vrot.lane.b32.xlu0 %v577, 8
      %v813 = vpop.permute.xlu0 %812
      %814 = vrot.lane.b32.xlu0 %v578, 8
      %v815 = vpop.permute.xlu0 %814
      %816 = vrot.lane.b32.xlu0 %v579, 8
      %v817 = vpop.permute.xlu0 %816
      %818 = vrot.lane.b32.xlu0 %v580, 8
      %v819 = vpop.permute.xlu0 %818
      %820 = vrot.lane.b32.xlu0 %v581, 8
      %v821 = vpop.permute.xlu0 %820
      %822 = vrot.lane.b32.xlu0 %v582, 8
      %v823 = vpop.permute.xlu0 %822
      %824 = vrot.lane.b32.xlu0 %v583, 8
      %v825 = vpop.permute.xlu0 %824
      %826 = vrot.lane.b32.xlu0 %v584, 8
      %v827 = vpop.permute.xlu0 %826
      %828 = vrot.lane.b32.xlu0 %v585, 8
      %v829 = vpop.permute.xlu0 %828
      %830 = vrot.lane.b32.xlu0 %v586, 8
      %v831 = vpop.permute.xlu0 %830
      %832 = vrot.lane.b32.xlu0 %v587, 8
      %v833 = vpop.permute.xlu0 %832
      %834 = vrot.lane.b32.xlu0 %v588, 8
      %v835 = vpop.permute.xlu0 %834
      %836 = vrot.lane.b32.xlu0 %v589, 8
      %v837 = vpop.permute.xlu0 %836
      %902 = vrot.lane.b32.xlu0 %v459, 12
      %v903 = vpop.permute.xlu0 %902
      %904 = vrot.lane.b32.xlu0 %v460, 12
      %v905 = vpop.permute.xlu0 %904
      %906 = vrot.lane.b32.xlu0 %v461, 12
      %v907 = vpop.permute.xlu0 %906
      %908 = vrot.lane.b32.xlu0 %v462, 12
      %v909 = vpop.permute.xlu0 %908
      %910 = vrot.lane.b32.xlu0 %v463, 12
      %v911 = vpop.permute.xlu0 %910
      %912 = vrot.lane.b32.xlu0 %v464, 12
      %v913 = vpop.permute.xlu0 %912
      %914 = vrot.lane.b32.xlu0 %v465, 12
      %v915 = vpop.permute.xlu0 %914
      %916 = vrot.lane.b32.xlu0 %v466, 12
      %v917 = vpop.permute.xlu0 %916
      %918 = vrot.lane.b32.xlu0 %v467, 12
      %v919 = vpop.permute.xlu0 %918
      %920 = vrot.lane.b32.xlu0 %v468, 12
      %v921 = vpop.permute.xlu0 %920
      %922 = vrot.lane.b32.xlu0 %v469, 12
      %v923 = vpop.permute.xlu0 %922
      %924 = vrot.lane.b32.xlu0 %v470, 12
      %v925 = vpop.permute.xlu0 %924
      %926 = vrot.lane.b32.xlu0 %v471, 12
      %v927 = vpop.permute.xlu0 %926
      %928 = vrot.lane.b32.xlu0 %v472, 12
      %v929 = vpop.permute.xlu0 %928
      %930 = vrot.lane.b32.xlu0 %v473, 12
      %v931 = vpop.permute.xlu0 %930
      %932 = vrot.lane.b32.xlu0 %v474, 12
      %v933 = vpop.permute.xlu0 %932
      %934 = vrot.lane.b32.xlu0 %v475, 12
      %v935 = vpop.permute.xlu0 %934
      %936 = vrot.lane.b32.xlu0 %v476, 12
      %v937 = vpop.permute.xlu0 %936
      %938 = vrot.lane.b32.xlu0 %v477, 12
      %v939 = vpop.permute.xlu0 %938
      %940 = vrot.lane.b32.xlu0 %v478, 12
      %v941 = vpop.permute.xlu0 %940
      %942 = vrot.lane.b32.xlu0 %v479, 12
      %v943 = vpop.permute.xlu0 %942
      %944 = vrot.lane.b32.xlu0 %v480, 12
      %v945 = vpop.permute.xlu0 %944
      %946 = vrot.lane.b32.xlu0 %v481, 12
      %v947 = vpop.permute.xlu0 %946
      %948 = vrot.lane.b32.xlu0 %v482, 12
      %v949 = vpop.permute.xlu0 %948
      %950 = vrot.lane.b32.xlu0 %v483, 12
      %v951 = vpop.permute.xlu0 %950
      %952 = vrot.lane.b32.xlu0 %v484, 12
      %v953 = vpop.permute.xlu0 %952
      %954 = vrot.lane.b32.xlu0 %v485, 12
      %v955 = vpop.permute.xlu0 %954
      %956 = vrot.lane.b32.xlu0 %v486, 12
      %v957 = vpop.permute.xlu0 %956
      %958 = vrot.lane.b32.xlu0 %v487, 12
      %v959 = vpop.permute.xlu0 %958
      %960 = vrot.lane.b32.xlu0 %v488, 12
      %v961 = vpop.permute.xlu0 %960
      %962 = vrot.lane.b32.xlu0 %v594, 12
      %v963 = vpop.permute.xlu0 %962
      %964 = vrot.lane.b32.xlu0 %v595, 12
      %v965 = vpop.permute.xlu0 %964
      %1000 = vrot.lane.b32.xlu0 %v347, 16
      %v1001 = vpop.permute.xlu0 %1000
      %1002 = vrot.lane.b32.xlu0 %v348, 16
      %v1003 = vpop.permute.xlu0 %1002
      %1004 = vrot.lane.b32.xlu0 %v349, 16
      %v1005 = vpop.permute.xlu0 %1004
      %1006 = vrot.lane.b32.xlu0 %v350, 16
      %v1007 = vpop.permute.xlu0 %1006
      %1008 = vrot.lane.b32.xlu0 %v351, 16
      %v1009 = vpop.permute.xlu0 %1008
      %1010 = vrot.lane.b32.xlu0 %v352, 16
      %v1011 = vpop.permute.xlu0 %1010
      %1012 = vrot.lane.b32.xlu0 %v353, 16
      %v1013 = vpop.permute.xlu0 %1012
      %1014 = vrot.lane.b32.xlu0 %v354, 16
      %v1015 = vpop.permute.xlu0 %1014
      %1016 = vrot.lane.b32.xlu0 %v355, 16
      %v1017 = vpop.permute.xlu0 %1016
      %1018 = vrot.lane.b32.xlu0 %v356, 16
      %v1019 = vpop.permute.xlu0 %1018
      %1020 = vrot.lane.b32.xlu0 %v357, 16
      %v1021 = vpop.permute.xlu0 %1020
      %1022 = vrot.lane.b32.xlu0 %v358, 16
      %v1023 = vpop.permute.xlu0 %1022
      %1024 = vrot.lane.b32.xlu0 %v359, 16
      %v1025 = vpop.permute.xlu0 %1024
      %1026 = vrot.lane.b32.xlu0 %v360, 16
      %v1027 = vpop.permute.xlu0 %1026
      %1028 = vrot.lane.b32.xlu0 %v361, 16
      %v1029 = vpop.permute.xlu0 %1028
      %1030 = vrot.lane.b32.xlu0 %v362, 16
      %v1031 = vpop.permute.xlu0 %1030
      %1032 = vrot.lane.b32.xlu0 %v363, 16
      %v1033 = vpop.permute.xlu0 %1032
      %1034 = vrot.lane.b32.xlu0 %v364, 16
      %v1035 = vpop.permute.xlu0 %1034
      %1036 = vrot.lane.b32.xlu0 %v365, 16
      %v1037 = vpop.permute.xlu0 %1036
      %1038 = vrot.lane.b32.xlu0 %v366, 16
      %v1039 = vpop.permute.xlu0 %1038
      %1040 = vrot.lane.b32.xlu0 %v367, 16
      %v1041 = vpop.permute.xlu0 %1040
      %1042 = vrot.lane.b32.xlu0 %v368, 16
      %v1043 = vpop.permute.xlu0 %1042
      %1044 = vrot.lane.b32.xlu0 %v369, 16
      %v1045 = vpop.permute.xlu0 %1044
      %1046 = vrot.lane.b32.xlu0 %v370, 16
      %v1047 = vpop.permute.xlu0 %1046
      %1048 = vrot.lane.b32.xlu0 %v371, 16
      %v1049 = vpop.permute.xlu0 %1048
      %1050 = vrot.lane.b32.xlu0 %v372, 16
      %v1051 = vpop.permute.xlu0 %1050
      %1052 = vrot.lane.b32.xlu0 %v373, 16
      %v1053 = vpop.permute.xlu0 %1052
      %1054 = vrot.lane.b32.xlu0 %v374, 16
      %v1055 = vpop.permute.xlu0 %1054
      %1056 = vrot.lane.b32.xlu0 %v375, 16
      %v1057 = vpop.permute.xlu0 %1056
      %1058 = vrot.lane.b32.xlu0 %v376, 16
      %v1059 = vpop.permute.xlu0 %1058
      %1060 = vrot.lane.b32.xlu0 %v377, 16
      %v1061 = vpop.permute.xlu0 %1060
      %1062 = vrot.lane.b32.xlu0 %v378, 16
      %v1063 = vpop.permute.xlu0 %1062
      %1098 = vrot.lane.b32.xlu0 %v560, 20
      %v1099 = vpop.permute.xlu0 %1098
      %1100 = vrot.lane.b32.xlu0 %v561, 20
      %v1101 = vpop.permute.xlu0 %1100
      %1102 = vrot.lane.b32.xlu0 %v562, 20
      %v1103 = vpop.permute.xlu0 %1102
      %1104 = vrot.lane.b32.xlu0 %v563, 20
      %v1105 = vpop.permute.xlu0 %1104
      %1106 = vrot.lane.b32.xlu0 %v564, 20
      %v1107 = vpop.permute.xlu0 %1106
      %1108 = vrot.lane.b32.xlu0 %v565, 20
      %v1109 = vpop.permute.xlu0 %1108
      %1110 = vrot.lane.b32.xlu0 %v566, 20
      %v1111 = vpop.permute.xlu0 %1110
      %1112 = vrot.lane.b32.xlu0 %v567, 20
      %v1113 = vpop.permute.xlu0 %1112
      %1114 = vrot.lane.b32.xlu0 %v568, 20
      %v1115 = vpop.permute.xlu0 %1114
      %1116 = vrot.lane.b32.xlu0 %v569, 20
      %v1117 = vpop.permute.xlu0 %1116
      %1118 = vrot.lane.b32.xlu0 %v570, 20
      %v1119 = vpop.permute.xlu0 %1118
      %1120 = vrot.lane.b32.xlu0 %v571, 20
      %v1121 = vpop.permute.xlu0 %1120
      %1122 = vrot.lane.b32.xlu0 %v572, 20
      %v1123 = vpop.permute.xlu0 %1122
      %1124 = vrot.lane.b32.xlu0 %v573, 20
      %v1125 = vpop.permute.xlu0 %1124
      %1126 = vrot.lane.b32.xlu0 %v574, 20
      %v1127 = vpop.permute.xlu0 %1126
      %1128 = vrot.lane.b32.xlu0 %v575, 20
      %v1129 = vpop.permute.xlu0 %1128
      %1130 = vrot.lane.b32.xlu0 %v576, 20
      %v1131 = vpop.permute.xlu0 %1130
      %1132 = vrot.lane.b32.xlu0 %v577, 20
      %v1133 = vpop.permute.xlu0 %1132
      %1134 = vrot.lane.b32.xlu0 %v578, 20
      %v1135 = vpop.permute.xlu0 %1134
      %1136 = vrot.lane.b32.xlu0 %v579, 20
      %v1137 = vpop.permute.xlu0 %1136
      %1138 = vrot.lane.b32.xlu0 %v580, 20
      %v1139 = vpop.permute.xlu0 %1138
      %1140 = vrot.lane.b32.xlu0 %v581, 20
      %v1141 = vpop.permute.xlu0 %1140
      %1142 = vrot.lane.b32.xlu0 %v582, 20
      %v1143 = vpop.permute.xlu0 %1142
      %1144 = vrot.lane.b32.xlu0 %v583, 20
      %v1145 = vpop.permute.xlu0 %1144
      %1146 = vrot.lane.b32.xlu0 %v584, 20
      %v1147 = vpop.permute.xlu0 %1146
      %1148 = vrot.lane.b32.xlu0 %v585, 20
      %v1149 = vpop.permute.xlu0 %1148
      %1150 = vrot.lane.b32.xlu0 %v586, 20
      %v1151 = vpop.permute.xlu0 %1150
      %1152 = vrot.lane.b32.xlu0 %v587, 20
      %v1153 = vpop.permute.xlu0 %1152
      %1154 = vrot.lane.b32.xlu0 %v588, 20
      %v1155 = vpop.permute.xlu0 %1154
      %1156 = vrot.lane.b32.xlu0 %v589, 20
      %v1157 = vpop.permute.xlu0 %1156
      %1158 = vrot.lane.b32.xlu0 %v600, 20
      %v1159 = vpop.permute.xlu0 %1158
      %1160 = vrot.lane.b32.xlu0 %v601, 20
      %v1161 = vpop.permute.xlu0 %1160
      %1196 = vrot.lane.b32.xlu0 %v461, 24
      %v1197 = vpop.permute.xlu0 %1196
      %1198 = vrot.lane.b32.xlu0 %v462, 24
      %v1199 = vpop.permute.xlu0 %1198
      %1200 = vrot.lane.b32.xlu0 %v463, 24
      %v1201 = vpop.permute.xlu0 %1200
      %1202 = vrot.lane.b32.xlu0 %v464, 24
      %v1203 = vpop.permute.xlu0 %1202
      %1204 = vrot.lane.b32.xlu0 %v465, 24
      %v1205 = vpop.permute.xlu0 %1204
      %1206 = vrot.lane.b32.xlu0 %v466, 24
      %v1207 = vpop.permute.xlu0 %1206
      %1208 = vrot.lane.b32.xlu0 %v467, 24
      %v1209 = vpop.permute.xlu0 %1208
      %1210 = vrot.lane.b32.xlu0 %v468, 24
      %v1211 = vpop.permute.xlu0 %1210
      %1212 = vrot.lane.b32.xlu0 %v469, 24
      %v1213 = vpop.permute.xlu0 %1212
      %1214 = vrot.lane.b32.xlu0 %v470, 24
      %v1215 = vpop.permute.xlu0 %1214
      %1216 = vrot.lane.b32.xlu0 %v471, 24
      %v1217 = vpop.permute.xlu0 %1216
      %1218 = vrot.lane.b32.xlu0 %v472, 24
      %v1219 = vpop.permute.xlu0 %1218
      %1220 = vrot.lane.b32.xlu0 %v473, 24
      %v1221 = vpop.permute.xlu0 %1220
      %1222 = vrot.lane.b32.xlu0 %v474, 24
      %v1223 = vpop.permute.xlu0 %1222
      %1224 = vrot.lane.b32.xlu0 %v475, 24
      %v1225 = vpop.permute.xlu0 %1224
      %1226 = vrot.lane.b32.xlu0 %v476, 24
      %v1227 = vpop.permute.xlu0 %1226
      %1228 = vrot.lane.b32.xlu0 %v477, 24
      %v1229 = vpop.permute.xlu0 %1228
      %1230 = vrot.lane.b32.xlu0 %v478, 24
      %v1231 = vpop.permute.xlu0 %1230
      %1232 = vrot.lane.b32.xlu0 %v479, 24
      %v1233 = vpop.permute.xlu0 %1232
      %1234 = vrot.lane.b32.xlu0 %v480, 24
      %v1235 = vpop.permute.xlu0 %1234
      %1236 = vrot.lane.b32.xlu0 %v481, 24
      %v1237 = vpop.permute.xlu0 %1236
      %1238 = vrot.lane.b32.xlu0 %v482, 24
      %v1239 = vpop.permute.xlu0 %1238
      %1240 = vrot.lane.b32.xlu0 %v483, 24
      %v1241 = vpop.permute.xlu0 %1240
      %1242 = vrot.lane.b32.xlu0 %v484, 24
      %v1243 = vpop.permute.xlu0 %1242
      %1244 = vrot.lane.b32.xlu0 %v485, 24
      %v1245 = vpop.permute.xlu0 %1244
      %1246 = vrot.lane.b32.xlu0 %v486, 24
      %v1247 = vpop.permute.xlu0 %1246
      %1248 = vrot.lane.b32.xlu0 %v487, 24
      %v1249 = vpop.permute.xlu0 %1248
      %1250 = vrot.lane.b32.xlu0 %v488, 24
      %v1251 = vpop.permute.xlu0 %1250
      %1252 = vrot.lane.b32.xlu0 %v594, 24
      %v1253 = vpop.permute.xlu0 %1252
      %1254 = vrot.lane.b32.xlu0 %v595, 24
      %v1255 = vpop.permute.xlu0 %1254
      %1256 = vrot.lane.b32.xlu0 %v606, 24
      %v1257 = vpop.permute.xlu0 %1256
      %1258 = vrot.lane.b32.xlu0 %v607, 24
      %v1259 = vpop.permute.xlu0 %1258
      %1294 = vrot.lane.b32.xlu0 %v349, 28
      %v1295 = vpop.permute.xlu0 %1294
      %1296 = vrot.lane.b32.xlu0 %v350, 28
      %v1297 = vpop.permute.xlu0 %1296
      %1298 = vrot.lane.b32.xlu0 %v351, 28
      %v1299 = vpop.permute.xlu0 %1298
      %1300 = vrot.lane.b32.xlu0 %v352, 28
      %v1301 = vpop.permute.xlu0 %1300
      %1302 = vrot.lane.b32.xlu0 %v353, 28
      %v1303 = vpop.permute.xlu0 %1302
      %1304 = vrot.lane.b32.xlu0 %v354, 28
      %v1305 = vpop.permute.xlu0 %1304
      %1306 = vrot.lane.b32.xlu0 %v355, 28
      %v1307 = vpop.permute.xlu0 %1306
      %1308 = vrot.lane.b32.xlu0 %v356, 28
      %v1309 = vpop.permute.xlu0 %1308
      %1310 = vrot.lane.b32.xlu0 %v357, 28
      %v1311 = vpop.permute.xlu0 %1310
      %1312 = vrot.lane.b32.xlu0 %v358, 28
      %v1313 = vpop.permute.xlu0 %1312
      %1314 = vrot.lane.b32.xlu0 %v359, 28
      %v1315 = vpop.permute.xlu0 %1314
      %1316 = vrot.lane.b32.xlu0 %v360, 28
      %v1317 = vpop.permute.xlu0 %1316
      %1318 = vrot.lane.b32.xlu0 %v361, 28
      %v1319 = vpop.permute.xlu0 %1318
      %1320 = vrot.lane.b32.xlu0 %v362, 28
      %v1321 = vpop.permute.xlu0 %1320
      %1322 = vrot.lane.b32.xlu0 %v363, 28
      %v1323 = vpop.permute.xlu0 %1322
      %1324 = vrot.lane.b32.xlu0 %v364, 28
      %v1325 = vpop.permute.xlu0 %1324
      %1326 = vrot.lane.b32.xlu0 %v365, 28
      %v1327 = vpop.permute.xlu0 %1326
      %1328 = vrot.lane.b32.xlu0 %v366, 28
      %v1329 = vpop.permute.xlu0 %1328
      %1330 = vrot.lane.b32.xlu0 %v367, 28
      %v1331 = vpop.permute.xlu0 %1330
      %1332 = vrot.lane.b32.xlu0 %v368, 28
      %v1333 = vpop.permute.xlu0 %1332
      %1334 = vrot.lane.b32.xlu0 %v369, 28
      %v1335 = vpop.permute.xlu0 %1334
      %1336 = vrot.lane.b32.xlu0 %v370, 28
      %v1337 = vpop.permute.xlu0 %1336
      %1338 = vrot.lane.b32.xlu0 %v371, 28
      %v1339 = vpop.permute.xlu0 %1338
      %1340 = vrot.lane.b32.xlu0 %v372, 28
      %v1341 = vpop.permute.xlu0 %1340
      %1342 = vrot.lane.b32.xlu0 %v373, 28
      %v1343 = vpop.permute.xlu0 %1342
      %1344 = vrot.lane.b32.xlu0 %v374, 28
      %v1345 = vpop.permute.xlu0 %1344
      %1346 = vrot.lane.b32.xlu0 %v375, 28
      %v1347 = vpop.permute.xlu0 %1346
      %1348 = vrot.lane.b32.xlu0 %v376, 28
      %v1349 = vpop.permute.xlu0 %1348
      %1350 = vrot.lane.b32.xlu0 %v377, 28
      %v1351 = vpop.permute.xlu0 %1350
      %1352 = vrot.lane.b32.xlu0 %v378, 28
      %v1353 = vpop.permute.xlu0 %1352
      %1354 = vrot.lane.b32.xlu0 %v379, 28
      %v1355 = vpop.permute.xlu0 %1354
      %1356 = vrot.lane.b32.xlu0 %v380, 28
      %v1357 = vpop.permute.xlu0 %1356
      %1392 = vrot.lane.b32.xlu0 %v562, 32
      %v1393 = vpop.permute.xlu0 %1392
      %1394 = vrot.lane.b32.xlu0 %v563, 32
      %v1395 = vpop.permute.xlu0 %1394
      %1396 = vrot.lane.b32.xlu0 %v564, 32
      %v1397 = vpop.permute.xlu0 %1396
      %1398 = vrot.lane.b32.xlu0 %v565, 32
      %v1399 = vpop.permute.xlu0 %1398
      %1400 = vrot.lane.b32.xlu0 %v566, 32
      %v1401 = vpop.permute.xlu0 %1400
      %1402 = vrot.lane.b32.xlu0 %v567, 32
      %v1403 = vpop.permute.xlu0 %1402
      %1404 = vrot.lane.b32.xlu0 %v568, 32
      %v1405 = vpop.permute.xlu0 %1404
      %1406 = vrot.lane.b32.xlu0 %v569, 32
      %v1407 = vpop.permute.xlu0 %1406
      %1408 = vrot.lane.b32.xlu0 %v570, 32
      %v1409 = vpop.permute.xlu0 %1408
      %1410 = vrot.lane.b32.xlu0 %v571, 32
      %v1411 = vpop.permute.xlu0 %1410
      %1412 = vrot.lane.b32.xlu0 %v572, 32
      %v1413 = vpop.permute.xlu0 %1412
      %1414 = vrot.lane.b32.xlu0 %v573, 32
      %v1415 = vpop.permute.xlu0 %1414
      %1416 = vrot.lane.b32.xlu0 %v574, 32
      %v1417 = vpop.permute.xlu0 %1416
      %1418 = vrot.lane.b32.xlu0 %v575, 32
      %v1419 = vpop.permute.xlu0 %1418
      %1420 = vrot.lane.b32.xlu0 %v576, 32
      %v1421 = vpop.permute.xlu0 %1420
      %1422 = vrot.lane.b32.xlu0 %v577, 32
      %v1423 = vpop.permute.xlu0 %1422
      %1424 = vrot.lane.b32.xlu0 %v578, 32
      %v1425 = vpop.permute.xlu0 %1424
      %1426 = vrot.lane.b32.xlu0 %v579, 32
      %v1427 = vpop.permute.xlu0 %1426
      %1428 = vrot.lane.b32.xlu0 %v580, 32
      %v1429 = vpop.permute.xlu0 %1428
      %1430 = vrot.lane.b32.xlu0 %v581, 32
      %v1431 = vpop.permute.xlu0 %1430
      %1432 = vrot.lane.b32.xlu0 %v582, 32
      %v1433 = vpop.permute.xlu0 %1432
      %1434 = vrot.lane.b32.xlu0 %v583, 32
      %v1435 = vpop.permute.xlu0 %1434
      %1436 = vrot.lane.b32.xlu0 %v584, 32
      %v1437 = vpop.permute.xlu0 %1436
      %1438 = vrot.lane.b32.xlu0 %v585, 32
      %v1439 = vpop.permute.xlu0 %1438
      %1440 = vrot.lane.b32.xlu0 %v586, 32
      %v1441 = vpop.permute.xlu0 %1440
      %1442 = vrot.lane.b32.xlu0 %v587, 32
      %v1443 = vpop.permute.xlu0 %1442
      %1444 = vrot.lane.b32.xlu0 %v588, 32
      %v1445 = vpop.permute.xlu0 %1444
      %1446 = vrot.lane.b32.xlu0 %v589, 32
      %v1447 = vpop.permute.xlu0 %1446
      %1448 = vrot.lane.b32.xlu0 %v600, 32
      %v1449 = vpop.permute.xlu0 %1448
      %1450 = vrot.lane.b32.xlu0 %v601, 32
      %v1451 = vpop.permute.xlu0 %1450
      %1452 = vrot.lane.b32.xlu0 %v612, 32
      %v1453 = vpop.permute.xlu0 %1452
      %1454 = vrot.lane.b32.xlu0 %v613, 32
      %v1455 = vpop.permute.xlu0 %1454
      %v1488 = vsel %vm306, %v457, %v647
      %v1489 = vsel %vm306, %v458, %v649
      %v1490 = vsel %vm306, %v459, %v651
      %v1491 = vsel %vm306, %v460, %v653
      %v1492 = vsel %vm306, %v461, %v655
      %v1493 = vsel %vm306, %v462, %v657
      %v1494 = vsel %vm306, %v463, %v659
      %v1495 = vsel %vm306, %v464, %v661
      %v1496 = vsel %vm306, %v465, %v663
      %v1497 = vsel %vm306, %v466, %v665
      %v1498 = vsel %vm306, %v467, %v667
      %v1499 = vsel %vm306, %v468, %v669
      %v1500 = vsel %vm306, %v469, %v671
      %v1501 = vsel %vm306, %v470, %v673
      %v1502 = vsel %vm306, %v471, %v675
      %v1503 = vsel %vm306, %v472, %v677
      %v1504 = vsel %vm306, %v473, %v679
      %v1505 = vsel %vm306, %v474, %v681
      %v1506 = vsel %vm306, %v475, %v683
      %v1507 = vsel %vm306, %v476, %v685
      %v1508 = vsel %vm306, %v477, %v687
      %v1509 = vsel %vm306, %v478, %v689
      %v1510 = vsel %vm306, %v479, %v691
      %v1511 = vsel %vm306, %v480, %v693
      %v1512 = vsel %vm306, %v481, %v695
      %v1513 = vsel %vm306, %v482, %v697
      %v1514 = vsel %vm306, %v483, %v699
      %v1515 = vsel %vm306, %v484, %v701
      %v1516 = vsel %vm306, %v485, %v703
      %v1517 = vsel %vm306, %v486, %v705
      %v1518 = vsel %vm306, %v487, %v707
      %v1519 = vsel %vm306, %v488, %v709
      %vm1520 = vcmask 64512
      %v1521 = vsel %vm1520, %v1488, %v775
      %v1522 = vsel %vm1520, %v1489, %v777
      %v1523 = vsel %vm1520, %v1490, %v779
      %v1524 = vsel %vm1520, %v1491, %v781
      %v1525 = vsel %vm1520, %v1492, %v783
      %v1526 = vsel %vm1520, %v1493, %v785
      %v1527 = vsel %vm1520, %v1494, %v787
      %v1528 = vsel %vm1520, %v1495, %v789
      %v1529 = vsel %vm1520, %v1496, %v791
      %v1530 = vsel %vm1520, %v1497, %v793
      %v1531 = vsel %vm1520, %v1498, %v795
      %v1532 = vsel %vm1520, %v1499, %v797
      %v1533 = vsel %vm1520, %v1500, %v799
      %v1534 = vsel %vm1520, %v1501, %v801
      %v1535 = vsel %vm1520, %v1502, %v803
      %v1536 = vsel %vm1520, %v1503, %v805
      %v1537 = vsel %vm1520, %v1504, %v807
      %v1538 = vsel %vm1520, %v1505, %v809
      %v1539 = vsel %vm1520, %v1506, %v811
      %v1540 = vsel %vm1520, %v1507, %v813
      %v1541 = vsel %vm1520, %v1508, %v815
      %v1542 = vsel %vm1520, %v1509, %v817
      %v1543 = vsel %vm1520, %v1510, %v819
      %v1544 = vsel %vm1520, %v1511, %v821
      %v1545 = vsel %vm1520, %v1512, %v823
      %v1546 = vsel %vm1520, %v1513, %v825
      %v1547 = vsel %vm1520, %v1514, %v827
      %v1548 = vsel %vm1520, %v1515, %v829
      %v1549 = vsel %vm1520, %v1516, %v831
      %v1550 = vsel %vm1520, %v1517, %v833
      %v1551 = vsel %vm1520, %v1518, %v835
      %v1552 = vsel %vm1520, %v1519, %v837
      %vm1553 = vcmask 97280
      %v1554 = vsel %vm1553, %v1521, %v903
      %v1555 = vsel %vm1553, %v1522, %v905
      %v1556 = vsel %vm1553, %v1523, %v907
      %v1557 = vsel %vm1553, %v1524, %v909
      %v1558 = vsel %vm1553, %v1525, %v911
      %v1559 = vsel %vm1553, %v1526, %v913
      %v1560 = vsel %vm1553, %v1527, %v915
      %v1561 = vsel %vm1553, %v1528, %v917
      %v1562 = vsel %vm1553, %v1529, %v919
      %v1563 = vsel %vm1553, %v1530, %v921
      %v1564 = vsel %vm1553, %v1531, %v923
      %v1565 = vsel %vm1553, %v1532, %v925
      %v1566 = vsel %vm1553, %v1533, %v927
      %v1567 = vsel %vm1553, %v1534, %v929
      %v1568 = vsel %vm1553, %v1535, %v931
      %v1569 = vsel %vm1553, %v1536, %v933
      %v1570 = vsel %vm1553, %v1537, %v935
      %v1571 = vsel %vm1553, %v1538, %v937
      %v1572 = vsel %vm1553, %v1539, %v939
      %v1573 = vsel %vm1553, %v1540, %v941
      %v1574 = vsel %vm1553, %v1541, %v943
      %v1575 = vsel %vm1553, %v1542, %v945
      %v1576 = vsel %vm1553, %v1543, %v947
      %v1577 = vsel %vm1553, %v1544, %v949
      %v1578 = vsel %vm1553, %v1545, %v951
      %v1579 = vsel %vm1553, %v1546, %v953
      %v1580 = vsel %vm1553, %v1547, %v955
      %v1581 = vsel %vm1553, %v1548, %v957
      %v1582 = vsel %vm1553, %v1549, %v959
      %v1583 = vsel %vm1553, %v1550, %v961
      %v1584 = vsel %vm1553, %v1551, %v963
      %v1585 = vsel %vm1553, %v1552, %v965
      %vm1586 = vcmask 130048
      %v1587 = vsel %vm1586, %v1554, %v1001
      %v1588 = vsel %vm1586, %v1555, %v1003
      %v1589 = vsel %vm1586, %v1556, %v1005
      %v1590 = vsel %vm1586, %v1557, %v1007
      %v1591 = vsel %vm1586, %v1558, %v1009
      %v1592 = vsel %vm1586, %v1559, %v1011
      %v1593 = vsel %vm1586, %v1560, %v1013
      %v1594 = vsel %vm1586, %v1561, %v1015
      %v1595 = vsel %vm1586, %v1562, %v1017
      %v1596 = vsel %vm1586, %v1563, %v1019
      %v1597 = vsel %vm1586, %v1564, %v1021
      %v1598 = vsel %vm1586, %v1565, %v1023
      %v1599 = vsel %vm1586, %v1566, %v1025
      %v1600 = vsel %vm1586, %v1567, %v1027
      %v1601 = vsel %vm1586, %v1568, %v1029
      %v1602 = vsel %vm1586, %v1569, %v1031
      %v1603 = vsel %vm1586, %v1570, %v1033
      %v1604 = vsel %vm1586, %v1571, %v1035
      %v1605 = vsel %vm1586, %v1572, %v1037
      %v1606 = vsel %vm1586, %v1573, %v1039
      %v1607 = vsel %vm1586, %v1574, %v1041
      %v1608 = vsel %vm1586, %v1575, %v1043
      %v1609 = vsel %vm1586, %v1576, %v1045
      %v1610 = vsel %vm1586, %v1577, %v1047
      %v1611 = vsel %vm1586, %v1578, %v1049
      %v1612 = vsel %vm1586, %v1579, %v1051
      %v1613 = vsel %vm1586, %v1580, %v1053
      %v1614 = vsel %vm1586, %v1581, %v1055
      %v1615 = vsel %vm1586, %v1582, %v1057
      %v1616 = vsel %vm1586, %v1583, %v1059
      %v1617 = vsel %vm1586, %v1584, %v1061
      %v1618 = vsel %vm1586, %v1585, %v1063
      %vm1619 = vcmask 162816
      %v1620 = vsel %vm1619, %v1587, %v1099
      %v1621 = vsel %vm1619, %v1588, %v1101
      %v1622 = vsel %vm1619, %v1589, %v1103
      %v1623 = vsel %vm1619, %v1590, %v1105
      %v1624 = vsel %vm1619, %v1591, %v1107
      %v1625 = vsel %vm1619, %v1592, %v1109
      %v1626 = vsel %vm1619, %v1593, %v1111
      %v1627 = vsel %vm1619, %v1594, %v1113
      %v1628 = vsel %vm1619, %v1595, %v1115
      %v1629 = vsel %vm1619, %v1596, %v1117
      %v1630 = vsel %vm1619, %v1597, %v1119
      %v1631 = vsel %vm1619, %v1598, %v1121
      %v1632 = vsel %vm1619, %v1599, %v1123
      %v1633 = vsel %vm1619, %v1600, %v1125
      %v1634 = vsel %vm1619, %v1601, %v1127
      %v1635 = vsel %vm1619, %v1602, %v1129
      %v1636 = vsel %vm1619, %v1603, %v1131
      %v1637 = vsel %vm1619, %v1604, %v1133
      %v1638 = vsel %vm1619, %v1605, %v1135
      %v1639 = vsel %vm1619, %v1606, %v1137
      %v1640 = vsel %vm1619, %v1607, %v1139
      %v1641 = vsel %vm1619, %v1608, %v1141
      %v1642 = vsel %vm1619, %v1609, %v1143
      %v1643 = vsel %vm1619, %v1610, %v1145
      %v1644 = vsel %vm1619, %v1611, %v1147
      %v1645 = vsel %vm1619, %v1612, %v1149
      %v1646 = vsel %vm1619, %v1613, %v1151
      %v1647 = vsel %vm1619, %v1614, %v1153
      %v1648 = vsel %vm1619, %v1615, %v1155
      %v1649 = vsel %vm1619, %v1616, %v1157
      %v1650 = vsel %vm1619, %v1617, %v1159
      %v1651 = vsel %vm1619, %v1618, %v1161
      %vm1652 = vcmask 195584
      %v1653 = vsel %vm1652, %v1620, %v1197
      %v1654 = vsel %vm1652, %v1621, %v1199
      %v1655 = vsel %vm1652, %v1622, %v1201
      %v1656 = vsel %vm1652, %v1623, %v1203
      %v1657 = vsel %vm1652, %v1624, %v1205
      %v1658 = vsel %vm1652, %v1625, %v1207
      %v1659 = vsel %vm1652, %v1626, %v1209
      %v1660 = vsel %vm1652, %v1627, %v1211
      %v1661 = vsel %vm1652, %v1628, %v1213
      %v1662 = vsel %vm1652, %v1629, %v1215
      %v1663 = vsel %vm1652, %v1630, %v1217
      %v1664 = vsel %vm1652, %v1631, %v1219
      %v1665 = vsel %vm1652, %v1632, %v1221
      %v1666 = vsel %vm1652, %v1633, %v1223
      %v1667 = vsel %vm1652, %v1634, %v1225
      %v1668 = vsel %vm1652, %v1635, %v1227
      %v1669 = vsel %vm1652, %v1636, %v1229
      %v1670 = vsel %vm1652, %v1637, %v1231
      %v1671 = vsel %vm1652, %v1638, %v1233
      %v1672 = vsel %vm1652, %v1639, %v1235
      %v1673 = vsel %vm1652, %v1640, %v1237
      %v1674 = vsel %vm1652, %v1641, %v1239
      %v1675 = vsel %vm1652, %v1642, %v1241
      %v1676 = vsel %vm1652, %v1643, %v1243
      %v1677 = vsel %vm1652, %v1644, %v1245
      %v1678 = vsel %vm1652, %v1645, %v1247
      %v1679 = vsel %vm1652, %v1646, %v1249
      %v1680 = vsel %vm1652, %v1647, %v1251
      %v1681 = vsel %vm1652, %v1648, %v1253
      %v1682 = vsel %vm1652, %v1649, %v1255
      %v1683 = vsel %vm1652, %v1650, %v1257
      %v1684 = vsel %vm1652, %v1651, %v1259
      %vm1685 = vcmask 228352
      %v1686 = vsel %vm1685, %v1653, %v1295
      %v1687 = vsel %vm1685, %v1654, %v1297
      %v1688 = vsel %vm1685, %v1655, %v1299
      %v1689 = vsel %vm1685, %v1656, %v1301
      %v1690 = vsel %vm1685, %v1657, %v1303
      %v1691 = vsel %vm1685, %v1658, %v1305
      %v1692 = vsel %vm1685, %v1659, %v1307
      %v1693 = vsel %vm1685, %v1660, %v1309
      %v1694 = vsel %vm1685, %v1661, %v1311
      %v1695 = vsel %vm1685, %v1662, %v1313
      %v1696 = vsel %vm1685, %v1663, %v1315
      %v1697 = vsel %vm1685, %v1664, %v1317
      %v1698 = vsel %vm1685, %v1665, %v1319
      %v1699 = vsel %vm1685, %v1666, %v1321
      %v1700 = vsel %vm1685, %v1667, %v1323
      %v1701 = vsel %vm1685, %v1668, %v1325
      %v1702 = vsel %vm1685, %v1669, %v1327
      %v1703 = vsel %vm1685, %v1670, %v1329
      %v1704 = vsel %vm1685, %v1671, %v1331
      %v1705 = vsel %vm1685, %v1672, %v1333
      %v1706 = vsel %vm1685, %v1673, %v1335
      %v1707 = vsel %vm1685, %v1674, %v1337
      %v1708 = vsel %vm1685, %v1675, %v1339
      %v1709 = vsel %vm1685, %v1676, %v1341
      %v1710 = vsel %vm1685, %v1677, %v1343
      %v1711 = vsel %vm1685, %v1678, %v1345
      %v1712 = vsel %vm1685, %v1679, %v1347
      %v1713 = vsel %vm1685, %v1680, %v1349
      %v1714 = vsel %vm1685, %v1681, %v1351
      %v1715 = vsel %vm1685, %v1682, %v1353
      %v1716 = vsel %vm1685, %v1683, %v1355
      %v1717 = vsel %vm1685, %v1684, %v1357
      %vm1718 = vcmask 261120
      %v1719 = vsel %vm1718, %v1686, %v1393
      %v1720 = vsel %vm1718, %v1687, %v1395
      %v1721 = vsel %vm1718, %v1688, %v1397
      %v1722 = vsel %vm1718, %v1689, %v1399
      %v1723 = vsel %vm1718, %v1690, %v1401
      %v1724 = vsel %vm1718, %v1691, %v1403
      %v1725 = vsel %vm1718, %v1692, %v1405
      %v1726 = vsel %vm1718, %v1693, %v1407
      %v1727 = vsel %vm1718, %v1694, %v1409
      %v1728 = vsel %vm1718, %v1695, %v1411
      %v1729 = vsel %vm1718, %v1696, %v1413
      %v1730 = vsel %vm1718, %v1697, %v1415
      %v1731 = vsel %vm1718, %v1698, %v1417
      %v1732 = vsel %vm1718, %v1699, %v1419
      %v1733 = vsel %vm1718, %v1700, %v1421
      %v1734 = vsel %vm1718, %v1701, %v1423
      %v1735 = vsel %vm1718, %v1702, %v1425
      %v1736 = vsel %vm1718, %v1703, %v1427
      %v1737 = vsel %vm1718, %v1704, %v1429
      %v1738 = vsel %vm1718, %v1705, %v1431
      %v1739 = vsel %vm1718, %v1706, %v1433
      %v1740 = vsel %vm1718, %v1707, %v1435
      %v1741 = vsel %vm1718, %v1708, %v1437
      %v1742 = vsel %vm1718, %v1709, %v1439
      %v1743 = vsel %vm1718, %v1710, %v1441
      %v1744 = vsel %vm1718, %v1711, %v1443
      %v1745 = vsel %vm1718, %v1712, %v1445
      %v1746 = vsel %vm1718, %v1713, %v1447
      %v1747 = vsel %vm1718, %v1714, %v1449
      %v1748 = vsel %vm1718, %v1715, %v1451
      %v1749 = vsel %vm1718, %v1716, %v1453
      %v1750 = vsel %vm1718, %v1717, %v1455
      %v1751 = vld [vmem:[%s3] sm:$0xff]
      %v1752 = vld [vmem:[%s3 + $0x8] sm:$0xff]
      %v1753 = vld [vmem:[%s3 + $0x10] sm:$0xff]
      %v1754 = vld [vmem:[%s3 + $0x18] sm:$0xff]
      %v1755 = vld [vmem:[%s3 + $0x20] sm:$0xf]
      %v1756 = vld [vmem:[%s4] sm:$0x1]
      %v1758 = vlaneseq
      %v1759 = vshrl.u32 %v1758, 7
      %v1760 = vsub.s32 0, %v1759
      %v1761 = vrot.slane %v1756, %v1760
      %vm1763 = vcmask 293888
      %v1765 = vsel %vm1763, %v1719, 0
      %v1768 = vsel %vm1763, %v1720, 0
      %v1771 = vsel %vm1763, %v1721, 0
      %v1774 = vsel %vm1763, %v1722, 0
      %v1777 = vsel %vm1763, %v1723, 0
      %v1780 = vsel %vm1763, %v1724, 0
      %v1783 = vsel %vm1763, %v1725, 0
      %v1786 = vsel %vm1763, %v1726, 0
      %v1789 = vsel %vm1763, %v1727, 0
      %v1792 = vsel %vm1763, %v1728, 0
      %v1795 = vsel %vm1763, %v1729, 0
      %v1798 = vsel %vm1763, %v1730, 0
      %v1801 = vsel %vm1763, %v1731, 0
      %v1804 = vsel %vm1763, %v1732, 0
      %v1807 = vsel %vm1763, %v1733, 0
      %v1810 = vsel %vm1763, %v1734, 0
      %v1813 = vsel %vm1763, %v1735, 0
      %v1816 = vsel %vm1763, %v1736, 0
      %v1819 = vsel %vm1763, %v1737, 0
      %v1822 = vsel %vm1763, %v1738, 0
      %v1825 = vsel %vm1763, %v1739, 0
      %v1828 = vsel %vm1763, %v1740, 0
      %v1831 = vsel %vm1763, %v1741, 0
      %v1834 = vsel %vm1763, %v1742, 0
      %v1837 = vsel %vm1763, %v1743, 0
      %v1840 = vsel %vm1763, %v1744, 0
      %v1843 = vsel %vm1763, %v1745, 0
      %v1846 = vsel %vm1763, %v1746, 0
      %v1849 = vsel %vm1763, %v1747, 0
      %v1852 = vsel %vm1763, %v1748, 0
      %v1855 = vsel %vm1763, %v1749, 0
      %v1858 = vsel %vm1763, %v1750, 0
      %vm1860 = vcmask 1043456
      %v1862 = vsel %vm1860, %v1755, 0
      %1864 = vmatprep.subr.mxu0 0.0
      %1865 = vmatpush1.msra.mxu0 %v1751
      %1866 = vmatprep.subr.mxu0 0.0
      %1867 = vmatpush1.msra.mxu0 %v1752
      %1868 = vmatprep.subr.mxu0 0.0
      %1869 = vmatpush1.msra.mxu0 %v1753
      %1870 = vmatprep.subr.mxu0 0.0
      %1871 = vmatpush1.msra.mxu0 %v1754
      %1872 = vmatprep.subr.mxu0 0.0
      %1873 = vmatpush1.msra.mxu0 %v1862
      %1874 = vmatprep.subr.mxu0 0.0
      %1875 = vmatpush1.msra.mxu0 0.0
      %1876 = vmatprep.subr.mxu0 0.0
      %1877 = vmatpush1.msra.mxu0 0.0
      %1878 = vmatprep.subr.mxu0 0.0
      %1879 = vmatpush1.msra.mxu0 0.0
      %1880 = vmatprep.subr.mxu0 0.0
      %1881 = vmatpush1.msra.mxu0 0.0
      %1882 = vmatprep.subr.mxu0 0.0
      %1883 = vmatpush1.msra.mxu0 0.0
      %1884 = vmatprep.subr.mxu0 0.0
      %1885 = vmatpush1.msra.mxu0 0.0
      %1886 = vmatprep.subr.mxu0 0.0
      %1887 = vmatpush1.msra.mxu0 0.0
      %1888 = vmatprep.subr.mxu0 0.0
      %1889 = vmatpush1.msra.mxu0 0.0
      %1890 = vmatprep.subr.mxu0 0.0
      %1891 = vmatpush1.msra.mxu0 0.0
      %1892 = vmatprep.subr.mxu0 0.0
      %1893 = vmatpush1.msra.mxu0 0.0
      %1894 = vmatprep.subr.mxu0 0.0
      %1895 = vmatpush1.msra.mxu0 0.0
      %1896 = vmatprep.subr.mxu0 0.0
      %1897 = vmatpush1.msra.mxu0 0.0
      %1898 = vmatprep.subr.mxu0 0.0
      %1899 = vmatpush1.msra.mxu0 0.0
      %1900 = vmatprep.subr.mxu0 0.0
      %1901 = vmatpush1.msra.mxu0 0.0
      %1902 = vmatprep.subr.mxu0 0.0
      %1903 = vmatpush1.msra.mxu0 0.0
      %1904 = vmatprep.subr.mxu0 0.0
      %1905 = vmatpush1.msra.mxu0 0.0
      %1906 = vmatprep.subr.mxu0 0.0
      %1907 = vmatpush1.msra.mxu0 0.0
      %1908 = vmatprep.subr.mxu0 0.0
      %1909 = vmatpush1.msra.mxu0 0.0
      %1910 = vmatprep.subr.mxu0 0.0
      %1911 = vmatpush1.msra.mxu0 0.0
      %1912 = vmatprep.subr.mxu0 0.0
      %1913 = vmatpush1.msra.mxu0 0.0
      %1914 = vmatprep.subr.mxu0 0.0
      %1915 = vmatpush1.msra.mxu0 0.0
      %1916 = vmatprep.subr.mxu0 0.0
      %1917 = vmatpush1.msra.mxu0 0.0
      %1918 = vmatprep.subr.mxu0 0.0
      %1919 = vmatpush1.msra.mxu0 0.0
      %1920 = vmatprep.subr.mxu0 0.0
      %1921 = vmatpush1.msra.mxu0 0.0
      %1922 = vmatprep.subr.mxu0 0.0
      %1923 = vmatpush1.msra.mxu0 0.0
      %1924 = vmatprep.subr.mxu0 0.0
      %1925 = vmatpush1.msra.mxu0 0.0
      %1926 = vmatprep.subr.mxu0 0.0
      %1927 = vmatpush1.msra.mxu0 0.0
      %1928 = vmatprep.mubr.f32.mxu0 0.0
      %1929 = vmatmul.mubr.f32.gmra.mrb[0].mxu0 %v1765
      %v1930 = vpop.f32.mrb[0].mxu0
      %v1931 = vadd.f32 %v1761, %v1930
      %v1932 = vpop.f32.mrb[0].mxu0
      %1933 = vmatprep.mubr.f32.mxu0 0.0
      %1934 = vmatmul.mubr.f32.gmra.mrb[0].mxu0 %v1768
      %v1935 = vpop.f32.mrb[0].mxu0
      %v1936 = vadd.f32 %v1761, %v1935
      %v1937 = vpop.f32.mrb[0].mxu0
      %1938 = vmatprep.mubr.f32.mxu0 0.0
      %1939 = vmatmul.mubr.f32.gmra.mrb[0].mxu0 %v1771
      %v1940 = vpop.f32.mrb[0].mxu0
      %v1941 = vadd.f32 %v1761, %v1940
      %v1942 = vpop.f32.mrb[0].mxu0
      %1943 = vmatprep.mubr.f32.mxu0 0.0
      %1944 = vmatmul.mubr.f32.gmra.mrb[0].mxu0 %v1774
      %v1945 = vpop.f32.mrb[0].mxu0
      %v1946 = vadd.f32 %v1761, %v1945
      %v1947 = vpop.f32.mrb[0].mxu0
      %1948 = vmatprep.mubr.f32.mxu0 0.0
      %1949 = vmatmul.mubr.f32.gmra.mrb[0].mxu0 %v1777
      %v1950 = vpop.f32.mrb[0].mxu0
      %v1951 = vadd.f32 %v1761, %v1950
      %v1952 = vpop.f32.mrb[0].mxu0
      %1953 = vmatprep.mubr.f32.mxu0 0.0
      %1954 = vmatmul.mubr.f32.gmra.mrb[0].mxu0 %v1780
      %v1955 = vpop.f32.mrb[0].mxu0
      %v1956 = vadd.f32 %v1761, %v1955
      %v1957 = vpop.f32.mrb[0].mxu0
      %1958 = vmatprep.mubr.f32.mxu0 0.0
      %1959 = vmatmul.mubr.f32.gmra.mrb[0].mxu0 %v1783
      %v1960 = vpop.f32.mrb[0].mxu0
      %v1961 = vadd.f32 %v1761, %v1960
      %v1962 = vpop.f32.mrb[0].mxu0
      %1963 = vmatprep.mubr.f32.mxu0 0.0
      %1964 = vmatmul.mubr.f32.gmra.mrb[0].mxu0 %v1786
      %v1965 = vpop.f32.mrb[0].mxu0
      %v1966 = vadd.f32 %v1761, %v1965
      %v1967 = vpop.f32.mrb[0].mxu0
      %1968 = vmatprep.mubr.f32.mxu0 0.0
      %1969 = vmatmul.mubr.f32.gmra.mrb[0].mxu0 %v1789
      %v1970 = vpop.f32.mrb[0].mxu0
      %v1971 = vadd.f32 %v1761, %v1970
      %v1972 = vpop.f32.mrb[0].mxu0
      %1973 = vmatprep.mubr.f32.mxu0 0.0
      %1974 = vmatmul.mubr.f32.gmra.mrb[0].mxu0 %v1792
      %v1975 = vpop.f32.mrb[0].mxu0
      %v1976 = vadd.f32 %v1761, %v1975
      %v1977 = vpop.f32.mrb[0].mxu0
      %1978 = vmatprep.mubr.f32.mxu0 0.0
      %1979 = vmatmul.mubr.f32.gmra.mrb[0].mxu0 %v1795
      %v1980 = vpop.f32.mrb[0].mxu0
      %v1981 = vadd.f32 %v1761, %v1980
      %v1982 = vpop.f32.mrb[0].mxu0
      %1983 = vmatprep.mubr.f32.mxu0 0.0
      %1984 = vmatmul.mubr.f32.gmra.mrb[0].mxu0 %v1798
      %v1985 = vpop.f32.mrb[0].mxu0
      %v1986 = vadd.f32 %v1761, %v1985
      %v1987 = vpop.f32.mrb[0].mxu0
      %1988 = vmatprep.mubr.f32.mxu0 0.0
      %1989 = vmatmul.mubr.f32.gmra.mrb[0].mxu0 %v1801
      %v1990 = vpop.f32.mrb[0].mxu0
      %v1991 = vadd.f32 %v1761, %v1990
      %v1992 = vpop.f32.mrb[0].mxu0
      %1993 = vmatprep.mubr.f32.mxu0 0.0
      %1994 = vmatmul.mubr.f32.gmra.mrb[0].mxu0 %v1804
      %v1995 = vpop.f32.mrb[0].mxu0
      %v1996 = vadd.f32 %v1761, %v1995
      %v1997 = vpop.f32.mrb[0].mxu0
      %1998 = vmatprep.mubr.f32.mxu0 0.0
      %1999 = vmatmul.mubr.f32.gmra.mrb[0].mxu0 %v1807
      %v2000 = vpop.f32.mrb[0].mxu0
      %v2001 = vadd.f32 %v1761, %v2000
      %v2002 = vpop.f32.mrb[0].mxu0
      %2003 = vmatprep.mubr.f32.mxu0 0.0
      %2004 = vmatmul.mubr.f32.gmra.mrb[0].mxu0 %v1810
      %v2005 = vpop.f32.mrb[0].mxu0
      %v2006 = vadd.f32 %v1761, %v2005
      %v2007 = vpop.f32.mrb[0].mxu0
      %2008 = vmatprep.mubr.f32.mxu0 0.0
      %2009 = vmatmul.mubr.f32.gmra.mrb[0].mxu0 %v1813
      %v2010 = vpop.f32.mrb[0].mxu0
      %v2011 = vadd.f32 %v1761, %v2010
      %v2012 = vpop.f32.mrb[0].mxu0
      %2013 = vmatprep.mubr.f32.mxu0 0.0
      %2014 = vmatmul.mubr.f32.gmra.mrb[0].mxu0 %v1816
      %v2015 = vpop.f32.mrb[0].mxu0
      %v2016 = vadd.f32 %v1761, %v2015
      %v2017 = vpop.f32.mrb[0].mxu0
      %2018 = vmatprep.mubr.f32.mxu0 0.0
      %2019 = vmatmul.mubr.f32.gmra.mrb[0].mxu0 %v1819
      %v2020 = vpop.f32.mrb[0].mxu0
      %v2021 = vadd.f32 %v1761, %v2020
      %v2022 = vpop.f32.mrb[0].mxu0
      %2023 = vmatprep.mubr.f32.mxu0 0.0
      %2024 = vmatmul.mubr.f32.gmra.mrb[0].mxu0 %v1822
      %v2025 = vpop.f32.mrb[0].mxu0
      %v2026 = vadd.f32 %v1761, %v2025
      %v2027 = vpop.f32.mrb[0].mxu0
      %2028 = vmatprep.mubr.f32.mxu0 0.0
      %2029 = vmatmul.mubr.f32.gmra.mrb[0].mxu0 %v1825
      %v2030 = vpop.f32.mrb[0].mxu0
      %v2031 = vadd.f32 %v1761, %v2030
      %v2032 = vpop.f32.mrb[0].mxu0
      %2033 = vmatprep.mubr.f32.mxu0 0.0
      %2034 = vmatmul.mubr.f32.gmra.mrb[0].mxu0 %v1828
      %v2035 = vpop.f32.mrb[0].mxu0
      %v2036 = vadd.f32 %v1761, %v2035
      %v2037 = vpop.f32.mrb[0].mxu0
      %2038 = vmatprep.mubr.f32.mxu0 0.0
      %2039 = vmatmul.mubr.f32.gmra.mrb[0].mxu0 %v1831
      %v2040 = vpop.f32.mrb[0].mxu0
      %v2041 = vadd.f32 %v1761, %v2040
      %v2042 = vpop.f32.mrb[0].mxu0
      %2043 = vmatprep.mubr.f32.mxu0 0.0
      %2044 = vmatmul.mubr.f32.gmra.mrb[0].mxu0 %v1834
      %v2045 = vpop.f32.mrb[0].mxu0
      %v2046 = vadd.f32 %v1761, %v2045
      %v2047 = vpop.f32.mrb[0].mxu0
      %2048 = vmatprep.mubr.f32.mxu0 0.0
      %2049 = vmatmul.mubr.f32.gmra.mrb[0].mxu0 %v1837
      %v2050 = vpop.f32.mrb[0].mxu0
      %v2051 = vadd.f32 %v1761, %v2050
      %v2052 = vpop.f32.mrb[0].mxu0
      %2053 = vmatprep.mubr.f32.mxu0 0.0
      %2054 = vmatmul.mubr.f32.gmra.mrb[0].mxu0 %v1840
      %v2055 = vpop.f32.mrb[0].mxu0
      %v2056 = vadd.f32 %v1761, %v2055
      %v2057 = vpop.f32.mrb[0].mxu0
      %2058 = vmatprep.mubr.f32.mxu0 0.0
      %2059 = vmatmul.mubr.f32.gmra.mrb[0].mxu0 %v1843
      %v2060 = vpop.f32.mrb[0].mxu0
      %v2061 = vadd.f32 %v1761, %v2060
      %v2062 = vpop.f32.mrb[0].mxu0
      %2063 = vmatprep.mubr.f32.mxu0 0.0
      %2064 = vmatmul.mubr.f32.gmra.mrb[0].mxu0 %v1846
      %v2065 = vpop.f32.mrb[0].mxu0
      %v2066 = vadd.f32 %v1761, %v2065
      %v2067 = vpop.f32.mrb[0].mxu0
      %2068 = vmatprep.mubr.f32.mxu0 0.0
      %2069 = vmatmul.mubr.f32.gmra.mrb[0].mxu0 %v1849
      %v2070 = vpop.f32.mrb[0].mxu0
      %v2071 = vadd.f32 %v1761, %v2070
      %v2072 = vpop.f32.mrb[0].mxu0
      %2073 = vmatprep.mubr.f32.mxu0 0.0
      %2074 = vmatmul.mubr.f32.gmra.mrb[0].mxu0 %v1852
      %v2075 = vpop.f32.mrb[0].mxu0
      %v2076 = vadd.f32 %v1761, %v2075
      %v2077 = vpop.f32.mrb[0].mxu0
      %2078 = vmatprep.mubr.f32.mxu0 0.0
      %2079 = vmatmul.mubr.f32.gmra.mrb[0].mxu0 %v1855
      %v2080 = vpop.f32.mrb[0].mxu0
      %v2081 = vadd.f32 %v1761, %v2080
      %v2082 = vpop.f32.mrb[0].mxu0
      %2083 = vmatprep.mubr.f32.mxu0 0.0
      %2084 = vmatmul.mubr.f32.gmra.mrb[0].mxu0 %v1858
      %v2085 = vpop.f32.mrb[0].mxu0
      %v2086 = vadd.f32 %v1761, %v2085
      %v2087 = vpop.f32.mrb[0].mxu0
      %2088 = vdwg.mxu0
      %2089 = vst.msk [vmem:[%s273] sm:$0xff] %vm1520, %v1931
      %2090 = vst.msk [vmem:[%s273 + $0x8] sm:$0xff] %vm1520, %v1936
      %2091 = vst.msk [vmem:[%s273 + $0x10] sm:$0xff] %vm1520, %v1941
      %2092 = vst.msk [vmem:[%s273 + $0x18] sm:$0xff] %vm1520, %v1946
      %2093 = vst.msk [vmem:[%s273 + $0x20] sm:$0xff] %vm1520, %v1951
      %2094 = vst.msk [vmem:[%s273 + $0x28] sm:$0xff] %vm1520, %v1956
      %2095 = vst.msk [vmem:[%s273 + $0x30] sm:$0xff] %vm1520, %v1961
      %2096 = vst.msk [vmem:[%s273 + $0x38] sm:$0xff] %vm1520, %v1966
      %2097 = vst.msk [vmem:[%s273 + $0x40] sm:$0xff] %vm1520, %v1971
      %2098 = vst.msk [vmem:[%s273 + $0x48] sm:$0xff] %vm1520, %v1976
      %2099 = vst.msk [vmem:[%s273 + $0x50] sm:$0xff] %vm1520, %v1981
      %2100 = vst.msk [vmem:[%s273 + $0x58] sm:$0xff] %vm1520, %v1986
      %2101 = vst.msk [vmem:[%s273 + $0x60] sm:$0xff] %vm1520, %v1991
      %2102 = vst.msk [vmem:[%s273 + $0x68] sm:$0xff] %vm1520, %v1996
      %2103 = vst.msk [vmem:[%s273 + $0x70] sm:$0xff] %vm1520, %v2001
      %2104 = vst.msk [vmem:[%s273 + $0x78] sm:$0xff] %vm1520, %v2006
      %2105 = vst.msk [vmem:[%s273 + $0x80] sm:$0xff] %vm1520, %v2011
      %2106 = vst.msk [vmem:[%s273 + $0x88] sm:$0xff] %vm1520, %v2016
      %2107 = vst.msk [vmem:[%s273 + $0x90] sm:$0xff] %vm1520, %v2021
      %2108 = vst.msk [vmem:[%s273 + $0x98] sm:$0xff] %vm1520, %v2026
      %2109 = vst.msk [vmem:[%s273 + $0xa0] sm:$0xff] %vm1520, %v2031
      %2110 = vst.msk [vmem:[%s273 + $0xa8] sm:$0xff] %vm1520, %v2036
      %2111 = vst.msk [vmem:[%s273 + $0xb0] sm:$0xff] %vm1520, %v2041
      %2112 = vst.msk [vmem:[%s273 + $0xb8] sm:$0xff] %vm1520, %v2046
      %2113 = vst.msk [vmem:[%s273 + $0xc0] sm:$0xff] %vm1520, %v2051
      %2114 = vst.msk [vmem:[%s273 + $0xc8] sm:$0xff] %vm1520, %v2056
      %2115 = vst.msk [vmem:[%s273 + $0xd0] sm:$0xff] %vm1520, %v2061
      %2116 = vst.msk [vmem:[%s273 + $0xd8] sm:$0xff] %vm1520, %v2066
      %2117 = vst.msk [vmem:[%s273 + $0xe0] sm:$0xff] %vm1520, %v2071
      %2118 = vst.msk [vmem:[%s273 + $0xe8] sm:$0xff] %vm1520, %v2076
      %2119 = vst.msk [vmem:[%s273 + $0xf0] sm:$0xff] %vm1520, %v2081
      %2120 = vst.msk [vmem:[%s273 + $0xf8] sm:$0xff] %vm1520, %v2086
      %p2121 = scmp.eq.s32.totalorder %s19, 0
      // Predicated region
      $region41: #{downsample_forward.3} parent=39 // pred_check
        %p2122 = pneg %p2121
      $region42: #{downsample_forward.3} parent=39 // pred_check_branch
        %2124 = sbr.rel (%p2122) target = $region44
      $region43: #{downsample_forward.3} parent=39 // pred_region
        %vm2125 = vcmask 57344
        %2126 = vst.msk [vmem:[%s6] sm:$0x1] %vm2125, 0.0
        %2127 = vst.msk [vmem:[%s7] sm:$0x1] %vm2125, 0.0
      $region44: #{downsample_forward.3} parent=39 // pred_fallthru
        _
      %v2128 = vld [vmem:[%s6] sm:$0x1]
      %v2129 = vsel %vm1520, %v1931, 0.0
      %v2130 = vsel %vm1520, %v1936, 0.0
      %v2131 = vadd.f32 %v2129, %v2130
      %v2132 = vsel %vm1520, %v1941, 0.0
      %v2133 = vadd.f32 %v2131, %v2132
      %v2134 = vsel %vm1520, %v1946, 0.0
      %v2135 = vadd.f32 %v2133, %v2134
      %v2136 = vsel %vm1520, %v1951, 0.0
      %v2137 = vadd.f32 %v2135, %v2136
      %v2138 = vsel %vm1520, %v1956, 0.0
      %v2139 = vadd.f32 %v2137, %v2138
      %v2140 = vsel %vm1520, %v1961, 0.0
      %v2141 = vadd.f32 %v2139, %v2140
      %v2142 = vsel %vm1520, %v1966, 0.0
      %v2143 = vadd.f32 %v2141, %v2142
      %v2144 = vsel %vm1520, %v1971, 0.0
      %v2145 = vadd.f32 %v2143, %v2144
      %v2146 = vsel %vm1520, %v1976, 0.0
      %v2147 = vadd.f32 %v2145, %v2146
      %v2148 = vsel %vm1520, %v1981, 0.0
      %v2149 = vadd.f32 %v2147, %v2148
      %v2150 = vsel %vm1520, %v1986, 0.0
      %v2151 = vadd.f32 %v2149, %v2150
      %v2152 = vsel %vm1520, %v1991, 0.0
      %v2153 = vadd.f32 %v2151, %v2152
      %v2154 = vsel %vm1520, %v1996, 0.0
      %v2155 = vadd.f32 %v2153, %v2154
      %v2156 = vsel %vm1520, %v2001, 0.0
      %v2157 = vadd.f32 %v2155, %v2156
      %v2158 = vsel %vm1520, %v2006, 0.0
      %v2159 = vadd.f32 %v2157, %v2158
      %v2160 = vsel %vm1520, %v2011, 0.0
      %v2161 = vadd.f32 %v2159, %v2160
      %v2162 = vsel %vm1520, %v2016, 0.0
      %v2163 = vadd.f32 %v2161, %v2162
      %v2164 = vsel %vm1520, %v2021, 0.0
      %v2165 = vadd.f32 %v2163, %v2164
      %v2166 = vsel %vm1520, %v2026, 0.0
      %v2167 = vadd.f32 %v2165, %v2166
      %v2168 = vsel %vm1520, %v2031, 0.0
      %v2169 = vadd.f32 %v2167, %v2168
      %v2170 = vsel %vm1520, %v2036, 0.0
      %v2171 = vadd.f32 %v2169, %v2170
      %v2172 = vsel %vm1520, %v2041, 0.0
      %v2173 = vadd.f32 %v2171, %v2172
      %v2174 = vsel %vm1520, %v2046, 0.0
      %v2175 = vadd.f32 %v2173, %v2174
      %v2176 = vsel %vm1520, %v2051, 0.0
      %v2177 = vadd.f32 %v2175, %v2176
      %v2178 = vsel %vm1520, %v2056, 0.0
      %v2179 = vadd.f32 %v2177, %v2178
      %v2180 = vsel %vm1520, %v2061, 0.0
      %v2181 = vadd.f32 %v2179, %v2180
      %v2182 = vsel %vm1520, %v2066, 0.0
      %v2183 = vadd.f32 %v2181, %v2182
      %v2184 = vsel %vm1520, %v2071, 0.0
      %v2185 = vadd.f32 %v2183, %v2184
      %v2186 = vsel %vm1520, %v2076, 0.0
      %v2187 = vadd.f32 %v2185, %v2186
      %v2188 = vsel %vm1520, %v2081, 0.0
      %v2189 = vadd.f32 %v2187, %v2188
      %v2190 = vsel %vm1520, %v2086, 0.0
      %v2191 = vadd.f32 %v2189, %v2190
      %v2192 = vrot.slane %v2191, 4
      %v2193 = vadd.f32 %v2191, %v2192
      %v2194 = vrot.slane %v2193, 2
      %v2195 = vadd.f32 %v2193, %v2194
      %v2196 = vrot.slane %v2195, 1
      %v2197 = vadd.f32 %v2195, %v2196
      %v2198 = vadd.f32 %v2128, %v2197
      %vm2199 = vcmask 57344
      %2200 = vst.msk [vmem:[%s6] sm:$0x1] %vm2199, %v2198
      %v2201 = vld [vmem:[%s7] sm:$0x1]
      %v2202 = vmul.f32 %v1931, %v1931
      %v2203 = vmul.f32 %v1936, %v1936
      %v2204 = vmul.f32 %v1941, %v1941
      %v2205 = vmul.f32 %v1946, %v1946
      %v2206 = vmul.f32 %v1951, %v1951
      %v2207 = vmul.f32 %v1956, %v1956
      %v2208 = vmul.f32 %v1961, %v1961
      %v2209 = vmul.f32 %v1966, %v1966
      %v2210 = vmul.f32 %v1971, %v1971
      %v2211 = vmul.f32 %v1976, %v1976
      %v2212 = vmul.f32 %v1981, %v1981
      %v2213 = vmul.f32 %v1986, %v1986
      %v2214 = vmul.f32 %v1991, %v1991
      %v2215 = vmul.f32 %v1996, %v1996
      %v2216 = vmul.f32 %v2001, %v2001
      %v2217 = vmul.f32 %v2006, %v2006
      %v2218 = vmul.f32 %v2011, %v2011
      %v2219 = vmul.f32 %v2016, %v2016
      %v2220 = vmul.f32 %v2021, %v2021
      %v2221 = vmul.f32 %v2026, %v2026
      %v2222 = vmul.f32 %v2031, %v2031
      %v2223 = vmul.f32 %v2036, %v2036
      %v2224 = vmul.f32 %v2041, %v2041
      %v2225 = vmul.f32 %v2046, %v2046
      %v2226 = vmul.f32 %v2051, %v2051
      %v2227 = vmul.f32 %v2056, %v2056
      %v2228 = vmul.f32 %v2061, %v2061
      %v2229 = vmul.f32 %v2066, %v2066
      %v2230 = vmul.f32 %v2071, %v2071
      %v2231 = vmul.f32 %v2076, %v2076
      %v2232 = vmul.f32 %v2081, %v2081
      %v2233 = vmul.f32 %v2086, %v2086
      %v2234 = vsel %vm1520, %v2202, 0.0
      %v2235 = vsel %vm1520, %v2203, 0.0
      %v2236 = vadd.f32 %v2234, %v2235
      %v2237 = vsel %vm1520, %v2204, 0.0
      %v2238 = vadd.f32 %v2236, %v2237
      %v2239 = vsel %vm1520, %v2205, 0.0
      %v2240 = vadd.f32 %v2238, %v2239
      %v2241 = vsel %vm1520, %v2206, 0.0
      %v2242 = vadd.f32 %v2240, %v2241
      %v2243 = vsel %vm1520, %v2207, 0.0
      %v2244 = vadd.f32 %v2242, %v2243
      %v2245 = vsel %vm1520, %v2208, 0.0
      %v2246 = vadd.f32 %v2244, %v2245
      %v2247 = vsel %vm1520, %v2209, 0.0
      %v2248 = vadd.f32 %v2246, %v2247
      %v2249 = vsel %vm1520, %v2210, 0.0
      %v2250 = vadd.f32 %v2248, %v2249
      %v2251 = vsel %vm1520, %v2211, 0.0
      %v2252 = vadd.f32 %v2250, %v2251
      %v2253 = vsel %vm1520, %v2212, 0.0
      %v2254 = vadd.f32 %v2252, %v2253
      %v2255 = vsel %vm1520, %v2213, 0.0
      %v2256 = vadd.f32 %v2254, %v2255
      %v2257 = vsel %vm1520, %v2214, 0.0
      %v2258 = vadd.f32 %v2256, %v2257
      %v2259 = vsel %vm1520, %v2215, 0.0
      %v2260 = vadd.f32 %v2258, %v2259
      %v2261 = vsel %vm1520, %v2216, 0.0
      %v2262 = vadd.f32 %v2260, %v2261
      %v2263 = vsel %vm1520, %v2217, 0.0
      %v2264 = vadd.f32 %v2262, %v2263
      %v2265 = vsel %vm1520, %v2218, 0.0
      %v2266 = vadd.f32 %v2264, %v2265
      %v2267 = vsel %vm1520, %v2219, 0.0
      %v2268 = vadd.f32 %v2266, %v2267
      %v2269 = vsel %vm1520, %v2220, 0.0
      %v2270 = vadd.f32 %v2268, %v2269
      %v2271 = vsel %vm1520, %v2221, 0.0
      %v2272 = vadd.f32 %v2270, %v2271
      %v2273 = vsel %vm1520, %v2222, 0.0
      %v2274 = vadd.f32 %v2272, %v2273
      %v2275 = vsel %vm1520, %v2223, 0.0
      %v2276 = vadd.f32 %v2274, %v2275
      %v2277 = vsel %vm1520, %v2224, 0.0
      %v2278 = vadd.f32 %v2276, %v2277
      %v2279 = vsel %vm1520, %v2225, 0.0
      %v2280 = vadd.f32 %v2278, %v2279
      %v2281 = vsel %vm1520, %v2226, 0.0
      %v2282 = vadd.f32 %v2280, %v2281
      %v2283 = vsel %vm1520, %v2227, 0.0
      %v2284 = vadd.f32 %v2282, %v2283
      %v2285 = vsel %vm1520, %v2228, 0.0
      %v2286 = vadd.f32 %v2284, %v2285
      %v2287 = vsel %vm1520, %v2229, 0.0
      %v2288 = vadd.f32 %v2286, %v2287
      %v2289 = vsel %vm1520, %v2230, 0.0
      %v2290 = vadd.f32 %v2288, %v2289
      %v2291 = vsel %vm1520, %v2231, 0.0
      %v2292 = vadd.f32 %v2290, %v2291
      %v2293 = vsel %vm1520, %v2232, 0.0
      %v2294 = vadd.f32 %v2292, %v2293
      %v2295 = vsel %vm1520, %v2233, 0.0
      %v2296 = vadd.f32 %v2294, %v2295
      %v2297 = vrot.slane %v2296, 4
      %v2298 = vadd.f32 %v2296, %v2297
      %v2299 = vrot.slane %v2298, 2
      %v2300 = vadd.f32 %v2298, %v2299
      %v2301 = vrot.slane %v2300, 1
      %v2302 = vadd.f32 %v2300, %v2301
      %v2303 = vadd.f32 %v2201, %v2302
      %2304 = vst.msk [vmem:[%s7] sm:$0x1] %vm2199, %v2303
      %p2305 = scmp.lt.s32.totalorder %s19, 1
      %s2306 = scalar_select %p2305, %s19, 1
      %s2307 = smul.addr %s2306, 32
      %s2308 = smul.addr %s2307, 8
      %s2309 = scalar_lea.vmem %s5, %s2308
      // Predicated region
      $region45: #{downsample_forward.3} parent=39 // pred_check
        %p2310 = pneg %p147
      $region46: #{downsample_forward.3} parent=39 // pred_check_branch
        %2312 = sbr.rel (%p2310) target = $region48
      $region47: #{downsample_forward.3} parent=39 // pred_region
        _
      $region48: #{downsample_forward.3} parent=39 // pred_fallthru
        _
      // Predicated region
      $region49: #{downsample_forward.3} parent=39 // pred_check
        %p2313 = pneg %p168
      $region50: #{downsample_forward.3} parent=39 // pred_check_branch
        %2315 = sbr.rel (%p2313) target = $region52
      $region51: #{downsample_forward.3} parent=39 // pred_region
        _
      $region52: #{downsample_forward.3} parent=39 // pred_fallthru
        _
      // Predicated region
      $region53: #{downsample_forward.3} parent=39 // pred_check
        %p2316 = pneg %p189
      $region54: #{downsample_forward.3} parent=39 // pred_check_branch
        %2318 = sbr.rel (%p2316) target = $region56
      $region55: #{downsample_forward.3} parent=39 // pred_region
        _
      $region56: #{downsample_forward.3} parent=39 // pred_fallthru
        _
      // Predicated region
      $region57: #{downsample_forward.3} parent=39 // pred_check
        %p2319 = pneg %p168
      $region58: #{downsample_forward.3} parent=39 // pred_check_branch
        %2321 = sbr.rel (%p2319) target = $region60
      $region59: #{downsample_forward.3} parent=39 // pred_region
        _
      $region60: #{downsample_forward.3} parent=39 // pred_fallthru
        _
      // Predicated region
      $region61: #{downsample_forward.3} parent=39 // pred_check
        %p2322 = pneg %p189
      $region62: #{downsample_forward.3} parent=39 // pred_check_branch
        %2324 = sbr.rel (%p2322) target = $region64
      $region63: #{downsample_forward.3} parent=39 // pred_region
        _
      $region64: #{downsample_forward.3} parent=39 // pred_fallthru
        _
    $region40: #{downsample_forward.3} parent=5 // pred_fallthru
      _
    %p2325 = scmp.le.s32.totalorder 2, %s14
    // Predicated region
    $region65: #{downsample_forward.3} parent=5 // pred_check
      %p2326 = pneg %p2325
    $region66: #{downsample_forward.3} parent=5 // pred_check_branch
      %2328 = sbr.rel (%p2326) target = $region68
    $region67: #{downsample_forward.3} parent=5 // pred_region
      %s2329 = ssub.s32 %s14, 2
      // Predicated region
      $region69: #{downsample_forward.3} parent=67 // pred_check
        %p2330 = pneg %p153
      $region70: #{downsample_forward.3} parent=67 // pred_check_branch
        %2332 = sbr.rel (%p2330) target = $region72
      $region71: #{downsample_forward.3} parent=67 // pred_region
        %p2333 = scmp.lt.s32.totalorder %s20, 1
        %s2334 = scalar_select %p2333, %s20, 1
        %s2335 = smul.addr %s2334, 32
        %s2336 = smul.addr %s2335, 8
        %s2337 = scalar_lea.vmem %s5, %s2336
      $region72: #{downsample_forward.3} parent=67 // pred_fallthru
        _
    $region68: #{downsample_forward.3} parent=5 // pred_fallthru
      _
  $region6: #{downsample_forward.3} parent=0 // loop_footer
    %s18 = sadd.s32 1, %s14
  $region7: #{downsample_forward.3} parent=0 // loop_footer_branch
    %13 = sbr.rel target = $region3
  $region8: #{downsample_forward.3} parent=0 // loop_exit
    _

</llo_original>
